<compile_context>
chip_gen: v7x
topology: tpu7x:2x2x1
jax: 0.10.0
libtpu: 0.0.40
codegen_flags: <defaults>
</compile_context>

<pallas_src>
import functools

import jax
import jax.numpy as jnp
from jax.experimental import pallas as pl
from jax.experimental.pallas import tpu as pltpu


def mamba_block_kernel(xim_ref, w1_ref, b1_ref, w2_ref, b2_ref,
                       wqkv_ref, bqkv_ref, wo_ref, bo_ref,
                       o_ref, *, num_heads, bb):
    R = xim_ref.shape[0]            # bb * L rows (batch flattened onto sublanes)
    K = w2_ref.shape[0]
    DE = w2_ref.shape[1]
    D = w2_ref.shape[2]
    L = R // bb
    pad = K // 2
    hd = D // num_heads
    scale = 1.0 / (hd ** 0.5)

    xim = xim_ref[...]              # (R, K*D) im2col'd input

    # ---- conv1 (D -> DE, 'same') + ReLU: single wide-contraction MXU push ---
    h = jnp.dot(xim, w1_ref[...], preferred_element_type=jnp.float32)
    h = jnp.maximum(h + b1_ref[...], 0.0)
    # Dropout: identity at inference.

    # ---- conv2 (DE -> D, 'same') with BatchNorm folded into w2/b2 ----------
    # k-shifted operands built in-register via roll + per-batch boundary mask.
    if K > 1:
        rows = jax.lax.broadcasted_iota(jnp.int32, (R, 1), 0)
        r_local = rows % L          # position within each batch element
    y = jnp.dot(h, w2_ref[pad], preferred_element_type=jnp.float32)  # center tap
    for k in range(K):
        if k == pad:
            continue
        off = k - pad               # source row offset within a batch element
        shifted = pltpu.roll(h, shift=(pad - k) % R, axis=0)   # shifted[r]=h[r+off]
        valid = (r_local + off >= 0) & (r_local + off < L)
        y = y + jnp.dot(jnp.where(valid, shifted, 0.0), w2_ref[k],
                        preferred_element_type=jnp.float32)
    y = y + b2_ref[...]             # conv2 bias with BN scale/shift folded in

    # ---- MultiheadAttention (self-attention per batch element) -------------
    qkv = jnp.dot(y, wqkv_ref[...], preferred_element_type=jnp.float32) + bqkv_ref[...]
    q = qkv[:, 0 * D:1 * D]
    kx = qkv[:, 1 * D:2 * D]
    v = qkv[:, 2 * D:3 * D]

    res = xim[:, pad * D:(pad + 1) * D]     # residual = center tap of im2col block

    for b in range(bb):
        r0 = b * L
        qb = q[r0:r0 + L, :]
        kb = kx[r0:r0 + L, :]
        vb = v[r0:r0 + L, :]
        acc = jnp.zeros((L, D), jnp.float32)
        for hidx in range(num_heads):
            lo, hi = hidx * hd, (hidx + 1) * hd
            qh = qb[:, lo:hi]
            kh = kb[:, lo:hi]
            vh = vb[:, lo:hi]
            s = jax.lax.dot_general(qh, kh, (((1,), (1,)), ((), ())),
                                    preferred_element_type=jnp.float32) * scale
            s = s - jnp.max(s, axis=-1, keepdims=True)
            p = jnp.exp(s)
            inv = pl.reciprocal(jnp.sum(p, axis=-1, keepdims=True), approx=True)
            ho = jnp.dot(p * inv, vh, preferred_element_type=jnp.float32)  # (L, hd)
            # Fused output projection per head (no lane-concat of heads).
            acc = acc + jnp.dot(ho, wo_ref[lo:hi, :],
                                preferred_element_type=jnp.float32)
        # ---- residual + ReLU, write this batch element's rows --------------
        o_ref[r0:r0 + L, :] = jnp.maximum(acc + bo_ref[...] + res[r0:r0 + L, :], 0.0)


def improved_mamba_block(x, p, *, kernel_size, num_heads, batch_per_step=None):
    """x: (B, D, L) float32 (PyTorch NCL layout). Returns (B, D, L)."""
    B, D, L = x.shape
    K = kernel_size
    assert K % 2 == 1, "padding='same' implemented here for odd kernel sizes"
    DE = p["w1"].shape[2]
    pad = K // 2

    bb = B if batch_per_step is None else batch_per_step
    assert B % bb == 0
    assert (bb == B) or ((bb * L) % 8 == 0), "block rows must be sublane aligned"
    steps = B // bb
    R = bb * L

    # im2col in the wrapper: row (b, l) = concat_k x_pad[b, l+k, :]  -> (B*L, K*D)
    x_nld = jnp.transpose(x, (0, 2, 1))                       # (B, L, D)
    x_pad = jnp.pad(x_nld, ((0, 0), (pad, pad), (0, 0)))      # (B, L+K-1, D)
    xim = jnp.concatenate([x_pad[:, k:k + L, :] for k in range(K)], axis=-1)
    xim = xim.reshape(B * L, K * D)

    w1_flat = p["w1"].reshape(K * D, DE)                      # matches im2col lane order
    # Fold inference BatchNorm into conv2.
    w2f = p["w2"] * p["bn_scale"]                             # (K, DE, D) * (1, D)
    b2f = p["b2"] * p["bn_scale"] + p["bn_shift"]             # (1, D)
    # Fuse Q/K/V projections.
    wqkv = jnp.concatenate([p["wq"], p["wk"], p["wv"]], axis=1)   # (D, 3D)
    bqkv = jnp.concatenate([p["bq"], p["bk"], p["bv"]], axis=1)   # (1, 3D)

    full2 = lambda i: (0, 0)
    full3 = lambda i: (0, 0, 0)

    out_flat = pl.pallas_call(
        functools.partial(mamba_block_kernel, num_heads=num_heads, bb=bb),
        out_shape=jax.ShapeDtypeStruct((B * L, D), jnp.float32),
        grid=(steps,),
        in_specs=[
            pl.BlockSpec((R, K * D), lambda i: (i, 0)),       # im2col input slab
            pl.BlockSpec((K * D, DE), full2),                 # conv1 weight (flat)
            pl.BlockSpec((1, DE), full2),                     # conv1 bias
            pl.BlockSpec((K, DE, D), full3),                  # conv2 weight (BN folded)
            pl.BlockSpec((1, D), full2),                      # conv2 bias (BN folded)
            pl.BlockSpec((D, 3 * D), full2),                  # fused Wqkv^T
            pl.BlockSpec((1, 3 * D), full2),                  # fused bqkv
            pl.BlockSpec((D, D), full2),                      # Wo^T
            pl.BlockSpec((1, D), full2),                      # bo
        ],
        out_specs=pl.BlockSpec((R, D), lambda i: (i, 0)),
        compiler_params=pltpu.CompilerParams(
            dimension_semantics=("parallel",)),
    )(xim, w1_flat, p["b1"], w2f, b2f, wqkv, bqkv, p["wo"], p["bo"])

    return jnp.transpose(out_flat.reshape(B, L, D), (0, 2, 1))   # back to (B, D, L)


def make_params(key, D, expand, K):
    """Deterministic synthetic parameters. Conv weights are stored as
    (K, in, out) == torch Conv1d weight (out, in, K) transposed (2, 1, 0);
    attention projections are stored pre-transposed so y = x @ W + b."""
    DE = D * expand
    ks = jax.random.split(key, 16)
    n = lambda k, s, scale=0.1: scale * jax.random.normal(k, s, jnp.float32)

    gamma = 1.0 + n(ks[10], (1, D))
    beta = n(ks[11], (1, D))
    run_mean = n(ks[12], (1, D))
    run_var = 1.0 + 0.1 * jnp.abs(jax.random.normal(ks[13], (1, D), jnp.float32))
    eps = 1e-5
    bn_scale = gamma / jnp.sqrt(run_var + eps)
    bn_shift = beta - run_mean * bn_scale

    return dict(
        w1=n(ks[0], (K, D, DE)), b1=n(ks[1], (1, DE)),
        w2=n(ks[2], (K, DE, D)), b2=n(ks[3], (1, D)),
        wq=n(ks[4], (D, D)), wk=n(ks[5], (D, D)), wv=n(ks[6], (D, D)),
        bq=n(ks[7], (1, D)), bk=n(ks[8], (1, D)), bv=n(ks[9], (1, D)),
        wo=n(ks[14], (D, D)), bo=n(ks[15], (1, D)),
        bn_scale=bn_scale, bn_shift=bn_shift,
    )


def ref_forward(x, p, K, H):
    """Pure-JAX reference of the same (inference-mode) forward pass,
    using the *unfolded* parameters (validates BN/QKV folding too)."""
    B, D, L = x.shape
    pad = K // 2
    xt = jnp.transpose(x, (0, 2, 1))
    xp = jnp.pad(xt, ((0, 0), (pad, pad), (0, 0)))
    h = sum(jnp.einsum("bld,de->ble", xp[:, k:k + L], p["w1"][k]) for k in range(K))
    h = jnp.maximum(h + p["b1"], 0.0)
    hp = jnp.pad(h, ((0, 0), (pad, pad), (0, 0)))
    y = sum(jnp.einsum("ble,ed->bld", hp[:, k:k + L], p["w2"][k]) for k in range(K))
    y = y + p["b2"]
    y = y * p["bn_scale"] + p["bn_shift"]
    q = y @ p["wq"] + p["bq"]
    kk = y @ p["wk"] + p["bk"]
    v = y @ p["wv"] + p["bv"]
    hd = D // H
    qh = q.reshape(B, L, H, hd).transpose(0, 2, 1, 3)
    kh = kk.reshape(B, L, H, hd).transpose(0, 2, 1, 3)
    vh = v.reshape(B, L, H, hd).transpose(0, 2, 1, 3)
    s = jnp.einsum("bhld,bhmd->bhlm", qh, kh) / jnp.sqrt(jnp.float32(hd))
    a = jax.nn.softmax(s, axis=-1)
    o = jnp.einsum("bhlm,bhmd->bhld", a, vh).transpose(0, 2, 1, 3).reshape(B, L, D)
    o = o @ p["wo"] + p["bo"]
    return jnp.transpose(jnp.maximum(o + xt, 0.0), (0, 2, 1))


if __name__ == "__main__":
    # Module hyper-parameters.
    latent_state_dim = 32     # D
    expand = 2                # DE = 64
    kernel_size = 3
    num_heads = 4
    # dropout = 0.1  (identity at inference)

    B, L = 2, 16

    key = jax.random.PRNGKey(0)
    kx, kp = jax.random.split(key)
    x = jax.random.normal(kx, (B, latent_state_dim, L), jnp.float32)
    params = make_params(kp, latent_state_dim, expand, kernel_size)

    ref = ref_forward(x, params, kernel_size, num_heads)

    # Default: whole batch folded into a single (B*L, D) slab / one grid step.
    out = improved_mamba_block(x, params, kernel_size=kernel_size,
                               num_heads=num_heads)
    out = jax.block_until_ready(out)
    assert out.shape == x.shape and out.dtype == jnp.float32
    assert bool(jnp.all(jnp.isfinite(out)))
    assert bool(jnp.allclose(out, ref, rtol=2e-2, atol=2e-2)), "mismatch (fused slab)"

    # Multi-step path (one batch element per grid step, e.g. for v7x dual-TC).
    out2 = improved_mamba_block(x, params, kernel_size=kernel_size,
                                num_heads=num_heads, batch_per_step=1)
    out2 = jax.block_until_ready(out2)
    assert bool(jnp.allclose(out2, ref, rtol=2e-2, atol=2e-2)), "mismatch (split grid)"

    print("KERNEL_OK")
</pallas_src>

<mosaic_0001>
module attributes {stable_mosaic.version = 11 : i64} {
  func.func @mamba_block_kernel(%arg0: i32, %arg1: memref<32x96xf32, #tpu.memory_space<vmem>>, %arg2: memref<96x64xf32, #tpu.memory_space<vmem>>, %arg3: memref<1x64xf32, #tpu.memory_space<vmem>>, %arg4: memref<3x64x32xf32, #tpu.memory_space<vmem>>, %arg5: memref<1x32xf32, #tpu.memory_space<vmem>>, %arg6: memref<32x96xf32, #tpu.memory_space<vmem>>, %arg7: memref<1x96xf32, #tpu.memory_space<vmem>>, %arg8: memref<32x32xf32, #tpu.memory_space<vmem>>, %arg9: memref<1x32xf32, #tpu.memory_space<vmem>>, %arg10: memref<32x32xf32, #tpu.memory_space<vmem>>) attributes {dimension_semantics = [#tpu.dimension_semantics<parallel>], iteration_bounds = array<i64: 1>, scalar_prefetch = 0 : i64, scratch_operands = 0 : i64, tpu.core_type = #tpu.core_type<tc>, window_params = [{transform_indices = @transform_0, window_bounds = array<i64: 32, 96>}, {pipeline_mode = #tpu.pipeline_mode<synchronous>, transform_indices = @transform_1, window_bounds = array<i64: 96, 64>}, {pipeline_mode = #tpu.pipeline_mode<synchronous>, transform_indices = @transform_2, window_bounds = array<i64: 1, 64>}, {pipeline_mode = #tpu.pipeline_mode<synchronous>, transform_indices = @transform_3, window_bounds = array<i64: 3, 64, 32>}, {pipeline_mode = #tpu.pipeline_mode<synchronous>, transform_indices = @transform_4, window_bounds = array<i64: 1, 32>}, {pipeline_mode = #tpu.pipeline_mode<synchronous>, transform_indices = @transform_5, window_bounds = array<i64: 32, 96>}, {pipeline_mode = #tpu.pipeline_mode<synchronous>, transform_indices = @transform_6, window_bounds = array<i64: 1, 96>}, {pipeline_mode = #tpu.pipeline_mode<synchronous>, transform_indices = @transform_7, window_bounds = array<i64: 32, 32>}, {pipeline_mode = #tpu.pipeline_mode<synchronous>, transform_indices = @transform_8, window_bounds = array<i64: 1, 32>}, {transform_indices = @transform_9, window_bounds = array<i64: 32, 32>}]} {
    %c0 = arith.constant 0 : index
    %c0_0 = arith.constant 0 : index
    %0 = vector.load %arg1[%c0, %c0_0] : memref<32x96xf32, #tpu.memory_space<vmem>>, vector<32x96xf32>
    %c0_1 = arith.constant 0 : index
    %c0_2 = arith.constant 0 : index
    %1 = vector.load %arg2[%c0_1, %c0_2] : memref<96x64xf32, #tpu.memory_space<vmem>>, vector<96x64xf32>
    %cst = arith.constant dense<0.000000e+00> : vector<32x64xf32>
    %2 = tpu.matmul %0, %1, %cst {dimension_numbers = #tpu.dot_dimension_numbers<[1], [0], [0], [1], [0, 0, 1, 1], [], []>} : vector<32x96xf32>, vector<96x64xf32>, vector<32x64xf32> -> vector<32x64xf32>
    %c0_3 = arith.constant 0 : index
    %c0_4 = arith.constant 0 : index
    %3 = vector.load %arg3[%c0_3, %c0_4] : memref<1x64xf32, #tpu.memory_space<vmem>>, vector<1x64xf32>
    %4 = vector.broadcast %3 : vector<1x64xf32> to vector<32x64xf32>
    %5 = arith.addf %2, %4 : vector<32x64xf32>
    %cst_5 = arith.constant 0.000000e+00 : f32
    %6 = vector.broadcast %cst_5 : f32 to vector<32x64xf32>
    %7 = arith.maximumf %5, %6 : vector<32x64xf32>
    %8 = tpu.iota {dimensions = array<i32: 0>} : vector<32x1xi32>
    %c16_i32 = arith.constant 16 : i32
    %c0_i32 = arith.constant 0 : i32
    %9 = arith.cmpi eq, %c16_i32, %c0_i32 : i32
    %c1_i32 = arith.constant 1 : i32
    %10 = arith.select %9, %c1_i32, %c16_i32 : i32
    %11 = vector.broadcast %10 : i32 to vector<32x1xi32>
    %12 = arith.remsi %8, %11 : vector<32x1xi32>
    %c0_i32_6 = arith.constant 0 : i32
    %13 = vector.broadcast %c0_i32_6 : i32 to vector<32x1xi32>
    %14 = arith.cmpi ne, %12, %13 : vector<32x1xi32>
    %c0_i32_7 = arith.constant 0 : i32
    %15 = vector.broadcast %c0_i32_7 : i32 to vector<32x1xi32>
    %16 = arith.cmpi slt, %12, %15 : vector<32x1xi32>
    %c0_i32_8 = arith.constant 0 : i32
    %17 = arith.cmpi slt, %10, %c0_i32_8 : i32
    %18 = vector.broadcast %17 : i1 to vector<32x1xi1>
    %19 = vector.broadcast %18 : vector<32x1xi1> to vector<32x1xi1>
    %20 = arith.xori %16, %19 : vector<32x1xi1>
    %21 = arith.andi %20, %14 : vector<32x1xi1>
    %22 = vector.broadcast %10 : i32 to vector<32x1xi32>
    %23 = arith.addi %12, %22 : vector<32x1xi32>
    %24 = arith.select %21, %23, %12 : vector<32x1xi1>, vector<32x1xi32>
    %c1 = arith.constant 1 : index
    %c0_9 = arith.constant 0 : index
    %c0_10 = arith.constant 0 : index
    %25 = vector.load %arg4[%c1, %c0_9, %c0_10] : memref<3x64x32xf32, #tpu.memory_space<vmem>>, vector<1x64x32xf32>
    %26 = vector.shape_cast %25 : vector<1x64x32xf32> to vector<64x32xf32>
    %cst_11 = arith.constant dense<0.000000e+00> : vector<32x32xf32>
    %27 = tpu.matmul %7, %26, %cst_11 {dimension_numbers = #tpu.dot_dimension_numbers<[1], [0], [0], [1], [0, 0, 1, 1], [], []>} : vector<32x64xf32>, vector<64x32xf32>, vector<32x32xf32> -> vector<32x32xf32>
    %c1_i32_12 = arith.constant 1 : i32
    %28 = tpu.dynamic_rotate %7 by %c1_i32_12 dim 0 : vector<32x64xf32>, i32 -> vector<32x64xf32>
    %c-1_i32 = arith.constant -1 : i32
    %29 = vector.broadcast %c-1_i32 : i32 to vector<32x1xi32>
    %30 = arith.addi %24, %29 : vector<32x1xi32>
    %c0_i32_13 = arith.constant 0 : i32
    %31 = vector.broadcast %c0_i32_13 : i32 to vector<32x1xi32>
    %32 = arith.cmpi sge, %30, %31 : vector<32x1xi32>
    %c-1_i32_14 = arith.constant -1 : i32
    %33 = vector.broadcast %c-1_i32_14 : i32 to vector<32x1xi32>
    %34 = arith.addi %24, %33 : vector<32x1xi32>
    %c16_i32_15 = arith.constant 16 : i32
    %35 = vector.broadcast %c16_i32_15 : i32 to vector<32x1xi32>
    %36 = arith.cmpi slt, %34, %35 : vector<32x1xi32>
    %37 = arith.andi %32, %36 : vector<32x1xi1>
    %cst_16 = arith.constant 0.000000e+00 : f32
    %38 = vector.shape_cast %37 : vector<32x1xi1> to vector<32x1xi1>
    %39 = vector.broadcast %38 : vector<32x1xi1> to vector<32x64xi1>
    %40 = vector.broadcast %cst_16 : f32 to vector<32x64xf32>
    %41 = arith.select %39, %28, %40 : vector<32x64xi1>, vector<32x64xf32>
    %c0_17 = arith.constant 0 : index
    %c0_18 = arith.constant 0 : index
    %c0_19 = arith.constant 0 : index
    %42 = vector.load %arg4[%c0_17, %c0_18, %c0_19] : memref<3x64x32xf32, #tpu.memory_space<vmem>>, vector<1x64x32xf32>
    %43 = vector.shape_cast %42 : vector<1x64x32xf32> to vector<64x32xf32>
    %cst_20 = arith.constant dense<0.000000e+00> : vector<32x32xf32>
    %44 = tpu.matmul %41, %43, %cst_20 {dimension_numbers = #tpu.dot_dimension_numbers<[1], [0], [0], [1], [0, 0, 1, 1], [], []>} : vector<32x64xf32>, vector<64x32xf32>, vector<32x32xf32> -> vector<32x32xf32>
    %45 = arith.addf %27, %44 : vector<32x32xf32>
    %c31_i32 = arith.constant 31 : i32
    %46 = tpu.dynamic_rotate %7 by %c31_i32 dim 0 : vector<32x64xf32>, i32 -> vector<32x64xf32>
    %c1_i32_21 = arith.constant 1 : i32
    %47 = vector.broadcast %c1_i32_21 : i32 to vector<32x1xi32>
    %48 = arith.addi %24, %47 : vector<32x1xi32>
    %c0_i32_22 = arith.constant 0 : i32
    %49 = vector.broadcast %c0_i32_22 : i32 to vector<32x1xi32>
    %50 = arith.cmpi sge, %48, %49 : vector<32x1xi32>
    %c1_i32_23 = arith.constant 1 : i32
    %51 = vector.broadcast %c1_i32_23 : i32 to vector<32x1xi32>
    %52 = arith.addi %24, %51 : vector<32x1xi32>
    %c16_i32_24 = arith.constant 16 : i32
    %53 = vector.broadcast %c16_i32_24 : i32 to vector<32x1xi32>
    %54 = arith.cmpi slt, %52, %53 : vector<32x1xi32>
    %55 = arith.andi %50, %54 : vector<32x1xi1>
    %cst_25 = arith.constant 0.000000e+00 : f32
    %56 = vector.shape_cast %55 : vector<32x1xi1> to vector<32x1xi1>
    %57 = vector.broadcast %56 : vector<32x1xi1> to vector<32x64xi1>
    %58 = vector.broadcast %cst_25 : f32 to vector<32x64xf32>
    %59 = arith.select %57, %46, %58 : vector<32x64xi1>, vector<32x64xf32>
    %c2 = arith.constant 2 : index
    %c0_26 = arith.constant 0 : index
    %c0_27 = arith.constant 0 : index
    %60 = vector.load %arg4[%c2, %c0_26, %c0_27] : memref<3x64x32xf32, #tpu.memory_space<vmem>>, vector<1x64x32xf32>
    %61 = vector.shape_cast %60 : vector<1x64x32xf32> to vector<64x32xf32>
    %cst_28 = arith.constant dense<0.000000e+00> : vector<32x32xf32>
    %62 = tpu.matmul %59, %61, %cst_28 {dimension_numbers = #tpu.dot_dimension_numbers<[1], [0], [0], [1], [0, 0, 1, 1], [], []>} : vector<32x64xf32>, vector<64x32xf32>, vector<32x32xf32> -> vector<32x32xf32>
    %63 = arith.addf %45, %62 : vector<32x32xf32>
    %c0_29 = arith.constant 0 : index
    %c0_30 = arith.constant 0 : index
    %64 = vector.load %arg5[%c0_29, %c0_30] : memref<1x32xf32, #tpu.memory_space<vmem>>, vector<1x32xf32>
    %65 = vector.broadcast %64 : vector<1x32xf32> to vector<32x32xf32>
    %66 = arith.addf %63, %65 : vector<32x32xf32>
    %c0_31 = arith.constant 0 : index
    %c0_32 = arith.constant 0 : index
    %67 = vector.load %arg6[%c0_31, %c0_32] : memref<32x96xf32, #tpu.memory_space<vmem>>, vector<32x96xf32>
    %cst_33 = arith.constant dense<0.000000e+00> : vector<32x96xf32>
    %68 = tpu.matmul %66, %67, %cst_33 {dimension_numbers = #tpu.dot_dimension_numbers<[1], [0], [0], [1], [0, 0, 1, 1], [], []>} : vector<32x32xf32>, vector<32x96xf32>, vector<32x96xf32> -> vector<32x96xf32>
    %c0_34 = arith.constant 0 : index
    %c0_35 = arith.constant 0 : index
    %69 = vector.load %arg7[%c0_34, %c0_35] : memref<1x96xf32, #tpu.memory_space<vmem>>, vector<1x96xf32>
    %70 = vector.broadcast %69 : vector<1x96xf32> to vector<32x96xf32>
    %71 = arith.addf %68, %70 : vector<32x96xf32>
    %72 = vector.extract_strided_slice %71 {offsets = [0, 0], sizes = [32, 32], strides = [1, 1]} : vector<32x96xf32> to vector<32x32xf32>
    %73 = vector.extract_strided_slice %71 {offsets = [0, 32], sizes = [32, 32], strides = [1, 1]} : vector<32x96xf32> to vector<32x32xf32>
    %74 = vector.extract_strided_slice %71 {offsets = [0, 64], sizes = [32, 32], strides = [1, 1]} : vector<32x96xf32> to vector<32x32xf32>
    %75 = vector.extract_strided_slice %0 {offsets = [0, 32], sizes = [32, 32], strides = [1, 1]} : vector<32x96xf32> to vector<32x32xf32>
    %76 = vector.extract_strided_slice %72 {offsets = [0, 0], sizes = [16, 32], strides = [1, 1]} : vector<32x32xf32> to vector<16x32xf32>
    %77 = vector.extract_strided_slice %73 {offsets = [0, 0], sizes = [16, 32], strides = [1, 1]} : vector<32x32xf32> to vector<16x32xf32>
    %78 = vector.extract_strided_slice %74 {offsets = [0, 0], sizes = [16, 32], strides = [1, 1]} : vector<32x32xf32> to vector<16x32xf32>
    %cst_36 = arith.constant 0.000000e+00 : f32
    %79 = vector.broadcast %cst_36 : f32 to vector<16x32xf32>
    %80 = vector.extract_strided_slice %76 {offsets = [0, 0], sizes = [16, 8], strides = [1, 1]} : vector<16x32xf32> to vector<16x8xf32>
    %81 = vector.extract_strided_slice %77 {offsets = [0, 0], sizes = [16, 8], strides = [1, 1]} : vector<16x32xf32> to vector<16x8xf32>
    %82 = vector.extract_strided_slice %78 {offsets = [0, 0], sizes = [16, 8], strides = [1, 1]} : vector<16x32xf32> to vector<16x8xf32>
    %cst_37 = arith.constant dense<0.000000e+00> : vector<16x16xf32>
    %83 = tpu.matmul %80, %81, %cst_37 {dimension_numbers = #tpu.dot_dimension_numbers<[1], [1], [0], [0], [0, 0, 1, 0], [], []>} : vector<16x8xf32>, vector<16x8xf32>, vector<16x16xf32> -> vector<16x16xf32>
    %cst_38 = arith.constant 0.353553385 : f32
    %84 = vector.broadcast %cst_38 : f32 to vector<16x16xf32>
    %85 = arith.mulf %83, %84 : vector<16x16xf32>
    %cst_39 = arith.constant dense<0xFF800000> : vector<16xf32>
    %86 = vector.multi_reduction <maximumf>, %85, %cst_39 [1] : vector<16x16xf32> to vector<16xf32>
    %87 = vector.shape_cast %86 : vector<16xf32> to vector<16x1xf32>
    %88 = vector.broadcast %87 : vector<16x1xf32> to vector<16x16xf32>
    %89 = arith.subf %85, %88 : vector<16x16xf32>
    %90 = math.exp %89 : vector<16x16xf32>
    %cst_40 = arith.constant dense<0.000000e+00> : vector<16xf32>
    %91 = vector.multi_reduction <add>, %90, %cst_40 [1] : vector<16x16xf32> to vector<16xf32>
    %92 = vector.shape_cast %91 : vector<16xf32> to vector<16x1xf32>
    %93 = tpu.reciprocal %92 {approx = true} : vector<16x1xf32> -> vector<16x1xf32>
    %94 = vector.broadcast %93 : vector<16x1xf32> to vector<16x16xf32>
    %95 = arith.mulf %90, %94 : vector<16x16xf32>
    %cst_41 = arith.constant dense<0.000000e+00> : vector<16x8xf32>
    %96 = tpu.matmul %95, %82, %cst_41 {dimension_numbers = #tpu.dot_dimension_numbers<[1], [0], [0], [1], [0, 0, 1, 1], [], []>} : vector<16x16xf32>, vector<16x8xf32>, vector<16x8xf32> -> vector<16x8xf32>
    %c0_42 = arith.constant 0 : index
    %c0_43 = arith.constant 0 : index
    %97 = vector.load %arg8[%c0_42, %c0_43] : memref<32x32xf32, #tpu.memory_space<vmem>>, vector<8x32xf32>
    %cst_44 = arith.constant dense<0.000000e+00> : vector<16x32xf32>
    %98 = tpu.matmul %96, %97, %cst_44 {dimension_numbers = #tpu.dot_dimension_numbers<[1], [0], [0], [1], [0, 0, 1, 1], [], []>} : vector<16x8xf32>, vector<8x32xf32>, vector<16x32xf32> -> vector<16x32xf32>
    %99 = arith.addf %79, %98 : vector<16x32xf32>
    %100 = vector.extract_strided_slice %76 {offsets = [0, 8], sizes = [16, 8], strides = [1, 1]} : vector<16x32xf32> to vector<16x8xf32>
    %101 = vector.extract_strided_slice %77 {offsets = [0, 8], sizes = [16, 8], strides = [1, 1]} : vector<16x32xf32> to vector<16x8xf32>
    %102 = vector.extract_strided_slice %78 {offsets = [0, 8], sizes = [16, 8], strides = [1, 1]} : vector<16x32xf32> to vector<16x8xf32>
    %cst_45 = arith.constant dense<0.000000e+00> : vector<16x16xf32>
    %103 = tpu.matmul %100, %101, %cst_45 {dimension_numbers = #tpu.dot_dimension_numbers<[1], [1], [0], [0], [0, 0, 1, 0], [], []>} : vector<16x8xf32>, vector<16x8xf32>, vector<16x16xf32> -> vector<16x16xf32>
    %cst_46 = arith.constant 0.353553385 : f32
    %104 = vector.broadcast %cst_46 : f32 to vector<16x16xf32>
    %105 = arith.mulf %103, %104 : vector<16x16xf32>
    %cst_47 = arith.constant dense<0xFF800000> : vector<16xf32>
    %106 = vector.multi_reduction <maximumf>, %105, %cst_47 [1] : vector<16x16xf32> to vector<16xf32>
    %107 = vector.shape_cast %106 : vector<16xf32> to vector<16x1xf32>
    %108 = vector.broadcast %107 : vector<16x1xf32> to vector<16x16xf32>
    %109 = arith.subf %105, %108 : vector<16x16xf32>
    %110 = math.exp %109 : vector<16x16xf32>
    %cst_48 = arith.constant dense<0.000000e+00> : vector<16xf32>
    %111 = vector.multi_reduction <add>, %110, %cst_48 [1] : vector<16x16xf32> to vector<16xf32>
    %112 = vector.shape_cast %111 : vector<16xf32> to vector<16x1xf32>
    %113 = tpu.reciprocal %112 {approx = true} : vector<16x1xf32> -> vector<16x1xf32>
    %114 = vector.broadcast %113 : vector<16x1xf32> to vector<16x16xf32>
    %115 = arith.mulf %110, %114 : vector<16x16xf32>
    %cst_49 = arith.constant dense<0.000000e+00> : vector<16x8xf32>
    %116 = tpu.matmul %115, %102, %cst_49 {dimension_numbers = #tpu.dot_dimension_numbers<[1], [0], [0], [1], [0, 0, 1, 1], [], []>} : vector<16x16xf32>, vector<16x8xf32>, vector<16x8xf32> -> vector<16x8xf32>
    %c8 = arith.constant 8 : index
    %c0_50 = arith.constant 0 : index
    %117 = vector.load %arg8[%c8, %c0_50] : memref<32x32xf32, #tpu.memory_space<vmem>>, vector<8x32xf32>
    %cst_51 = arith.constant dense<0.000000e+00> : vector<16x32xf32>
    %118 = tpu.matmul %116, %117, %cst_51 {dimension_numbers = #tpu.dot_dimension_numbers<[1], [0], [0], [1], [0, 0, 1, 1], [], []>} : vector<16x8xf32>, vector<8x32xf32>, vector<16x32xf32> -> vector<16x32xf32>
    %119 = arith.addf %99, %118 : vector<16x32xf32>
    %120 = vector.extract_strided_slice %76 {offsets = [0, 16], sizes = [16, 8], strides = [1, 1]} : vector<16x32xf32> to vector<16x8xf32>
    %121 = vector.extract_strided_slice %77 {offsets = [0, 16], sizes = [16, 8], strides = [1, 1]} : vector<16x32xf32> to vector<16x8xf32>
    %122 = vector.extract_strided_slice %78 {offsets = [0, 16], sizes = [16, 8], strides = [1, 1]} : vector<16x32xf32> to vector<16x8xf32>
    %cst_52 = arith.constant dense<0.000000e+00> : vector<16x16xf32>
    %123 = tpu.matmul %120, %121, %cst_52 {dimension_numbers = #tpu.dot_dimension_numbers<[1], [1], [0], [0], [0, 0, 1, 0], [], []>} : vector<16x8xf32>, vector<16x8xf32>, vector<16x16xf32> -> vector<16x16xf32>
    %cst_53 = arith.constant 0.353553385 : f32
    %124 = vector.broadcast %cst_53 : f32 to vector<16x16xf32>
    %125 = arith.mulf %123, %124 : vector<16x16xf32>
    %cst_54 = arith.constant dense<0xFF800000> : vector<16xf32>
    %126 = vector.multi_reduction <maximumf>, %125, %cst_54 [1] : vector<16x16xf32> to vector<16xf32>
    %127 = vector.shape_cast %126 : vector<16xf32> to vector<16x1xf32>
    %128 = vector.broadcast %127 : vector<16x1xf32> to vector<16x16xf32>
    %129 = arith.subf %125, %128 : vector<16x16xf32>
    %130 = math.exp %129 : vector<16x16xf32>
    %cst_55 = arith.constant dense<0.000000e+00> : vector<16xf32>
    %131 = vector.multi_reduction <add>, %130, %cst_55 [1] : vector<16x16xf32> to vector<16xf32>
    %132 = vector.shape_cast %131 : vector<16xf32> to vector<16x1xf32>
    %133 = tpu.reciprocal %132 {approx = true} : vector<16x1xf32> -> vector<16x1xf32>
    %134 = vector.broadcast %133 : vector<16x1xf32> to vector<16x16xf32>
    %135 = arith.mulf %130, %134 : vector<16x16xf32>
    %cst_56 = arith.constant dense<0.000000e+00> : vector<16x8xf32>
    %136 = tpu.matmul %135, %122, %cst_56 {dimension_numbers = #tpu.dot_dimension_numbers<[1], [0], [0], [1], [0, 0, 1, 1], [], []>} : vector<16x16xf32>, vector<16x8xf32>, vector<16x8xf32> -> vector<16x8xf32>
    %c16 = arith.constant 16 : index
    %c0_57 = arith.constant 0 : index
    %137 = vector.load %arg8[%c16, %c0_57] : memref<32x32xf32, #tpu.memory_space<vmem>>, vector<8x32xf32>
    %cst_58 = arith.constant dense<0.000000e+00> : vector<16x32xf32>
    %138 = tpu.matmul %136, %137, %cst_58 {dimension_numbers = #tpu.dot_dimension_numbers<[1], [0], [0], [1], [0, 0, 1, 1], [], []>} : vector<16x8xf32>, vector<8x32xf32>, vector<16x32xf32> -> vector<16x32xf32>
    %139 = arith.addf %119, %138 : vector<16x32xf32>
    %140 = vector.extract_strided_slice %76 {offsets = [0, 24], sizes = [16, 8], strides = [1, 1]} : vector<16x32xf32> to vector<16x8xf32>
    %141 = vector.extract_strided_slice %77 {offsets = [0, 24], sizes = [16, 8], strides = [1, 1]} : vector<16x32xf32> to vector<16x8xf32>
    %142 = vector.extract_strided_slice %78 {offsets = [0, 24], sizes = [16, 8], strides = [1, 1]} : vector<16x32xf32> to vector<16x8xf32>
    %cst_59 = arith.constant dense<0.000000e+00> : vector<16x16xf32>
    %143 = tpu.matmul %140, %141, %cst_59 {dimension_numbers = #tpu.dot_dimension_numbers<[1], [1], [0], [0], [0, 0, 1, 0], [], []>} : vector<16x8xf32>, vector<16x8xf32>, vector<16x16xf32> -> vector<16x16xf32>
    %cst_60 = arith.constant 0.353553385 : f32
    %144 = vector.broadcast %cst_60 : f32 to vector<16x16xf32>
    %145 = arith.mulf %143, %144 : vector<16x16xf32>
    %cst_61 = arith.constant dense<0xFF800000> : vector<16xf32>
    %146 = vector.multi_reduction <maximumf>, %145, %cst_61 [1] : vector<16x16xf32> to vector<16xf32>
    %147 = vector.shape_cast %146 : vector<16xf32> to vector<16x1xf32>
    %148 = vector.broadcast %147 : vector<16x1xf32> to vector<16x16xf32>
    %149 = arith.subf %145, %148 : vector<16x16xf32>
    %150 = math.exp %149 : vector<16x16xf32>
    %cst_62 = arith.constant dense<0.000000e+00> : vector<16xf32>
    %151 = vector.multi_reduction <add>, %150, %cst_62 [1] : vector<16x16xf32> to vector<16xf32>
    %152 = vector.shape_cast %151 : vector<16xf32> to vector<16x1xf32>
    %153 = tpu.reciprocal %152 {approx = true} : vector<16x1xf32> -> vector<16x1xf32>
    %154 = vector.broadcast %153 : vector<16x1xf32> to vector<16x16xf32>
    %155 = arith.mulf %150, %154 : vector<16x16xf32>
    %cst_63 = arith.constant dense<0.000000e+00> : vector<16x8xf32>
    %156 = tpu.matmul %155, %142, %cst_63 {dimension_numbers = #tpu.dot_dimension_numbers<[1], [0], [0], [1], [0, 0, 1, 1], [], []>} : vector<16x16xf32>, vector<16x8xf32>, vector<16x8xf32> -> vector<16x8xf32>
    %c24 = arith.constant 24 : index
    %c0_64 = arith.constant 0 : index
    %157 = vector.load %arg8[%c24, %c0_64] : memref<32x32xf32, #tpu.memory_space<vmem>>, vector<8x32xf32>
    %cst_65 = arith.constant dense<0.000000e+00> : vector<16x32xf32>
    %158 = tpu.matmul %156, %157, %cst_65 {dimension_numbers = #tpu.dot_dimension_numbers<[1], [0], [0], [1], [0, 0, 1, 1], [], []>} : vector<16x8xf32>, vector<8x32xf32>, vector<16x32xf32> -> vector<16x32xf32>
    %159 = arith.addf %139, %158 : vector<16x32xf32>
    %c0_66 = arith.constant 0 : index
    %c0_67 = arith.constant 0 : index
    %160 = vector.load %arg9[%c0_66, %c0_67] : memref<1x32xf32, #tpu.memory_space<vmem>>, vector<1x32xf32>
    %161 = vector.broadcast %160 : vector<1x32xf32> to vector<16x32xf32>
    %162 = arith.addf %159, %161 : vector<16x32xf32>
    %163 = vector.extract_strided_slice %75 {offsets = [0, 0], sizes = [16, 32], strides = [1, 1]} : vector<32x32xf32> to vector<16x32xf32>
    %164 = arith.addf %162, %163 : vector<16x32xf32>
    %cst_68 = arith.constant 0.000000e+00 : f32
    %165 = vector.broadcast %cst_68 : f32 to vector<16x32xf32>
    %166 = arith.maximumf %164, %165 : vector<16x32xf32>
    %c0_69 = arith.constant 0 : index
    %c0_70 = arith.constant 0 : index
    %167 = vector.load %arg10[%c0_69, %c0_70] : memref<32x32xf32, #tpu.memory_space<vmem>>, vector<16x32xf32>
    tpu.vector_store %arg10[%c0_69, %c0_70], %166 {strides = array<i32>} : memref<32x32xf32, #tpu.memory_space<vmem>>, vector<16x32xf32>,
    %168 = vector.extract_strided_slice %72 {offsets = [16, 0], sizes = [16, 32], strides = [1, 1]} : vector<32x32xf32> to vector<16x32xf32>
    %169 = vector.extract_strided_slice %73 {offsets = [16, 0], sizes = [16, 32], strides = [1, 1]} : vector<32x32xf32> to vector<16x32xf32>
    %170 = vector.extract_strided_slice %74 {offsets = [16, 0], sizes = [16, 32], strides = [1, 1]} : vector<32x32xf32> to vector<16x32xf32>
    %cst_71 = arith.constant 0.000000e+00 : f32
    %171 = vector.broadcast %cst_71 : f32 to vector<16x32xf32>
    %172 = vector.extract_strided_slice %168 {offsets = [0, 0], sizes = [16, 8], strides = [1, 1]} : vector<16x32xf32> to vector<16x8xf32>
    %173 = vector.extract_strided_slice %169 {offsets = [0, 0], sizes = [16, 8], strides = [1, 1]} : vector<16x32xf32> to vector<16x8xf32>
    %174 = vector.extract_strided_slice %170 {offsets = [0, 0], sizes = [16, 8], strides = [1, 1]} : vector<16x32xf32> to vector<16x8xf32>
    %cst_72 = arith.constant dense<0.000000e+00> : vector<16x16xf32>
    %175 = tpu.matmul %172, %173, %cst_72 {dimension_numbers = #tpu.dot_dimension_numbers<[1], [1], [0], [0], [0, 0, 1, 0], [], []>} : vector<16x8xf32>, vector<16x8xf32>, vector<16x16xf32> -> vector<16x16xf32>
    %cst_73 = arith.constant 0.353553385 : f32
    %176 = vector.broadcast %cst_73 : f32 to vector<16x16xf32>
    %177 = arith.mulf %175, %176 : vector<16x16xf32>
    %cst_74 = arith.constant dense<0xFF800000> : vector<16xf32>
    %178 = vector.multi_reduction <maximumf>, %177, %cst_74 [1] : vector<16x16xf32> to vector<16xf32>
    %179 = vector.shape_cast %178 : vector<16xf32> to vector<16x1xf32>
    %180 = vector.broadcast %179 : vector<16x1xf32> to vector<16x16xf32>
    %181 = arith.subf %177, %180 : vector<16x16xf32>
    %182 = math.exp %181 : vector<16x16xf32>
    %cst_75 = arith.constant dense<0.000000e+00> : vector<16xf32>
    %183 = vector.multi_reduction <add>, %182, %cst_75 [1] : vector<16x16xf32> to vector<16xf32>
    %184 = vector.shape_cast %183 : vector<16xf32> to vector<16x1xf32>
    %185 = tpu.reciprocal %184 {approx = true} : vector<16x1xf32> -> vector<16x1xf32>
    %186 = vector.broadcast %185 : vector<16x1xf32> to vector<16x16xf32>
    %187 = arith.mulf %182, %186 : vector<16x16xf32>
    %cst_76 = arith.constant dense<0.000000e+00> : vector<16x8xf32>
    %188 = tpu.matmul %187, %174, %cst_76 {dimension_numbers = #tpu.dot_dimension_numbers<[1], [0], [0], [1], [0, 0, 1, 1], [], []>} : vector<16x16xf32>, vector<16x8xf32>, vector<16x8xf32> -> vector<16x8xf32>
    %c0_77 = arith.constant 0 : index
    %c0_78 = arith.constant 0 : index
    %189 = vector.load %arg8[%c0_77, %c0_78] : memref<32x32xf32, #tpu.memory_space<vmem>>, vector<8x32xf32>
    %cst_79 = arith.constant dense<0.000000e+00> : vector<16x32xf32>
    %190 = tpu.matmul %188, %189, %cst_79 {dimension_numbers = #tpu.dot_dimension_numbers<[1], [0], [0], [1], [0, 0, 1, 1], [], []>} : vector<16x8xf32>, vector<8x32xf32>, vector<16x32xf32> -> vector<16x32xf32>
    %191 = arith.addf %171, %190 : vector<16x32xf32>
    %192 = vector.extract_strided_slice %168 {offsets = [0, 8], sizes = [16, 8], strides = [1, 1]} : vector<16x32xf32> to vector<16x8xf32>
    %193 = vector.extract_strided_slice %169 {offsets = [0, 8], sizes = [16, 8], strides = [1, 1]} : vector<16x32xf32> to vector<16x8xf32>
    %194 = vector.extract_strided_slice %170 {offsets = [0, 8], sizes = [16, 8], strides = [1, 1]} : vector<16x32xf32> to vector<16x8xf32>
    %cst_80 = arith.constant dense<0.000000e+00> : vector<16x16xf32>
    %195 = tpu.matmul %192, %193, %cst_80 {dimension_numbers = #tpu.dot_dimension_numbers<[1], [1], [0], [0], [0, 0, 1, 0], [], []>} : vector<16x8xf32>, vector<16x8xf32>, vector<16x16xf32> -> vector<16x16xf32>
    %cst_81 = arith.constant 0.353553385 : f32
    %196 = vector.broadcast %cst_81 : f32 to vector<16x16xf32>
    %197 = arith.mulf %195, %196 : vector<16x16xf32>
    %cst_82 = arith.constant dense<0xFF800000> : vector<16xf32>
    %198 = vector.multi_reduction <maximumf>, %197, %cst_82 [1] : vector<16x16xf32> to vector<16xf32>
    %199 = vector.shape_cast %198 : vector<16xf32> to vector<16x1xf32>
    %200 = vector.broadcast %199 : vector<16x1xf32> to vector<16x16xf32>
    %201 = arith.subf %197, %200 : vector<16x16xf32>
    %202 = math.exp %201 : vector<16x16xf32>
    %cst_83 = arith.constant dense<0.000000e+00> : vector<16xf32>
    %203 = vector.multi_reduction <add>, %202, %cst_83 [1] : vector<16x16xf32> to vector<16xf32>
    %204 = vector.shape_cast %203 : vector<16xf32> to vector<16x1xf32>
    %205 = tpu.reciprocal %204 {approx = true} : vector<16x1xf32> -> vector<16x1xf32>
    %206 = vector.broadcast %205 : vector<16x1xf32> to vector<16x16xf32>
    %207 = arith.mulf %202, %206 : vector<16x16xf32>
    %cst_84 = arith.constant dense<0.000000e+00> : vector<16x8xf32>
    %208 = tpu.matmul %207, %194, %cst_84 {dimension_numbers = #tpu.dot_dimension_numbers<[1], [0], [0], [1], [0, 0, 1, 1], [], []>} : vector<16x16xf32>, vector<16x8xf32>, vector<16x8xf32> -> vector<16x8xf32>
    %c8_85 = arith.constant 8 : index
    %c0_86 = arith.constant 0 : index
    %209 = vector.load %arg8[%c8_85, %c0_86] : memref<32x32xf32, #tpu.memory_space<vmem>>, vector<8x32xf32>
    %cst_87 = arith.constant dense<0.000000e+00> : vector<16x32xf32>
    %210 = tpu.matmul %208, %209, %cst_87 {dimension_numbers = #tpu.dot_dimension_numbers<[1], [0], [0], [1], [0, 0, 1, 1], [], []>} : vector<16x8xf32>, vector<8x32xf32>, vector<16x32xf32> -> vector<16x32xf32>
    %211 = arith.addf %191, %210 : vector<16x32xf32>
    %212 = vector.extract_strided_slice %168 {offsets = [0, 16], sizes = [16, 8], strides = [1, 1]} : vector<16x32xf32> to vector<16x8xf32>
    %213 = vector.extract_strided_slice %169 {offsets = [0, 16], sizes = [16, 8], strides = [1, 1]} : vector<16x32xf32> to vector<16x8xf32>
    %214 = vector.extract_strided_slice %170 {offsets = [0, 16], sizes = [16, 8], strides = [1, 1]} : vector<16x32xf32> to vector<16x8xf32>
    %cst_88 = arith.constant dense<0.000000e+00> : vector<16x16xf32>
    %215 = tpu.matmul %212, %213, %cst_88 {dimension_numbers = #tpu.dot_dimension_numbers<[1], [1], [0], [0], [0, 0, 1, 0], [], []>} : vector<16x8xf32>, vector<16x8xf32>, vector<16x16xf32> -> vector<16x16xf32>
    %cst_89 = arith.constant 0.353553385 : f32
    %216 = vector.broadcast %cst_89 : f32 to vector<16x16xf32>
    %217 = arith.mulf %215, %216 : vector<16x16xf32>
    %cst_90 = arith.constant dense<0xFF800000> : vector<16xf32>
    %218 = vector.multi_reduction <maximumf>, %217, %cst_90 [1] : vector<16x16xf32> to vector<16xf32>
    %219 = vector.shape_cast %218 : vector<16xf32> to vector<16x1xf32>
    %220 = vector.broadcast %219 : vector<16x1xf32> to vector<16x16xf32>
    %221 = arith.subf %217, %220 : vector<16x16xf32>
    %222 = math.exp %221 : vector<16x16xf32>
    %cst_91 = arith.constant dense<0.000000e+00> : vector<16xf32>
    %223 = vector.multi_reduction <add>, %222, %cst_91 [1] : vector<16x16xf32> to vector<16xf32>
    %224 = vector.shape_cast %223 : vector<16xf32> to vector<16x1xf32>
    %225 = tpu.reciprocal %224 {approx = true} : vector<16x1xf32> -> vector<16x1xf32>
    %226 = vector.broadcast %225 : vector<16x1xf32> to vector<16x16xf32>
    %227 = arith.mulf %222, %226 : vector<16x16xf32>
    %cst_92 = arith.constant dense<0.000000e+00> : vector<16x8xf32>
    %228 = tpu.matmul %227, %214, %cst_92 {dimension_numbers = #tpu.dot_dimension_numbers<[1], [0], [0], [1], [0, 0, 1, 1], [], []>} : vector<16x16xf32>, vector<16x8xf32>, vector<16x8xf32> -> vector<16x8xf32>
    %c16_93 = arith.constant 16 : index
    %c0_94 = arith.constant 0 : index
    %229 = vector.load %arg8[%c16_93, %c0_94] : memref<32x32xf32, #tpu.memory_space<vmem>>, vector<8x32xf32>
    %cst_95 = arith.constant dense<0.000000e+00> : vector<16x32xf32>
    %230 = tpu.matmul %228, %229, %cst_95 {dimension_numbers = #tpu.dot_dimension_numbers<[1], [0], [0], [1], [0, 0, 1, 1], [], []>} : vector<16x8xf32>, vector<8x32xf32>, vector<16x32xf32> -> vector<16x32xf32>
    %231 = arith.addf %211, %230 : vector<16x32xf32>
    %232 = vector.extract_strided_slice %168 {offsets = [0, 24], sizes = [16, 8], strides = [1, 1]} : vector<16x32xf32> to vector<16x8xf32>
    %233 = vector.extract_strided_slice %169 {offsets = [0, 24], sizes = [16, 8], strides = [1, 1]} : vector<16x32xf32> to vector<16x8xf32>
    %234 = vector.extract_strided_slice %170 {offsets = [0, 24], sizes = [16, 8], strides = [1, 1]} : vector<16x32xf32> to vector<16x8xf32>
    %cst_96 = arith.constant dense<0.000000e+00> : vector<16x16xf32>
    %235 = tpu.matmul %232, %233, %cst_96 {dimension_numbers = #tpu.dot_dimension_numbers<[1], [1], [0], [0], [0, 0, 1, 0], [], []>} : vector<16x8xf32>, vector<16x8xf32>, vector<16x16xf32> -> vector<16x16xf32>
    %cst_97 = arith.constant 0.353553385 : f32
    %236 = vector.broadcast %cst_97 : f32 to vector<16x16xf32>
    %237 = arith.mulf %235, %236 : vector<16x16xf32>
    %cst_98 = arith.constant dense<0xFF800000> : vector<16xf32>
    %238 = vector.multi_reduction <maximumf>, %237, %cst_98 [1] : vector<16x16xf32> to vector<16xf32>
    %239 = vector.shape_cast %238 : vector<16xf32> to vector<16x1xf32>
    %240 = vector.broadcast %239 : vector<16x1xf32> to vector<16x16xf32>
    %241 = arith.subf %237, %240 : vector<16x16xf32>
    %242 = math.exp %241 : vector<16x16xf32>
    %cst_99 = arith.constant dense<0.000000e+00> : vector<16xf32>
    %243 = vector.multi_reduction <add>, %242, %cst_99 [1] : vector<16x16xf32> to vector<16xf32>
    %244 = vector.shape_cast %243 : vector<16xf32> to vector<16x1xf32>
    %245 = tpu.reciprocal %244 {approx = true} : vector<16x1xf32> -> vector<16x1xf32>
    %246 = vector.broadcast %245 : vector<16x1xf32> to vector<16x16xf32>
    %247 = arith.mulf %242, %246 : vector<16x16xf32>
    %cst_100 = arith.constant dense<0.000000e+00> : vector<16x8xf32>
    %248 = tpu.matmul %247, %234, %cst_100 {dimension_numbers = #tpu.dot_dimension_numbers<[1], [0], [0], [1], [0, 0, 1, 1], [], []>} : vector<16x16xf32>, vector<16x8xf32>, vector<16x8xf32> -> vector<16x8xf32>
    %c24_101 = arith.constant 24 : index
    %c0_102 = arith.constant 0 : index
    %249 = vector.load %arg8[%c24_101, %c0_102] : memref<32x32xf32, #tpu.memory_space<vmem>>, vector<8x32xf32>
    %cst_103 = arith.constant dense<0.000000e+00> : vector<16x32xf32>
    %250 = tpu.matmul %248, %249, %cst_103 {dimension_numbers = #tpu.dot_dimension_numbers<[1], [0], [0], [1], [0, 0, 1, 1], [], []>} : vector<16x8xf32>, vector<8x32xf32>, vector<16x32xf32> -> vector<16x32xf32>
    %251 = arith.addf %231, %250 : vector<16x32xf32>
    %c0_104 = arith.constant 0 : index
    %c0_105 = arith.constant 0 : index
    %252 = vector.load %arg9[%c0_104, %c0_105] : memref<1x32xf32, #tpu.memory_space<vmem>>, vector<1x32xf32>
    %253 = vector.broadcast %252 : vector<1x32xf32> to vector<16x32xf32>
    %254 = arith.addf %251, %253 : vector<16x32xf32>
    %255 = vector.extract_strided_slice %75 {offsets = [16, 0], sizes = [16, 32], strides = [1, 1]} : vector<32x32xf32> to vector<16x32xf32>
    %256 = arith.addf %254, %255 : vector<16x32xf32>
    %cst_106 = arith.constant 0.000000e+00 : f32
    %257 = vector.broadcast %cst_106 : f32 to vector<16x32xf32>
    %258 = arith.maximumf %256, %257 : vector<16x32xf32>
    %c16_107 = arith.constant 16 : index
    %c0_108 = arith.constant 0 : index
    %259 = vector.load %arg10[%c16_107, %c0_108] : memref<32x32xf32, #tpu.memory_space<vmem>>, vector<16x32xf32>
    tpu.vector_store %arg10[%c16_107, %c0_108], %258 {strides = array<i32>} : memref<32x32xf32, #tpu.memory_space<vmem>>, vector<16x32xf32>,
    return
  }
  func.func @transform_0(%arg0: i32) -> (i32, i32) {
    %c0_i32 = arith.constant 0 : i32
    %c0_i32_0 = arith.constant 0 : i32
    return %arg0, %c0_i32 : i32, i32
  }
  func.func @transform_1(%arg0: i32) -> (i32, i32) {
    %c0_i32 = arith.constant 0 : i32
    %c0_i32_0 = arith.constant 0 : i32
    %c0_i32_1 = arith.constant 0 : i32
    return %c0_i32, %c0_i32_0 : i32, i32
  }
  func.func @transform_2(%arg0: i32) -> (i32, i32) {
    %c0_i32 = arith.constant 0 : i32
    %c0_i32_0 = arith.constant 0 : i32
    %c0_i32_1 = arith.constant 0 : i32
    return %c0_i32, %c0_i32_0 : i32, i32
  }
  func.func @transform_3(%arg0: i32) -> (i32, i32, i32) {
    %c0_i32 = arith.constant 0 : i32
    %c0_i32_0 = arith.constant 0 : i32
    %c0_i32_1 = arith.constant 0 : i32
    %c0_i32_2 = arith.constant 0 : i32
    return %c0_i32, %c0_i32_0, %c0_i32_1 : i32, i32, i32
  }
  func.func @transform_4(%arg0: i32) -> (i32, i32) {
    %c0_i32 = arith.constant 0 : i32
    %c0_i32_0 = arith.constant 0 : i32
    %c0_i32_1 = arith.constant 0 : i32
    return %c0_i32, %c0_i32_0 : i32, i32
  }
  func.func @transform_5(%arg0: i32) -> (i32, i32) {
    %c0_i32 = arith.constant 0 : i32
    %c0_i32_0 = arith.constant 0 : i32
    %c0_i32_1 = arith.constant 0 : i32
    return %c0_i32, %c0_i32_0 : i32, i32
  }
  func.func @transform_6(%arg0: i32) -> (i32, i32) {
    %c0_i32 = arith.constant 0 : i32
    %c0_i32_0 = arith.constant 0 : i32
    %c0_i32_1 = arith.constant 0 : i32
    return %c0_i32, %c0_i32_0 : i32, i32
  }
  func.func @transform_7(%arg0: i32) -> (i32, i32) {
    %c0_i32 = arith.constant 0 : i32
    %c0_i32_0 = arith.constant 0 : i32
    %c0_i32_1 = arith.constant 0 : i32
    return %c0_i32, %c0_i32_0 : i32, i32
  }
  func.func @transform_8(%arg0: i32) -> (i32, i32) {
    %c0_i32 = arith.constant 0 : i32
    %c0_i32_0 = arith.constant 0 : i32
    %c0_i32_1 = arith.constant 0 : i32
    return %c0_i32, %c0_i32_0 : i32, i32
  }
  func.func @transform_9(%arg0: i32) -> (i32, i32) {
    %c0_i32 = arith.constant 0 : i32
    %c0_i32_0 = arith.constant 0 : i32
    return %arg0, %c0_i32 : i32, i32
  }
}

</mosaic_0001>

<llo_original>
// kernel: tpu_custom_call.1
$region0: #{tpu_custom_call.1}
  #allocation0 [shape = 'u32[]', space=smem, size = 0x4, offset = 0x4, fixed_abs, tag = 'smem constant byte address 0x4 - core index']
  #allocation1 [shape = 'u32[144,128]{1,0:T(1,128)}', space=vmem, size = 0x12000, scoped, tag = 'internal scratch']
  %s0 = inlined_call_operand.vmem [shape: f32[32,96], index: 0, kind: input, shape index: {}]
  %s1 = inlined_call_operand.vmem [shape: f32[96,64], index: 1, kind: input, shape index: {}]
  %s2 = inlined_call_operand.vmem [shape: f32[1,64], index: 2, kind: input, shape index: {}]
  %s3 = inlined_call_operand.vmem [shape: f32[3,64,32], index: 3, kind: input, shape index: {}]
  %s4 = inlined_call_operand.vmem [shape: f32[1,32], index: 4, kind: input, shape index: {}]
  %s5 = inlined_call_operand.vmem [shape: f32[32,96], index: 5, kind: input, shape index: {}]
  %s6 = inlined_call_operand.vmem [shape: f32[1,96], index: 6, kind: input, shape index: {}]
  %s7 = inlined_call_operand.vmem [shape: f32[32,32], index: 7, kind: input, shape index: {}]
  %s8 = inlined_call_operand.vmem [shape: f32[1,32], index: 8, kind: input, shape index: {}]
  %s9 = inlined_call_operand.hbm [shape: f32[32,32], index: 9, kind: output, shape index: {}]
  %s10 = sld [smem:[#allocation0]]
  $region46: #{tpu_custom_call.1} parent=0
    _
  %s12 = ssub.s32 1, %s10
  %s13 = scalar_select 0, %s12, %s10
  $region1: #{tpu_custom_call.1} parent=0
    #allocation2 [shape = 'u8[16384]{0}', space=vmem, size = 0x4000, scoped, tag = 'output window, operand 0, single buffered']
    #allocation3 [shape = 's32[1]{0}', space=sflag, size = 0x4, scoped, tag = 'scoped memory for tpu_custom_call.1']
    %14 = vsyncpa [#allocation3], 0
    // Predicated region
    $region2: #{tpu_custom_call.1} parent=1 // pred_check
      _
    $region3: #{tpu_custom_call.1} parent=1 // pred_check_branch
      %16 = sbr.rel (0) target = $region5
    $region4: #{tpu_custom_call.1} parent=1 // pred_region
      _
    $region5: #{tpu_custom_call.1} parent=1 // pred_fallthru
      _
    // Predicated region
    $region6: #{tpu_custom_call.1} parent=1 // pred_check
      _
    $region7: #{tpu_custom_call.1} parent=1 // pred_check_branch
      %18 = sbr.rel (0) target = $region9
    $region8: #{tpu_custom_call.1} parent=1 // pred_region
      _
    $region9: #{tpu_custom_call.1} parent=1 // pred_fallthru
      _
    // Predicated region
    $region10: #{tpu_custom_call.1} parent=1 // pred_check
      _
    $region11: #{tpu_custom_call.1} parent=1 // pred_check_branch
      %20 = sbr.rel (0) target = $region13
    $region12: #{tpu_custom_call.1} parent=1 // pred_region
      _
    $region13: #{tpu_custom_call.1} parent=1 // pred_fallthru
      _
    // Predicated region
    $region14: #{tpu_custom_call.1} parent=1 // pred_check
      _
    $region15: #{tpu_custom_call.1} parent=1 // pred_check_branch
      %22 = sbr.rel (0) target = $region17
    $region16: #{tpu_custom_call.1} parent=1 // pred_region
      _
    $region17: #{tpu_custom_call.1} parent=1 // pred_fallthru
      _
    // Predicated region
    $region18: #{tpu_custom_call.1} parent=1 // pred_check
      _
    $region19: #{tpu_custom_call.1} parent=1 // pred_check_branch
      %24 = sbr.rel (0) target = $region21
    $region20: #{tpu_custom_call.1} parent=1 // pred_region
      _
    $region21: #{tpu_custom_call.1} parent=1 // pred_fallthru
      _
    // Predicated region
    $region22: #{tpu_custom_call.1} parent=1 // pred_check
      _
    $region23: #{tpu_custom_call.1} parent=1 // pred_check_branch
      %26 = sbr.rel (0) target = $region25
    $region24: #{tpu_custom_call.1} parent=1 // pred_region
      _
    $region25: #{tpu_custom_call.1} parent=1 // pred_fallthru
      _
    // Predicated region
    $region26: #{tpu_custom_call.1} parent=1 // pred_check
      _
    $region27: #{tpu_custom_call.1} parent=1 // pred_check_branch
      %28 = sbr.rel (0) target = $region29
    $region28: #{tpu_custom_call.1} parent=1 // pred_region
      _
    $region29: #{tpu_custom_call.1} parent=1 // pred_fallthru
      _
    // Predicated region
    $region30: #{tpu_custom_call.1} parent=1 // pred_check
      _
    $region31: #{tpu_custom_call.1} parent=1 // pred_check_branch
      %30 = sbr.rel (0) target = $region33
    $region32: #{tpu_custom_call.1} parent=1 // pred_region
      _
    $region33: #{tpu_custom_call.1} parent=1 // pred_fallthru
      _
    // Predicated region
    $region34: #{tpu_custom_call.1} parent=1 // pred_check
      _
    $region35: #{tpu_custom_call.1} parent=1 // pred_check_branch
      %32 = sbr.rel (0) target = $region37
    $region36: #{tpu_custom_call.1} parent=1 // pred_region
      _
    $region37: #{tpu_custom_call.1} parent=1 // pred_fallthru
      _
    %v33 = vld [vmem:[%s0] sm:$0xff]
    %v34 = vld [vmem:[%s0 + $0x8] sm:$0xff]
    %v35 = vld [vmem:[%s0 + $0x10] sm:$0xff]
    %v36 = vld [vmem:[%s0 + $0x18] sm:$0xff]
    %v37 = vld [vmem:[%s1] sm:$0xff]
    %v38 = vld [vmem:[%s1 + $0x8] sm:$0xff]
    %v39 = vld [vmem:[%s1 + $0x10] sm:$0xff]
    %v40 = vld [vmem:[%s1 + $0x18] sm:$0xff]
    %v41 = vld [vmem:[%s1 + $0x20] sm:$0xff]
    %v42 = vld [vmem:[%s1 + $0x28] sm:$0xff]
    %v43 = vld [vmem:[%s1 + $0x30] sm:$0xff]
    %v44 = vld [vmem:[%s1 + $0x38] sm:$0xff]
    %v45 = vld [vmem:[%s1 + $0x40] sm:$0xff]
    %v46 = vld [vmem:[%s1 + $0x48] sm:$0xff]
    %v47 = vld [vmem:[%s1 + $0x50] sm:$0xff]
    %v48 = vld [vmem:[%s1 + $0x58] sm:$0xff]
    %v49 = vld [vmem:[%s2] sm:$0x1]
    %v51 = vlaneseq
    %v52 = vshrl.u32 %v51, 7
    %v53 = vsub.s32 0, %v52
    %v54 = vrot.slane %v49, %v53
    %vm56 = vcmask 785408
    %v58 = vsel %vm56, %v33, 0
    %v61 = vsel %vm56, %v34, 0
    %v64 = vsel %vm56, %v35, 0
    %v67 = vsel %vm56, %v36, 0
    %69 = vmatprep.subr.mxu0 0.0
    %70 = vmatpush1.msra.mxu0 %v37
    %71 = vmatprep.subr.mxu0 0.0
    %72 = vmatpush1.msra.mxu0 %v38
    %73 = vmatprep.subr.mxu0 0.0
    %74 = vmatpush1.msra.mxu0 %v39
    %75 = vmatprep.subr.mxu0 0.0
    %76 = vmatpush1.msra.mxu0 %v40
    %77 = vmatprep.subr.mxu0 0.0
    %78 = vmatpush1.msra.mxu0 %v41
    %79 = vmatprep.subr.mxu0 0.0
    %80 = vmatpush1.msra.mxu0 %v42
    %81 = vmatprep.subr.mxu0 0.0
    %82 = vmatpush1.msra.mxu0 %v43
    %83 = vmatprep.subr.mxu0 0.0
    %84 = vmatpush1.msra.mxu0 %v44
    %85 = vmatprep.subr.mxu0 0.0
    %86 = vmatpush1.msra.mxu0 %v45
    %87 = vmatprep.subr.mxu0 0.0
    %88 = vmatpush1.msra.mxu0 %v46
    %89 = vmatprep.subr.mxu0 0.0
    %90 = vmatpush1.msra.mxu0 %v47
    %91 = vmatprep.subr.mxu0 0.0
    %92 = vmatpush1.msra.mxu0 %v48
    %93 = vmatprep.subr.mxu0 0.0
    %94 = vmatpush1.msra.mxu0 0.0
    %95 = vmatprep.subr.mxu0 0.0
    %96 = vmatpush1.msra.mxu0 0.0
    %97 = vmatprep.subr.mxu0 0.0
    %98 = vmatpush1.msra.mxu0 0.0
    %99 = vmatprep.subr.mxu0 0.0
    %100 = vmatpush1.msra.mxu0 0.0
    %101 = vmatprep.subr.mxu0 0.0
    %102 = vmatpush1.msra.mxu0 0.0
    %103 = vmatprep.subr.mxu0 0.0
    %104 = vmatpush1.msra.mxu0 0.0
    %105 = vmatprep.subr.mxu0 0.0
    %106 = vmatpush1.msra.mxu0 0.0
    %107 = vmatprep.subr.mxu0 0.0
    %108 = vmatpush1.msra.mxu0 0.0
    %109 = vmatprep.subr.mxu0 0.0
    %110 = vmatpush1.msra.mxu0 0.0
    %111 = vmatprep.subr.mxu0 0.0
    %112 = vmatpush1.msra.mxu0 0.0
    %113 = vmatprep.subr.mxu0 0.0
    %114 = vmatpush1.msra.mxu0 0.0
    %115 = vmatprep.subr.mxu0 0.0
    %116 = vmatpush1.msra.mxu0 0.0
    %117 = vmatprep.subr.mxu0 0.0
    %118 = vmatpush1.msra.mxu0 0.0
    %119 = vmatprep.subr.mxu0 0.0
    %120 = vmatpush1.msra.mxu0 0.0
    %121 = vmatprep.subr.mxu0 0.0
    %122 = vmatpush1.msra.mxu0 0.0
    %123 = vmatprep.subr.mxu0 0.0
    %124 = vmatpush1.msra.mxu0 0.0
    %125 = vmatprep.subr.mxu0 0.0
    %126 = vmatpush1.msra.mxu0 0.0
    %127 = vmatprep.subr.mxu0 0.0
    %128 = vmatpush1.msra.mxu0 0.0
    %129 = vmatprep.subr.mxu0 0.0
    %130 = vmatpush1.msra.mxu0 0.0
    %131 = vmatprep.subr.mxu0 0.0
    %132 = vmatpush1.msra.mxu0 0.0
    %133 = vmatprep.mubr.f32.mxu0 0.0
    %134 = vmatmul.mubr.f32.gmra.mrb[0].mxu0 %v58
    %v135 = vpop.f32.mrb[0].mxu0
    %v136 = vadd.f32 %v54, %v135
    %v137 = vpop.f32.mrb[0].mxu0
    %138 = vmatprep.mubr.f32.mxu0 0.0
    %139 = vmatmul.mubr.f32.gmra.mrb[0].mxu0 %v61
    %v140 = vpop.f32.mrb[0].mxu0
    %v141 = vadd.f32 %v54, %v140
    %v142 = vpop.f32.mrb[0].mxu0
    %143 = vmatprep.mubr.f32.mxu0 0.0
    %144 = vmatmul.mubr.f32.gmra.mrb[0].mxu0 %v64
    %v145 = vpop.f32.mrb[0].mxu0
    %v146 = vadd.f32 %v54, %v145
    %v147 = vpop.f32.mrb[0].mxu0
    %148 = vmatprep.mubr.f32.mxu0 0.0
    %149 = vmatmul.mubr.f32.gmra.mrb[0].mxu0 %v67
    %v150 = vpop.f32.mrb[0].mxu0
    %v151 = vadd.f32 %v54, %v150
    %v152 = vpop.f32.mrb[0].mxu0
    %153 = vdwg.mxu0
    %v154 = vmax.f32 %v136, 0.0
    %v155 = vmax.f32 %v141, 0.0
    %v156 = vmax.f32 %v146, 0.0
    %v157 = vmax.f32 %v151, 0.0
    %v158 = vlaneseq
    %v159 = vshrl.u32 %v158, 7
    %v160 = vadd.s32 %v159, 8
    %v161 = vadd.s32 %v159, 16
    %v162 = vadd.s32 %v159, 24
    %vm163 = vcmp.lt.s32.totalorder %v159, 0
    %v164 = vsub.s32 0, %v159
    %v165 = vsel %vm163, %v164, %v159
    %v166 = vshrl.u32 %v165, 4
    %v167 = vand.u32 %v165, 15
    %v168 = vsub.s32 0, %v167
    %v169 = vsel %vm163, %v168, %v167
    %vm170 = vcmp.lt.s32.totalorder %v160, 0
    %v171 = vsub.s32 0, %v160
    %v172 = vsel %vm170, %v171, %v160
    %v173 = vshrl.u32 %v172, 4
    %v174 = vand.u32 %v172, 15
    %v175 = vsub.s32 0, %v174
    %v176 = vsel %vm170, %v175, %v174
    %vm177 = vcmp.lt.s32.totalorder %v161, 0
    %v178 = vsub.s32 0, %v161
    %v179 = vsel %vm177, %v178, %v161
    %v180 = vshrl.u32 %v179, 4
    %v181 = vand.u32 %v179, 15
    %v182 = vsub.s32 0, %v181
    %v183 = vsel %vm177, %v182, %v181
    %vm184 = vcmp.lt.s32.totalorder %v162, 0
    %v185 = vsub.s32 0, %v162
    %v186 = vsel %vm184, %v185, %v162
    %v187 = vshrl.u32 %v186, 4
    %v188 = vand.u32 %v186, 15
    %v189 = vsub.s32 0, %v188
    %v190 = vsel %vm184, %v189, %v188
    %vm191 = vcmp.ne.s32.totalorder %v169, 0
    %vm192 = vcmp.ne.s32.totalorder %v176, 0
    %vm193 = vcmp.ne.s32.totalorder %v183, 0
    %vm194 = vcmp.ne.s32.totalorder %v190, 0
    %vm195 = vcmp.lt.s32.totalorder %v169, 0
    %vm196 = vcmp.lt.s32.totalorder %v176, 0
    %vm197 = vcmp.lt.s32.totalorder %v183, 0
    %vm198 = vcmp.lt.s32.totalorder %v190, 0
    %vm199 = vmand %vm195, %vm191
    %vm200 = vmand %vm196, %vm192
    %vm201 = vmand %vm197, %vm193
    %vm202 = vmand %vm198, %vm194
    %v203 = vadd.s32 %v169, 16
    %v204 = vadd.s32 %v176, 16
    %v205 = vadd.s32 %v183, 16
    %v206 = vadd.s32 %v190, 16
    %v207 = vsel %vm199, %v203, %v169
    %v208 = vsel %vm200, %v204, %v176
    %v209 = vsel %vm201, %v205, %v183
    %v210 = vsel %vm202, %v206, %v190
    %s211 = scalar_lea.vmem %s3, 64
    %v212 = vld [vmem:[%s211] sm:$0xff]
    %v213 = vld [vmem:[%s211 + $0x8] sm:$0xff]
    %v214 = vld [vmem:[%s211 + $0x10] sm:$0xff]
    %v215 = vld [vmem:[%s211 + $0x18] sm:$0xff]
    %v216 = vld [vmem:[%s211 + $0x20] sm:$0xff]
    %v217 = vld [vmem:[%s211 + $0x28] sm:$0xff]
    %v218 = vld [vmem:[%s211 + $0x30] sm:$0xff]
    %v219 = vld [vmem:[%s211 + $0x38] sm:$0xff]
    %v220 = vrot.slane %v154, 7
    %v221 = vrot.slane %v155, 7
    %v222 = vrot.slane %v156, 7
    %v223 = vrot.slane %v157, 7
    %vm224 = vcmp.lt.s32.totalorder %v159, 1
    %v225 = vsel %vm224, %v222, %v223
    %v226 = vsel %vm224, %v221, %v222
    %v227 = vsel %vm224, %v220, %v221
    %v228 = vsel %vm224, %v223, %v220
    %v229 = vadd.s32 %v207, 4294967295
    %v230 = vadd.s32 %v208, 4294967295
    %v231 = vadd.s32 %v209, 4294967295
    %v232 = vadd.s32 %v210, 4294967295
    %vm233 = vcmp.ge.s32.totalorder %v229, 0
    %vm234 = vcmp.ge.s32.totalorder %v230, 0
    %vm235 = vcmp.ge.s32.totalorder %v231, 0
    %vm236 = vcmp.ge.s32.totalorder %v232, 0
    %vm237 = vcmp.lt.s32.totalorder %v229, 16
    %vm238 = vcmp.lt.s32.totalorder %v230, 16
    %vm239 = vcmp.lt.s32.totalorder %v231, 16
    %vm240 = vcmp.lt.s32.totalorder %v232, 16
    %vm241 = vmand %vm233, %vm237
    %vm242 = vmand %vm234, %vm238
    %vm243 = vmand %vm235, %vm239
    %vm244 = vmand %vm236, %vm240
    %v245 = vsel %vm241, 1, 0
    %v246 = vsel %vm242, 1, 0
    %v247 = vsel %vm243, 1, 0
    %v248 = vsel %vm244, 1, 0
    %vm249 = vcmp.eq.s32.totalorder %v245, 1
    %vm250 = vcmp.eq.s32.totalorder %v246, 1
    %vm251 = vcmp.eq.s32.totalorder %v247, 1
    %vm252 = vcmp.eq.s32.totalorder %v248, 1
    %v253 = vsel %vm249, %v228, 0.0
    %v254 = vsel %vm250, %v227, 0.0
    %v255 = vsel %vm251, %v226, 0.0
    %v256 = vsel %vm252, %v225, 0.0
    %v257 = vld [vmem:[%s3] sm:$0xff]
    %v258 = vld [vmem:[%s3 + $0x8] sm:$0xff]
    %v259 = vld [vmem:[%s3 + $0x10] sm:$0xff]
    %v260 = vld [vmem:[%s3 + $0x18] sm:$0xff]
    %v261 = vld [vmem:[%s3 + $0x20] sm:$0xff]
    %v262 = vld [vmem:[%s3 + $0x28] sm:$0xff]
    %v263 = vld [vmem:[%s3 + $0x30] sm:$0xff]
    %v264 = vld [vmem:[%s3 + $0x38] sm:$0xff]
    %vm265 = vcmask 523264
    %v267 = vsel %vm265, %v253, 0
    %v270 = vsel %vm265, %v254, 0
    %v273 = vsel %vm265, %v255, 0
    %v276 = vsel %vm265, %v256, 0
    %278 = vmatprep.subr.mxu0 0.0
    %279 = vmatpush1.msra.mxu0 %v257
    %280 = vmatprep.subr.mxu0 0.0
    %281 = vmatpush1.msra.mxu0 %v258
    %282 = vmatprep.subr.mxu0 0.0
    %283 = vmatpush1.msra.mxu0 %v259
    %284 = vmatprep.subr.mxu0 0.0
    %285 = vmatpush1.msra.mxu0 %v260
    %286 = vmatprep.subr.mxu0 0.0
    %287 = vmatpush1.msra.mxu0 %v261
    %288 = vmatprep.subr.mxu0 0.0
    %289 = vmatpush1.msra.mxu0 %v262
    %290 = vmatprep.subr.mxu0 0.0
    %291 = vmatpush1.msra.mxu0 %v263
    %292 = vmatprep.subr.mxu0 0.0
    %293 = vmatpush1.msra.mxu0 %v264
    %294 = vmatprep.subr.mxu0 0.0
    %295 = vmatpush1.msra.mxu0 0.0
    %296 = vmatprep.subr.mxu0 0.0
    %297 = vmatpush1.msra.mxu0 0.0
    %298 = vmatprep.subr.mxu0 0.0
    %299 = vmatpush1.msra.mxu0 0.0
    %300 = vmatprep.subr.mxu0 0.0
    %301 = vmatpush1.msra.mxu0 0.0
    %302 = vmatprep.subr.mxu0 0.0
    %303 = vmatpush1.msra.mxu0 0.0
    %304 = vmatprep.subr.mxu0 0.0
    %305 = vmatpush1.msra.mxu0 0.0
    %306 = vmatprep.subr.mxu0 0.0
    %307 = vmatpush1.msra.mxu0 0.0
    %308 = vmatprep.subr.mxu0 0.0
    %309 = vmatpush1.msra.mxu0 0.0
    %310 = vmatprep.subr.mxu0 0.0
    %311 = vmatpush1.msra.mxu0 0.0
    %312 = vmatprep.subr.mxu0 0.0
    %313 = vmatpush1.msra.mxu0 0.0
    %314 = vmatprep.subr.mxu0 0.0
    %315 = vmatpush1.msra.mxu0 0.0
    %316 = vmatprep.subr.mxu0 0.0
    %317 = vmatpush1.msra.mxu0 0.0
    %318 = vmatprep.subr.mxu0 0.0
    %319 = vmatpush1.msra.mxu0 0.0
    %320 = vmatprep.subr.mxu0 0.0
    %321 = vmatpush1.msra.mxu0 0.0
    %322 = vmatprep.subr.mxu0 0.0
    %323 = vmatpush1.msra.mxu0 0.0
    %324 = vmatprep.subr.mxu0 0.0
    %325 = vmatpush1.msra.mxu0 0.0
    %326 = vmatprep.subr.mxu0 0.0
    %327 = vmatpush1.msra.mxu0 0.0
    %328 = vmatprep.subr.mxu0 0.0
    %329 = vmatpush1.msra.mxu0 0.0
    %330 = vmatprep.subr.mxu0 0.0
    %331 = vmatpush1.msra.mxu0 0.0
    %332 = vmatprep.subr.mxu0 0.0
    %333 = vmatpush1.msra.mxu0 0.0
    %334 = vmatprep.subr.mxu0 0.0
    %335 = vmatpush1.msra.mxu0 0.0
    %336 = vmatprep.subr.mxu0 0.0
    %337 = vmatpush1.msra.mxu0 0.0
    %338 = vmatprep.subr.mxu0 0.0
    %339 = vmatpush1.msra.mxu0 0.0
    %340 = vmatprep.subr.mxu0 0.0
    %341 = vmatpush1.msra.mxu0 0.0
    %342 = vmatprep.mubr.f32.mxu0 0.0
    %343 = vmatmul.mubr.f32.gmra.mrb[0].mxu0 %v267
    %v344 = vpop.f32.mrb[0].mxu0
    %v345 = vadd.f32 0.0, %v344
    %v346 = vpop.f32.mrb[0].mxu0
    %347 = vmatprep.mubr.f32.mxu0 0.0
    %348 = vmatmul.mubr.f32.gmra.mrb[0].mxu0 %v270
    %v349 = vpop.f32.mrb[0].mxu0
    %v350 = vadd.f32 0.0, %v349
    %v351 = vpop.f32.mrb[0].mxu0
    %352 = vmatprep.mubr.f32.mxu0 0.0
    %353 = vmatmul.mubr.f32.gmra.mrb[0].mxu0 %v273
    %v354 = vpop.f32.mrb[0].mxu0
    %v355 = vadd.f32 0.0, %v354
    %v356 = vpop.f32.mrb[0].mxu0
    %357 = vmatprep.mubr.f32.mxu0 0.0
    %358 = vmatmul.mubr.f32.gmra.mrb[0].mxu0 %v276
    %v359 = vpop.f32.mrb[0].mxu0
    %v360 = vadd.f32 0.0, %v359
    %v361 = vpop.f32.mrb[0].mxu0
    %362 = vdwg.mxu0
    %v364 = vsel %vm265, %v154, 0
    %v367 = vsel %vm265, %v155, 0
    %v370 = vsel %vm265, %v156, 0
    %v373 = vsel %vm265, %v157, 0
    %375 = vmatprep.subr.mxu0 0.0
    %376 = vmatpush1.msra.mxu0 %v212
    %377 = vmatprep.subr.mxu0 0.0
    %378 = vmatpush1.msra.mxu0 %v213
    %379 = vmatprep.subr.mxu0 0.0
    %380 = vmatpush1.msra.mxu0 %v214
    %381 = vmatprep.subr.mxu0 0.0
    %382 = vmatpush1.msra.mxu0 %v215
    %383 = vmatprep.subr.mxu0 0.0
    %384 = vmatpush1.msra.mxu0 %v216
    %385 = vmatprep.subr.mxu0 0.0
    %386 = vmatpush1.msra.mxu0 %v217
    %387 = vmatprep.subr.mxu0 0.0
    %388 = vmatpush1.msra.mxu0 %v218
    %389 = vmatprep.subr.mxu0 0.0
    %390 = vmatpush1.msra.mxu0 %v219
    %391 = vmatprep.subr.mxu0 0.0
    %392 = vmatpush1.msra.mxu0 0.0
    %393 = vmatprep.subr.mxu0 0.0
    %394 = vmatpush1.msra.mxu0 0.0
    %395 = vmatprep.subr.mxu0 0.0
    %396 = vmatpush1.msra.mxu0 0.0
    %397 = vmatprep.subr.mxu0 0.0
    %398 = vmatpush1.msra.mxu0 0.0
    %399 = vmatprep.subr.mxu0 0.0
    %400 = vmatpush1.msra.mxu0 0.0
    %401 = vmatprep.subr.mxu0 0.0
    %402 = vmatpush1.msra.mxu0 0.0
    %403 = vmatprep.subr.mxu0 0.0
    %404 = vmatpush1.msra.mxu0 0.0
    %405 = vmatprep.subr.mxu0 0.0
    %406 = vmatpush1.msra.mxu0 0.0
    %407 = vmatprep.subr.mxu0 0.0
    %408 = vmatpush1.msra.mxu0 0.0
    %409 = vmatprep.subr.mxu0 0.0
    %410 = vmatpush1.msra.mxu0 0.0
    %411 = vmatprep.subr.mxu0 0.0
    %412 = vmatpush1.msra.mxu0 0.0
    %413 = vmatprep.subr.mxu0 0.0
    %414 = vmatpush1.msra.mxu0 0.0
    %415 = vmatprep.subr.mxu0 0.0
    %416 = vmatpush1.msra.mxu0 0.0
    %417 = vmatprep.subr.mxu0 0.0
    %418 = vmatpush1.msra.mxu0 0.0
    %419 = vmatprep.subr.mxu0 0.0
    %420 = vmatpush1.msra.mxu0 0.0
    %421 = vmatprep.subr.mxu0 0.0
    %422 = vmatpush1.msra.mxu0 0.0
    %423 = vmatprep.subr.mxu0 0.0
    %424 = vmatpush1.msra.mxu0 0.0
    %425 = vmatprep.subr.mxu0 0.0
    %426 = vmatpush1.msra.mxu0 0.0
    %427 = vmatprep.subr.mxu0 0.0
    %428 = vmatpush1.msra.mxu0 0.0
    %429 = vmatprep.subr.mxu0 0.0
    %430 = vmatpush1.msra.mxu0 0.0
    %431 = vmatprep.subr.mxu0 0.0
    %432 = vmatpush1.msra.mxu0 0.0
    %433 = vmatprep.subr.mxu0 0.0
    %434 = vmatpush1.msra.mxu0 0.0
    %435 = vmatprep.subr.mxu0 0.0
    %436 = vmatpush1.msra.mxu0 0.0
    %437 = vmatprep.subr.mxu0 0.0
    %438 = vmatpush1.msra.mxu0 0.0
    %439 = vmatprep.mubr.f32.mxu0 0.0
    %440 = vmatmul.mubr.f32.gmra.mrb[0].mxu0 %v364
    %v441 = vpop.f32.mrb[0].mxu0
    %v442 = vadd.f32 %v345, %v441
    %v443 = vpop.f32.mrb[0].mxu0
    %444 = vmatprep.mubr.f32.mxu0 0.0
    %445 = vmatmul.mubr.f32.gmra.mrb[0].mxu0 %v367
    %v446 = vpop.f32.mrb[0].mxu0
    %v447 = vadd.f32 %v350, %v446
    %v448 = vpop.f32.mrb[0].mxu0
    %449 = vmatprep.mubr.f32.mxu0 0.0
    %450 = vmatmul.mubr.f32.gmra.mrb[0].mxu0 %v370
    %v451 = vpop.f32.mrb[0].mxu0
    %v452 = vadd.f32 %v355, %v451
    %v453 = vpop.f32.mrb[0].mxu0
    %454 = vmatprep.mubr.f32.mxu0 0.0
    %455 = vmatmul.mubr.f32.gmra.mrb[0].mxu0 %v373
    %v456 = vpop.f32.mrb[0].mxu0
    %v457 = vadd.f32 %v360, %v456
    %v458 = vpop.f32.mrb[0].mxu0
    %459 = vdwg.mxu0
    %v460 = vrot.slane %v154, 1
    %v461 = vrot.slane %v155, 1
    %v462 = vrot.slane %v156, 1
    %v463 = vrot.slane %v157, 1
    %vm464 = vcmp.lt.s32.totalorder %v159, 7
    %v465 = vsel %vm464, %v462, %v463
    %v466 = vsel %vm464, %v461, %v462
    %v467 = vsel %vm464, %v460, %v461
    %v468 = vsel %vm464, %v463, %v460
    %v469 = vadd.s32 %v207, 1
    %v470 = vadd.s32 %v208, 1
    %v471 = vadd.s32 %v209, 1
    %v472 = vadd.s32 %v210, 1
    %vm473 = vcmp.ge.s32.totalorder %v469, 0
    %vm474 = vcmp.ge.s32.totalorder %v470, 0
    %vm475 = vcmp.ge.s32.totalorder %v471, 0
    %vm476 = vcmp.ge.s32.totalorder %v472, 0
    %vm477 = vcmp.lt.s32.totalorder %v469, 16
    %vm478 = vcmp.lt.s32.totalorder %v470, 16
    %vm479 = vcmp.lt.s32.totalorder %v471, 16
    %vm480 = vcmp.lt.s32.totalorder %v472, 16
    %vm481 = vmand %vm473, %vm477
    %vm482 = vmand %vm474, %vm478
    %vm483 = vmand %vm475, %vm479
    %vm484 = vmand %vm476, %vm480
    %v485 = vsel %vm481, 1, 0
    %v486 = vsel %vm482, 1, 0
    %v487 = vsel %vm483, 1, 0
    %v488 = vsel %vm484, 1, 0
    %vm489 = vcmp.eq.s32.totalorder %v485, 1
    %vm490 = vcmp.eq.s32.totalorder %v486, 1
    %vm491 = vcmp.eq.s32.totalorder %v487, 1
    %vm492 = vcmp.eq.s32.totalorder %v488, 1
    %v493 = vsel %vm489, %v467, 0.0
    %v494 = vsel %vm490, %v466, 0.0
    %v495 = vsel %vm491, %v465, 0.0
    %v496 = vsel %vm492, %v468, 0.0
    %s497 = scalar_lea.vmem %s3, 128
    %v498 = vld [vmem:[%s497] sm:$0xff]
    %v499 = vld [vmem:[%s497 + $0x8] sm:$0xff]
    %v500 = vld [vmem:[%s497 + $0x10] sm:$0xff]
    %v501 = vld [vmem:[%s497 + $0x18] sm:$0xff]
    %v502 = vld [vmem:[%s497 + $0x20] sm:$0xff]
    %v503 = vld [vmem:[%s497 + $0x28] sm:$0xff]
    %v504 = vld [vmem:[%s497 + $0x30] sm:$0xff]
    %v505 = vld [vmem:[%s497 + $0x38] sm:$0xff]
    %v507 = vsel %vm265, %v493, 0
    %v510 = vsel %vm265, %v494, 0
    %v513 = vsel %vm265, %v495, 0
    %v516 = vsel %vm265, %v496, 0
    %518 = vmatprep.subr.mxu0 0.0
    %519 = vmatpush1.msra.mxu0 %v498
    %520 = vmatprep.subr.mxu0 0.0
    %521 = vmatpush1.msra.mxu0 %v499
    %522 = vmatprep.subr.mxu0 0.0
    %523 = vmatpush1.msra.mxu0 %v500
    %524 = vmatprep.subr.mxu0 0.0
    %525 = vmatpush1.msra.mxu0 %v501
    %526 = vmatprep.subr.mxu0 0.0
    %527 = vmatpush1.msra.mxu0 %v502
    %528 = vmatprep.subr.mxu0 0.0
    %529 = vmatpush1.msra.mxu0 %v503
    %530 = vmatprep.subr.mxu0 0.0
    %531 = vmatpush1.msra.mxu0 %v504
    %532 = vmatprep.subr.mxu0 0.0
    %533 = vmatpush1.msra.mxu0 %v505
    %534 = vmatprep.subr.mxu0 0.0
    %535 = vmatpush1.msra.mxu0 0.0
    %536 = vmatprep.subr.mxu0 0.0
    %537 = vmatpush1.msra.mxu0 0.0
    %538 = vmatprep.subr.mxu0 0.0
    %539 = vmatpush1.msra.mxu0 0.0
    %540 = vmatprep.subr.mxu0 0.0
    %541 = vmatpush1.msra.mxu0 0.0
    %542 = vmatprep.subr.mxu0 0.0
    %543 = vmatpush1.msra.mxu0 0.0
    %544 = vmatprep.subr.mxu0 0.0
    %545 = vmatpush1.msra.mxu0 0.0
    %546 = vmatprep.subr.mxu0 0.0
    %547 = vmatpush1.msra.mxu0 0.0
    %548 = vmatprep.subr.mxu0 0.0
    %549 = vmatpush1.msra.mxu0 0.0
    %550 = vmatprep.subr.mxu0 0.0
    %551 = vmatpush1.msra.mxu0 0.0
    %552 = vmatprep.subr.mxu0 0.0
    %553 = vmatpush1.msra.mxu0 0.0
    %554 = vmatprep.subr.mxu0 0.0
    %555 = vmatpush1.msra.mxu0 0.0
    %556 = vmatprep.subr.mxu0 0.0
    %557 = vmatpush1.msra.mxu0 0.0
    %558 = vmatprep.subr.mxu0 0.0
    %559 = vmatpush1.msra.mxu0 0.0
    %560 = vmatprep.subr.mxu0 0.0
    %561 = vmatpush1.msra.mxu0 0.0
    %562 = vmatprep.subr.mxu0 0.0
    %563 = vmatpush1.msra.mxu0 0.0
    %564 = vmatprep.subr.mxu0 0.0
    %565 = vmatpush1.msra.mxu0 0.0
    %566 = vmatprep.subr.mxu0 0.0
    %567 = vmatpush1.msra.mxu0 0.0
    %568 = vmatprep.subr.mxu0 0.0
    %569 = vmatpush1.msra.mxu0 0.0
    %570 = vmatprep.subr.mxu0 0.0
    %571 = vmatpush1.msra.mxu0 0.0
    %572 = vmatprep.subr.mxu0 0.0
    %573 = vmatpush1.msra.mxu0 0.0
    %574 = vmatprep.subr.mxu0 0.0
    %575 = vmatpush1.msra.mxu0 0.0
    %576 = vmatprep.subr.mxu0 0.0
    %577 = vmatpush1.msra.mxu0 0.0
    %578 = vmatprep.subr.mxu0 0.0
    %579 = vmatpush1.msra.mxu0 0.0
    %580 = vmatprep.subr.mxu0 0.0
    %581 = vmatpush1.msra.mxu0 0.0
    %582 = vmatprep.mubr.f32.mxu0 0.0
    %583 = vmatmul.mubr.f32.gmra.mrb[0].mxu0 %v507
    %v584 = vpop.f32.mrb[0].mxu0
    %v585 = vadd.f32 0.0, %v584
    %v586 = vpop.f32.mrb[0].mxu0
    %587 = vmatprep.mubr.f32.mxu0 0.0
    %588 = vmatmul.mubr.f32.gmra.mrb[0].mxu0 %v510
    %v589 = vpop.f32.mrb[0].mxu0
    %v590 = vadd.f32 0.0, %v589
    %v591 = vpop.f32.mrb[0].mxu0
    %592 = vmatprep.mubr.f32.mxu0 0.0
    %593 = vmatmul.mubr.f32.gmra.mrb[0].mxu0 %v513
    %v594 = vpop.f32.mrb[0].mxu0
    %v595 = vadd.f32 0.0, %v594
    %v596 = vpop.f32.mrb[0].mxu0
    %597 = vmatprep.mubr.f32.mxu0 0.0
    %598 = vmatmul.mubr.f32.gmra.mrb[0].mxu0 %v516
    %v599 = vpop.f32.mrb[0].mxu0
    %v600 = vadd.f32 0.0, %v599
    %v601 = vpop.f32.mrb[0].mxu0
    %602 = vdwg.mxu0
    %v603 = vadd.f32 %v442, %v585
    %v604 = vadd.f32 %v447, %v590
    %v605 = vadd.f32 %v452, %v595
    %v606 = vadd.f32 %v457, %v600
    %v607 = vld [vmem:[%s4] sm:$0x1]
    %v609 = vlaneseq
    %v610 = vshrl.u32 %v609, 7
    %v611 = vsub.s32 0, %v610
    %v612 = vrot.slane %v607, %v611
    %v614 = vadd.f32 %v603, %v612
    %v615 = vadd.f32 %v604, %v612
    %v616 = vadd.f32 %v605, %v612
    %v617 = vadd.f32 %v606, %v612
    %v618 = vld [vmem:[%s5] sm:$0xff]
    %v619 = vld [vmem:[%s5 + $0x8] sm:$0xff]
    %v620 = vld [vmem:[%s5 + $0x10] sm:$0xff]
    %v621 = vld [vmem:[%s5 + $0x18] sm:$0xff]
    %v622 = vld [vmem:[%s6] sm:$0x1]
    %v624 = vlaneseq
    %v625 = vshrl.u32 %v624, 7
    %v626 = vsub.s32 0, %v625
    %v627 = vrot.slane %v622, %v626
    %vm629 = vcmask 261120
    %v631 = vsel %vm629, %v614, 0
    %v634 = vsel %vm629, %v615, 0
    %v637 = vsel %vm629, %v616, 0
    %v640 = vsel %vm629, %v617, 0
    %642 = vmatprep.subr.mxu0 0.0
    %643 = vmatpush1.msra.mxu0 %v618
    %644 = vmatprep.subr.mxu0 0.0
    %645 = vmatpush1.msra.mxu0 %v619
    %646 = vmatprep.subr.mxu0 0.0
    %647 = vmatpush1.msra.mxu0 %v620
    %648 = vmatprep.subr.mxu0 0.0
    %649 = vmatpush1.msra.mxu0 %v621
    %650 = vmatprep.subr.mxu0 0.0
    %651 = vmatpush1.msra.mxu0 0.0
    %652 = vmatprep.subr.mxu0 0.0
    %653 = vmatpush1.msra.mxu0 0.0
    %654 = vmatprep.subr.mxu0 0.0
    %655 = vmatpush1.msra.mxu0 0.0
    %656 = vmatprep.subr.mxu0 0.0
    %657 = vmatpush1.msra.mxu0 0.0
    %658 = vmatprep.subr.mxu0 0.0
    %659 = vmatpush1.msra.mxu0 0.0
    %660 = vmatprep.subr.mxu0 0.0
    %661 = vmatpush1.msra.mxu0 0.0
    %662 = vmatprep.subr.mxu0 0.0
    %663 = vmatpush1.msra.mxu0 0.0
    %664 = vmatprep.subr.mxu0 0.0
    %665 = vmatpush1.msra.mxu0 0.0
    %666 = vmatprep.subr.mxu0 0.0
    %667 = vmatpush1.msra.mxu0 0.0
    %668 = vmatprep.subr.mxu0 0.0
    %669 = vmatpush1.msra.mxu0 0.0
    %670 = vmatprep.subr.mxu0 0.0
    %671 = vmatpush1.msra.mxu0 0.0
    %672 = vmatprep.subr.mxu0 0.0
    %673 = vmatpush1.msra.mxu0 0.0
    %674 = vmatprep.subr.mxu0 0.0
    %675 = vmatpush1.msra.mxu0 0.0
    %676 = vmatprep.subr.mxu0 0.0
    %677 = vmatpush1.msra.mxu0 0.0
    %678 = vmatprep.subr.mxu0 0.0
    %679 = vmatpush1.msra.mxu0 0.0
    %680 = vmatprep.subr.mxu0 0.0
    %681 = vmatpush1.msra.mxu0 0.0
    %682 = vmatprep.subr.mxu0 0.0
    %683 = vmatpush1.msra.mxu0 0.0
    %684 = vmatprep.subr.mxu0 0.0
    %685 = vmatpush1.msra.mxu0 0.0
    %686 = vmatprep.subr.mxu0 0.0
    %687 = vmatpush1.msra.mxu0 0.0
    %688 = vmatprep.subr.mxu0 0.0
    %689 = vmatpush1.msra.mxu0 0.0
    %690 = vmatprep.subr.mxu0 0.0
    %691 = vmatpush1.msra.mxu0 0.0
    %692 = vmatprep.subr.mxu0 0.0
    %693 = vmatpush1.msra.mxu0 0.0
    %694 = vmatprep.subr.mxu0 0.0
    %695 = vmatpush1.msra.mxu0 0.0
    %696 = vmatprep.subr.mxu0 0.0
    %697 = vmatpush1.msra.mxu0 0.0
    %698 = vmatprep.subr.mxu0 0.0
    %699 = vmatpush1.msra.mxu0 0.0
    %700 = vmatprep.subr.mxu0 0.0
    %701 = vmatpush1.msra.mxu0 0.0
    %702 = vmatprep.subr.mxu0 0.0
    %703 = vmatpush1.msra.mxu0 0.0
    %704 = vmatprep.subr.mxu0 0.0
    %705 = vmatpush1.msra.mxu0 0.0
    %706 = vmatprep.mubr.f32.mxu0 0.0
    %707 = vmatmul.mubr.f32.gmra.mrb[0].mxu0 %v631
    %v708 = vpop.f32.mrb[0].mxu0
    %v709 = vadd.f32 %v627, %v708
    %v710 = vpop.f32.mrb[0].mxu0
    %711 = vmatprep.mubr.f32.mxu0 0.0
    %712 = vmatmul.mubr.f32.gmra.mrb[0].mxu0 %v634
    %v713 = vpop.f32.mrb[0].mxu0
    %v714 = vadd.f32 %v627, %v713
    %v715 = vpop.f32.mrb[0].mxu0
    %716 = vmatprep.mubr.f32.mxu0 0.0
    %717 = vmatmul.mubr.f32.gmra.mrb[0].mxu0 %v637
    %v718 = vpop.f32.mrb[0].mxu0
    %v719 = vadd.f32 %v627, %v718
    %v720 = vpop.f32.mrb[0].mxu0
    %721 = vmatprep.mubr.f32.mxu0 0.0
    %722 = vmatmul.mubr.f32.gmra.mrb[0].mxu0 %v640
    %v723 = vpop.f32.mrb[0].mxu0
    %v724 = vadd.f32 %v627, %v723
    %v725 = vpop.f32.mrb[0].mxu0
    %726 = vdwg.mxu0
    %729 = vrot.lane.b32.xlu0 %v709, 96
    %v730 = vpop.permute.xlu0 %729
    %731 = vrot.lane.b32.xlu0 %v714, 96
    %v732 = vpop.permute.xlu0 %731
    %vm733 = vcmask 64512
    %v734 = vsel %vm733, %v709, 0
    %v736 = vsel %vm733, %v714, 0
    %v738 = vsel %vm733, %v730, 0
    %v740 = vsel %vm733, %v732, 0
    %742 = vmatprep.subr.mxu0 0.0
    %743 = vmatpush1.xpose.msra.mxu0 %v738
    %744 = vmatprep.subr.mxu0 0.0
    %745 = vmatpush1.xpose.msra.mxu0 %v740
    %746 = vmatprep.subr.mxu0 0.0
    %747 = vmatpush1.xpose.msra.mxu0 0.0
    %748 = vmatprep.subr.mxu0 0.0
    %749 = vmatpush1.xpose.msra.mxu0 0.0
    %750 = vmatprep.subr.mxu0 0.0
    %751 = vmatpush1.xpose.msra.mxu0 0.0
    %752 = vmatprep.subr.mxu0 0.0
    %753 = vmatpush1.xpose.msra.mxu0 0.0
    %754 = vmatprep.subr.mxu0 0.0
    %755 = vmatpush1.xpose.msra.mxu0 0.0
    %756 = vmatprep.subr.mxu0 0.0
    %757 = vmatpush1.xpose.msra.mxu0 0.0
    %758 = vmatprep.subr.mxu0 0.0
    %759 = vmatpush1.xpose.msra.mxu0 0.0
    %760 = vmatprep.subr.mxu0 0.0
    %761 = vmatpush1.xpose.msra.mxu0 0.0
    %762 = vmatprep.subr.mxu0 0.0
    %763 = vmatpush1.xpose.msra.mxu0 0.0
    %764 = vmatprep.subr.mxu0 0.0
    %765 = vmatpush1.xpose.msra.mxu0 0.0
    %766 = vmatprep.subr.mxu0 0.0
    %767 = vmatpush1.xpose.msra.mxu0 0.0
    %768 = vmatprep.subr.mxu0 0.0
    %769 = vmatpush1.xpose.msra.mxu0 0.0
    %770 = vmatprep.subr.mxu0 0.0
    %771 = vmatpush1.xpose.msra.mxu0 0.0
    %772 = vmatprep.subr.mxu0 0.0
    %773 = vmatpush1.xpose.msra.mxu0 0.0
    %774 = vmatprep.subr.mxu0 0.0
    %775 = vmatpush1.xpose.msra.mxu0 0.0
    %776 = vmatprep.subr.mxu0 0.0
    %777 = vmatpush1.xpose.msra.mxu0 0.0
    %778 = vmatprep.subr.mxu0 0.0
    %779 = vmatpush1.xpose.msra.mxu0 0.0
    %780 = vmatprep.subr.mxu0 0.0
    %781 = vmatpush1.xpose.msra.mxu0 0.0
    %782 = vmatprep.subr.mxu0 0.0
    %783 = vmatpush1.xpose.msra.mxu0 0.0
    %784 = vmatprep.subr.mxu0 0.0
    %785 = vmatpush1.xpose.msra.mxu0 0.0
    %786 = vmatprep.subr.mxu0 0.0
    %787 = vmatpush1.xpose.msra.mxu0 0.0
    %788 = vmatprep.subr.mxu0 0.0
    %789 = vmatpush1.xpose.msra.mxu0 0.0
    %790 = vmatprep.subr.mxu0 0.0
    %791 = vmatpush1.xpose.msra.mxu0 0.0
    %792 = vmatprep.subr.mxu0 0.0
    %793 = vmatpush1.xpose.msra.mxu0 0.0
    %794 = vmatprep.subr.mxu0 0.0
    %795 = vmatpush1.xpose.msra.mxu0 0.0
    %796 = vmatprep.subr.mxu0 0.0
    %797 = vmatpush1.xpose.msra.mxu0 0.0
    %798 = vmatprep.subr.mxu0 0.0
    %799 = vmatpush1.xpose.msra.mxu0 0.0
    %800 = vmatprep.subr.mxu0 0.0
    %801 = vmatpush1.xpose.msra.mxu0 0.0
    %802 = vmatprep.subr.mxu0 0.0
    %803 = vmatpush1.xpose.msra.mxu0 0.0
    %804 = vmatprep.subr.mxu0 0.0
    %805 = vmatpush1.xpose.msra.mxu0 0.0
    %806 = vmatprep.mubr.f32.mxu0 0.0
    %807 = vmatmul.mubr.f32.gmra.mrb[0].mxu0 %v734
    %v808 = vpop.f32.mrb[0].mxu0
    %v809 = vadd.f32 0.0, %v808
    %v810 = vpop.f32.mrb[0].mxu0
    %811 = vmatprep.mubr.f32.mxu0 0.0
    %812 = vmatmul.mubr.f32.gmra.mrb[0].mxu0 %v736
    %v813 = vpop.f32.mrb[0].mxu0
    %v814 = vadd.f32 0.0, %v813
    %v815 = vpop.f32.mrb[0].mxu0
    %816 = vdwg.mxu0
    %v817 = vmul.f32 %v809, 0.35355338
    %v818 = vmul.f32 %v814, 0.35355338
    %vm819 = vcmask 130048
    %v820 = vsel %vm819, %v817, -inf
    %821 = vmax.xlane.f32.xlu0 %v820
    %v822 = vpop.xlane.xlu0 %821
    %v823 = vsel %vm819, %v818, -inf
    %824 = vmax.xlane.f32.xlu0 %v823
    %v825 = vpop.xlane.xlu0 %824
    %v826 = vsub.f32 %v817, %v822
    %v827 = vsub.f32 %v818, %v825
    %v828 = vmul.f32 %v826, 1.442695
    %v829 = vpow.pop %v828
    %v830 = vmul.f32 %v827, 1.442695
    %v831 = vpow.pop %v830
    %v832 = vsel %vm819, %v829, 0.0
    %833 = vadd.xlane.f32.xlu0 %v832
    %v834 = vpop.xlane.xlu0 %833
    %v835 = vsel %vm819, %v831, 0.0
    %836 = vadd.xlane.f32.xlu0 %v835
    %v837 = vpop.xlane.xlu0 %836
    %v838 = vrcp.pop %v834
    %v839 = vrcp.pop %v837
    %v840 = vmul.f32 %v829, %v838
    %v841 = vmul.f32 %v831, %v839
    %842 = vrot.lane.b32.xlu0 %v709, 64
    %v843 = vpop.permute.xlu0 %842
    %844 = vrot.lane.b32.xlu0 %v714, 64
    %v845 = vpop.permute.xlu0 %844
    %v849 = vsel %vm819, %v840, 0
    %v852 = vsel %vm819, %v841, 0
    %854 = vmatprep.subr.mxu0 0.0
    %855 = vmatpush1.msra.mxu0 %v843
    %856 = vmatprep.subr.mxu0 0.0
    %857 = vmatpush1.msra.mxu0 %v845
    %858 = vmatprep.subr.mxu0 0.0
    %859 = vmatpush1.msra.mxu0 0.0
    %860 = vmatprep.subr.mxu0 0.0
    %861 = vmatpush1.msra.mxu0 0.0
    %862 = vmatprep.subr.mxu0 0.0
    %863 = vmatpush1.msra.mxu0 0.0
    %864 = vmatprep.subr.mxu0 0.0
    %865 = vmatpush1.msra.mxu0 0.0
    %866 = vmatprep.subr.mxu0 0.0
    %867 = vmatpush1.msra.mxu0 0.0
    %868 = vmatprep.subr.mxu0 0.0
    %869 = vmatpush1.msra.mxu0 0.0
    %870 = vmatprep.subr.mxu0 0.0
    %871 = vmatpush1.msra.mxu0 0.0
    %872 = vmatprep.subr.mxu0 0.0
    %873 = vmatpush1.msra.mxu0 0.0
    %874 = vmatprep.subr.mxu0 0.0
    %875 = vmatpush1.msra.mxu0 0.0
    %876 = vmatprep.subr.mxu0 0.0
    %877 = vmatpush1.msra.mxu0 0.0
    %878 = vmatprep.subr.mxu0 0.0
    %879 = vmatpush1.msra.mxu0 0.0
    %880 = vmatprep.subr.mxu0 0.0
    %881 = vmatpush1.msra.mxu0 0.0
    %882 = vmatprep.subr.mxu0 0.0
    %883 = vmatpush1.msra.mxu0 0.0
    %884 = vmatprep.subr.mxu0 0.0
    %885 = vmatpush1.msra.mxu0 0.0
    %886 = vmatprep.subr.mxu0 0.0
    %887 = vmatpush1.msra.mxu0 0.0
    %888 = vmatprep.subr.mxu0 0.0
    %889 = vmatpush1.msra.mxu0 0.0
    %890 = vmatprep.subr.mxu0 0.0
    %891 = vmatpush1.msra.mxu0 0.0
    %892 = vmatprep.subr.mxu0 0.0
    %893 = vmatpush1.msra.mxu0 0.0
    %894 = vmatprep.subr.mxu0 0.0
    %895 = vmatpush1.msra.mxu0 0.0
    %896 = vmatprep.subr.mxu0 0.0
    %897 = vmatpush1.msra.mxu0 0.0
    %898 = vmatprep.subr.mxu0 0.0
    %899 = vmatpush1.msra.mxu0 0.0
    %900 = vmatprep.subr.mxu0 0.0
    %901 = vmatpush1.msra.mxu0 0.0
    %902 = vmatprep.subr.mxu0 0.0
    %903 = vmatpush1.msra.mxu0 0.0
    %904 = vmatprep.subr.mxu0 0.0
    %905 = vmatpush1.msra.mxu0 0.0
    %906 = vmatprep.subr.mxu0 0.0
    %907 = vmatpush1.msra.mxu0 0.0
    %908 = vmatprep.subr.mxu0 0.0
    %909 = vmatpush1.msra.mxu0 0.0
    %910 = vmatprep.subr.mxu0 0.0
    %911 = vmatpush1.msra.mxu0 0.0
    %912 = vmatprep.subr.mxu0 0.0
    %913 = vmatpush1.msra.mxu0 0.0
    %914 = vmatprep.subr.mxu0 0.0
    %915 = vmatpush1.msra.mxu0 0.0
    %916 = vmatprep.subr.mxu0 0.0
    %917 = vmatpush1.msra.mxu0 0.0
    %918 = vmatprep.mubr.f32.mxu0 0.0
    %919 = vmatmul.mubr.f32.gmra.mrb[0].mxu0 %v849
    %v920 = vpop.f32.mrb[0].mxu0
    %v921 = vadd.f32 0.0, %v920
    %v922 = vpop.f32.mrb[0].mxu0
    %923 = vmatprep.mubr.f32.mxu0 0.0
    %924 = vmatmul.mubr.f32.gmra.mrb[0].mxu0 %v852
    %v925 = vpop.f32.mrb[0].mxu0
    %v926 = vadd.f32 0.0, %v925
    %v927 = vpop.f32.mrb[0].mxu0
    %928 = vdwg.mxu0
    %v929 = vld [vmem:[%s7] sm:$0xff]
    %930 = vrot.lane.b32.xlu0 %v709, 120
    %v931 = vpop.permute.xlu0 %930
    %932 = vrot.lane.b32.xlu0 %v714, 120
    %v933 = vpop.permute.xlu0 %932
    %934 = vrot.lane.b32.xlu0 %v709, 88
    %v935 = vpop.permute.xlu0 %934
    %936 = vrot.lane.b32.xlu0 %v714, 88
    %v937 = vpop.permute.xlu0 %936
    %v938 = vsel %vm733, %v931, 0
    %v940 = vsel %vm733, %v933, 0
    %v942 = vsel %vm733, %v935, 0
    %v944 = vsel %vm733, %v937, 0
    %946 = vmatprep.subr.mxu0 0.0
    %947 = vmatpush1.xpose.msra.mxu0 %v942
    %948 = vmatprep.subr.mxu0 0.0
    %949 = vmatpush1.xpose.msra.mxu0 %v944
    %950 = vmatprep.subr.mxu0 0.0
    %951 = vmatpush1.xpose.msra.mxu0 0.0
    %952 = vmatprep.subr.mxu0 0.0
    %953 = vmatpush1.xpose.msra.mxu0 0.0
    %954 = vmatprep.subr.mxu0 0.0
    %955 = vmatpush1.xpose.msra.mxu0 0.0
    %956 = vmatprep.subr.mxu0 0.0
    %957 = vmatpush1.xpose.msra.mxu0 0.0
    %958 = vmatprep.subr.mxu0 0.0
    %959 = vmatpush1.xpose.msra.mxu0 0.0
    %960 = vmatprep.subr.mxu0 0.0
    %961 = vmatpush1.xpose.msra.mxu0 0.0
    %962 = vmatprep.subr.mxu0 0.0
    %963 = vmatpush1.xpose.msra.mxu0 0.0
    %964 = vmatprep.subr.mxu0 0.0
    %965 = vmatpush1.xpose.msra.mxu0 0.0
    %966 = vmatprep.subr.mxu0 0.0
    %967 = vmatpush1.xpose.msra.mxu0 0.0
    %968 = vmatprep.subr.mxu0 0.0
    %969 = vmatpush1.xpose.msra.mxu0 0.0
    %970 = vmatprep.subr.mxu0 0.0
    %971 = vmatpush1.xpose.msra.mxu0 0.0
    %972 = vmatprep.subr.mxu0 0.0
    %973 = vmatpush1.xpose.msra.mxu0 0.0
    %974 = vmatprep.subr.mxu0 0.0
    %975 = vmatpush1.xpose.msra.mxu0 0.0
    %976 = vmatprep.subr.mxu0 0.0
    %977 = vmatpush1.xpose.msra.mxu0 0.0
    %978 = vmatprep.subr.mxu0 0.0
    %979 = vmatpush1.xpose.msra.mxu0 0.0
    %980 = vmatprep.subr.mxu0 0.0
    %981 = vmatpush1.xpose.msra.mxu0 0.0
    %982 = vmatprep.subr.mxu0 0.0
    %983 = vmatpush1.xpose.msra.mxu0 0.0
    %984 = vmatprep.subr.mxu0 0.0
    %985 = vmatpush1.xpose.msra.mxu0 0.0
    %986 = vmatprep.subr.mxu0 0.0
    %987 = vmatpush1.xpose.msra.mxu0 0.0
    %988 = vmatprep.subr.mxu0 0.0
    %989 = vmatpush1.xpose.msra.mxu0 0.0
    %990 = vmatprep.subr.mxu0 0.0
    %991 = vmatpush1.xpose.msra.mxu0 0.0
    %992 = vmatprep.subr.mxu0 0.0
    %993 = vmatpush1.xpose.msra.mxu0 0.0
    %994 = vmatprep.subr.mxu0 0.0
    %995 = vmatpush1.xpose.msra.mxu0 0.0
    %996 = vmatprep.subr.mxu0 0.0
    %997 = vmatpush1.xpose.msra.mxu0 0.0
    %998 = vmatprep.subr.mxu0 0.0
    %999 = vmatpush1.xpose.msra.mxu0 0.0
    %1000 = vmatprep.subr.mxu0 0.0
    %1001 = vmatpush1.xpose.msra.mxu0 0.0
    %1002 = vmatprep.subr.mxu0 0.0
    %1003 = vmatpush1.xpose.msra.mxu0 0.0
    %1004 = vmatprep.subr.mxu0 0.0
    %1005 = vmatpush1.xpose.msra.mxu0 0.0
    %1006 = vmatprep.subr.mxu0 0.0
    %1007 = vmatpush1.xpose.msra.mxu0 0.0
    %1008 = vmatprep.subr.mxu0 0.0
    %1009 = vmatpush1.xpose.msra.mxu0 0.0
    %1010 = vmatprep.mubr.f32.mxu0 0.0
    %1011 = vmatmul.mubr.f32.gmra.mrb[0].mxu0 %v938
    %v1012 = vpop.f32.mrb[0].mxu0
    %v1013 = vadd.f32 0.0, %v1012
    %v1014 = vpop.f32.mrb[0].mxu0
    %1015 = vmatprep.mubr.f32.mxu0 0.0
    %1016 = vmatmul.mubr.f32.gmra.mrb[0].mxu0 %v940
    %v1017 = vpop.f32.mrb[0].mxu0
    %v1018 = vadd.f32 0.0, %v1017
    %v1019 = vpop.f32.mrb[0].mxu0
    %1020 = vdwg.mxu0
    %v1021 = vmul.f32 %v1013, 0.35355338
    %v1022 = vmul.f32 %v1018, 0.35355338
    %v1023 = vsel %vm819, %v1021, -inf
    %1024 = vmax.xlane.f32.xlu0 %v1023
    %v1025 = vpop.xlane.xlu0 %1024
    %v1026 = vsel %vm819, %v1022, -inf
    %1027 = vmax.xlane.f32.xlu0 %v1026
    %v1028 = vpop.xlane.xlu0 %1027
    %v1029 = vsub.f32 %v1021, %v1025
    %v1030 = vsub.f32 %v1022, %v1028
    %v1031 = vmul.f32 %v1029, 1.442695
    %v1032 = vpow.pop %v1031
    %v1033 = vmul.f32 %v1030, 1.442695
    %v1034 = vpow.pop %v1033
    %v1035 = vsel %vm819, %v1032, 0.0
    %1036 = vadd.xlane.f32.xlu0 %v1035
    %v1037 = vpop.xlane.xlu0 %1036
    %v1038 = vsel %vm819, %v1034, 0.0
    %1039 = vadd.xlane.f32.xlu0 %v1038
    %v1040 = vpop.xlane.xlu0 %1039
    %v1041 = vrcp.pop %v1037
    %v1042 = vrcp.pop %v1040
    %v1043 = vmul.f32 %v1032, %v1041
    %v1044 = vmul.f32 %v1034, %v1042
    %1045 = vrot.lane.b32.xlu0 %v709, 56
    %v1046 = vpop.permute.xlu0 %1045
    %1047 = vrot.lane.b32.xlu0 %v714, 56
    %v1048 = vpop.permute.xlu0 %1047
    %v1052 = vsel %vm819, %v1043, 0
    %v1055 = vsel %vm819, %v1044, 0
    %1057 = vmatprep.subr.mxu0 0.0
    %1058 = vmatpush1.msra.mxu0 %v1046
    %1059 = vmatprep.subr.mxu0 0.0
    %1060 = vmatpush1.msra.mxu0 %v1048
    %1061 = vmatprep.subr.mxu0 0.0
    %1062 = vmatpush1.msra.mxu0 0.0
    %1063 = vmatprep.subr.mxu0 0.0
    %1064 = vmatpush1.msra.mxu0 0.0
    %1065 = vmatprep.subr.mxu0 0.0
    %1066 = vmatpush1.msra.mxu0 0.0
    %1067 = vmatprep.subr.mxu0 0.0
    %1068 = vmatpush1.msra.mxu0 0.0
    %1069 = vmatprep.subr.mxu0 0.0
    %1070 = vmatpush1.msra.mxu0 0.0
    %1071 = vmatprep.subr.mxu0 0.0
    %1072 = vmatpush1.msra.mxu0 0.0
    %1073 = vmatprep.subr.mxu0 0.0
    %1074 = vmatpush1.msra.mxu0 0.0
    %1075 = vmatprep.subr.mxu0 0.0
    %1076 = vmatpush1.msra.mxu0 0.0
    %1077 = vmatprep.subr.mxu0 0.0
    %1078 = vmatpush1.msra.mxu0 0.0
    %1079 = vmatprep.subr.mxu0 0.0
    %1080 = vmatpush1.msra.mxu0 0.0
    %1081 = vmatprep.subr.mxu0 0.0
    %1082 = vmatpush1.msra.mxu0 0.0
    %1083 = vmatprep.subr.mxu0 0.0
    %1084 = vmatpush1.msra.mxu0 0.0
    %1085 = vmatprep.subr.mxu0 0.0
    %1086 = vmatpush1.msra.mxu0 0.0
    %1087 = vmatprep.subr.mxu0 0.0
    %1088 = vmatpush1.msra.mxu0 0.0
    %1089 = vmatprep.subr.mxu0 0.0
    %1090 = vmatpush1.msra.mxu0 0.0
    %1091 = vmatprep.subr.mxu0 0.0
    %1092 = vmatpush1.msra.mxu0 0.0
    %1093 = vmatprep.subr.mxu0 0.0
    %1094 = vmatpush1.msra.mxu0 0.0
    %1095 = vmatprep.subr.mxu0 0.0
    %1096 = vmatpush1.msra.mxu0 0.0
    %1097 = vmatprep.subr.mxu0 0.0
    %1098 = vmatpush1.msra.mxu0 0.0
    %1099 = vmatprep.subr.mxu0 0.0
    %1100 = vmatpush1.msra.mxu0 0.0
    %1101 = vmatprep.subr.mxu0 0.0
    %1102 = vmatpush1.msra.mxu0 0.0
    %1103 = vmatprep.subr.mxu0 0.0
    %1104 = vmatpush1.msra.mxu0 0.0
    %1105 = vmatprep.subr.mxu0 0.0
    %1106 = vmatpush1.msra.mxu0 0.0
    %1107 = vmatprep.subr.mxu0 0.0
    %1108 = vmatpush1.msra.mxu0 0.0
    %1109 = vmatprep.subr.mxu0 0.0
    %1110 = vmatpush1.msra.mxu0 0.0
    %1111 = vmatprep.subr.mxu0 0.0
    %1112 = vmatpush1.msra.mxu0 0.0
    %1113 = vmatprep.subr.mxu0 0.0
    %1114 = vmatpush1.msra.mxu0 0.0
    %1115 = vmatprep.subr.mxu0 0.0
    %1116 = vmatpush1.msra.mxu0 0.0
    %1117 = vmatprep.subr.mxu0 0.0
    %1118 = vmatpush1.msra.mxu0 0.0
    %1119 = vmatprep.subr.mxu0 0.0
    %1120 = vmatpush1.msra.mxu0 0.0
    %1121 = vmatprep.mubr.f32.mxu0 0.0
    %1122 = vmatmul.mubr.f32.gmra.mrb[0].mxu0 %v1052
    %v1123 = vpop.f32.mrb[0].mxu0
    %v1124 = vadd.f32 0.0, %v1123
    %v1125 = vpop.f32.mrb[0].mxu0
    %1126 = vmatprep.mubr.f32.mxu0 0.0
    %1127 = vmatmul.mubr.f32.gmra.mrb[0].mxu0 %v1055
    %v1128 = vpop.f32.mrb[0].mxu0
    %v1129 = vadd.f32 0.0, %v1128
    %v1130 = vpop.f32.mrb[0].mxu0
    %1131 = vdwg.mxu0
    %v1132 = vld [vmem:[%s7 + $0x8] sm:$0xff]
    %v1134 = vsel %vm733, %v1124, 0
    %v1137 = vsel %vm733, %v1129, 0
    %1139 = vmatprep.subr.mxu0 0.0
    %1140 = vmatpush1.msra.mxu0 %v1132
    %1141 = vmatprep.subr.mxu0 0.0
    %1142 = vmatpush1.msra.mxu0 0.0
    %1143 = vmatprep.subr.mxu0 0.0
    %1144 = vmatpush1.msra.mxu0 0.0
    %1145 = vmatprep.subr.mxu0 0.0
    %1146 = vmatpush1.msra.mxu0 0.0
    %1147 = vmatprep.subr.mxu0 0.0
    %1148 = vmatpush1.msra.mxu0 0.0
    %1149 = vmatprep.subr.mxu0 0.0
    %1150 = vmatpush1.msra.mxu0 0.0
    %1151 = vmatprep.subr.mxu0 0.0
    %1152 = vmatpush1.msra.mxu0 0.0
    %1153 = vmatprep.subr.mxu0 0.0
    %1154 = vmatpush1.msra.mxu0 0.0
    %1155 = vmatprep.subr.mxu0 0.0
    %1156 = vmatpush1.msra.mxu0 0.0
    %1157 = vmatprep.subr.mxu0 0.0
    %1158 = vmatpush1.msra.mxu0 0.0
    %1159 = vmatprep.subr.mxu0 0.0
    %1160 = vmatpush1.msra.mxu0 0.0
    %1161 = vmatprep.subr.mxu0 0.0
    %1162 = vmatpush1.msra.mxu0 0.0
    %1163 = vmatprep.subr.mxu0 0.0
    %1164 = vmatpush1.msra.mxu0 0.0
    %1165 = vmatprep.subr.mxu0 0.0
    %1166 = vmatpush1.msra.mxu0 0.0
    %1167 = vmatprep.subr.mxu0 0.0
    %1168 = vmatpush1.msra.mxu0 0.0
    %1169 = vmatprep.subr.mxu0 0.0
    %1170 = vmatpush1.msra.mxu0 0.0
    %1171 = vmatprep.subr.mxu0 0.0
    %1172 = vmatpush1.msra.mxu0 0.0
    %1173 = vmatprep.subr.mxu0 0.0
    %1174 = vmatpush1.msra.mxu0 0.0
    %1175 = vmatprep.subr.mxu0 0.0
    %1176 = vmatpush1.msra.mxu0 0.0
    %1177 = vmatprep.subr.mxu0 0.0
    %1178 = vmatpush1.msra.mxu0 0.0
    %1179 = vmatprep.subr.mxu0 0.0
    %1180 = vmatpush1.msra.mxu0 0.0
    %1181 = vmatprep.subr.mxu0 0.0
    %1182 = vmatpush1.msra.mxu0 0.0
    %1183 = vmatprep.subr.mxu0 0.0
    %1184 = vmatpush1.msra.mxu0 0.0
    %1185 = vmatprep.subr.mxu0 0.0
    %1186 = vmatpush1.msra.mxu0 0.0
    %1187 = vmatprep.subr.mxu0 0.0
    %1188 = vmatpush1.msra.mxu0 0.0
    %1189 = vmatprep.subr.mxu0 0.0
    %1190 = vmatpush1.msra.mxu0 0.0
    %1191 = vmatprep.subr.mxu0 0.0
    %1192 = vmatpush1.msra.mxu0 0.0
    %1193 = vmatprep.subr.mxu0 0.0
    %1194 = vmatpush1.msra.mxu0 0.0
    %1195 = vmatprep.subr.mxu0 0.0
    %1196 = vmatpush1.msra.mxu0 0.0
    %1197 = vmatprep.subr.mxu0 0.0
    %1198 = vmatpush1.msra.mxu0 0.0
    %1199 = vmatprep.subr.mxu0 0.0
    %1200 = vmatpush1.msra.mxu0 0.0
    %1201 = vmatprep.subr.mxu0 0.0
    %1202 = vmatpush1.msra.mxu0 0.0
    %1203 = vmatprep.mubr.f32.mxu0 0.0
    %1204 = vmatmul.mubr.f32.gmra.mrb[0].mxu0 %v1134
    %v1205 = vpop.f32.mrb[0].mxu0
    %v1206 = vadd.f32 0.0, %v1205
    %v1207 = vpop.f32.mrb[0].mxu0
    %1208 = vmatprep.mubr.f32.mxu0 0.0
    %1209 = vmatmul.mubr.f32.gmra.mrb[0].mxu0 %v1137
    %v1210 = vpop.f32.mrb[0].mxu0
    %v1211 = vadd.f32 0.0, %v1210
    %v1212 = vpop.f32.mrb[0].mxu0
    %1213 = vdwg.mxu0
    %v1215 = vsel %vm733, %v921, 0
    %v1218 = vsel %vm733, %v926, 0
    %1220 = vmatprep.subr.mxu0 0.0
    %1221 = vmatpush1.msra.mxu0 %v929
    %1222 = vmatprep.subr.mxu0 0.0
    %1223 = vmatpush1.msra.mxu0 0.0
    %1224 = vmatprep.subr.mxu0 0.0
    %1225 = vmatpush1.msra.mxu0 0.0
    %1226 = vmatprep.subr.mxu0 0.0
    %1227 = vmatpush1.msra.mxu0 0.0
    %1228 = vmatprep.subr.mxu0 0.0
    %1229 = vmatpush1.msra.mxu0 0.0
    %1230 = vmatprep.subr.mxu0 0.0
    %1231 = vmatpush1.msra.mxu0 0.0
    %1232 = vmatprep.subr.mxu0 0.0
    %1233 = vmatpush1.msra.mxu0 0.0
    %1234 = vmatprep.subr.mxu0 0.0
    %1235 = vmatpush1.msra.mxu0 0.0
    %1236 = vmatprep.subr.mxu0 0.0
    %1237 = vmatpush1.msra.mxu0 0.0
    %1238 = vmatprep.subr.mxu0 0.0
    %1239 = vmatpush1.msra.mxu0 0.0
    %1240 = vmatprep.subr.mxu0 0.0
    %1241 = vmatpush1.msra.mxu0 0.0
    %1242 = vmatprep.subr.mxu0 0.0
    %1243 = vmatpush1.msra.mxu0 0.0
    %1244 = vmatprep.subr.mxu0 0.0
    %1245 = vmatpush1.msra.mxu0 0.0
    %1246 = vmatprep.subr.mxu0 0.0
    %1247 = vmatpush1.msra.mxu0 0.0
    %1248 = vmatprep.subr.mxu0 0.0
    %1249 = vmatpush1.msra.mxu0 0.0
    %1250 = vmatprep.subr.mxu0 0.0
    %1251 = vmatpush1.msra.mxu0 0.0
    %1252 = vmatprep.subr.mxu0 0.0
    %1253 = vmatpush1.msra.mxu0 0.0
    %1254 = vmatprep.subr.mxu0 0.0
    %1255 = vmatpush1.msra.mxu0 0.0
    %1256 = vmatprep.subr.mxu0 0.0
    %1257 = vmatpush1.msra.mxu0 0.0
    %1258 = vmatprep.subr.mxu0 0.0
    %1259 = vmatpush1.msra.mxu0 0.0
    %1260 = vmatprep.subr.mxu0 0.0
    %1261 = vmatpush1.msra.mxu0 0.0
    %1262 = vmatprep.subr.mxu0 0.0
    %1263 = vmatpush1.msra.mxu0 0.0
    %1264 = vmatprep.subr.mxu0 0.0
    %1265 = vmatpush1.msra.mxu0 0.0
    %1266 = vmatprep.subr.mxu0 0.0
    %1267 = vmatpush1.msra.mxu0 0.0
    %1268 = vmatprep.subr.mxu0 0.0
    %1269 = vmatpush1.msra.mxu0 0.0
    %1270 = vmatprep.subr.mxu0 0.0
    %1271 = vmatpush1.msra.mxu0 0.0
    %1272 = vmatprep.subr.mxu0 0.0
    %1273 = vmatpush1.msra.mxu0 0.0
    %1274 = vmatprep.subr.mxu0 0.0
    %1275 = vmatpush1.msra.mxu0 0.0
    %1276 = vmatprep.subr.mxu0 0.0
    %1277 = vmatpush1.msra.mxu0 0.0
    %1278 = vmatprep.subr.mxu0 0.0
    %1279 = vmatpush1.msra.mxu0 0.0
    %1280 = vmatprep.subr.mxu0 0.0
    %1281 = vmatpush1.msra.mxu0 0.0
    %1282 = vmatprep.subr.mxu0 0.0
    %1283 = vmatpush1.msra.mxu0 0.0
    %1284 = vmatprep.mubr.f32.mxu0 0.0
    %1285 = vmatmul.mubr.f32.gmra.mrb[0].mxu0 %v1215
    %v1286 = vpop.f32.mrb[0].mxu0
    %v1287 = vadd.f32 %v1206, %v1286
    %v1288 = vpop.f32.mrb[0].mxu0
    %1289 = vmatprep.mubr.f32.mxu0 0.0
    %1290 = vmatmul.mubr.f32.gmra.mrb[0].mxu0 %v1218
    %v1291 = vpop.f32.mrb[0].mxu0
    %v1292 = vadd.f32 %v1211, %v1291
    %v1293 = vpop.f32.mrb[0].mxu0
    %1294 = vdwg.mxu0
    %1295 = vrot.lane.b32.xlu0 %v709, 112
    %v1296 = vpop.permute.xlu0 %1295
    %1297 = vrot.lane.b32.xlu0 %v714, 112
    %v1298 = vpop.permute.xlu0 %1297
    %1299 = vrot.lane.b32.xlu0 %v709, 80
    %v1300 = vpop.permute.xlu0 %1299
    %1301 = vrot.lane.b32.xlu0 %v714, 80
    %v1302 = vpop.permute.xlu0 %1301
    %v1303 = vsel %vm733, %v1296, 0
    %v1305 = vsel %vm733, %v1298, 0
    %v1307 = vsel %vm733, %v1300, 0
    %v1309 = vsel %vm733, %v1302, 0
    %1311 = vmatprep.subr.mxu0 0.0
    %1312 = vmatpush1.xpose.msra.mxu0 %v1307
    %1313 = vmatprep.subr.mxu0 0.0
    %1314 = vmatpush1.xpose.msra.mxu0 %v1309
    %1315 = vmatprep.subr.mxu0 0.0
    %1316 = vmatpush1.xpose.msra.mxu0 0.0
    %1317 = vmatprep.subr.mxu0 0.0
    %1318 = vmatpush1.xpose.msra.mxu0 0.0
    %1319 = vmatprep.subr.mxu0 0.0
    %1320 = vmatpush1.xpose.msra.mxu0 0.0
    %1321 = vmatprep.subr.mxu0 0.0
    %1322 = vmatpush1.xpose.msra.mxu0 0.0
    %1323 = vmatprep.subr.mxu0 0.0
    %1324 = vmatpush1.xpose.msra.mxu0 0.0
    %1325 = vmatprep.subr.mxu0 0.0
    %1326 = vmatpush1.xpose.msra.mxu0 0.0
    %1327 = vmatprep.subr.mxu0 0.0
    %1328 = vmatpush1.xpose.msra.mxu0 0.0
    %1329 = vmatprep.subr.mxu0 0.0
    %1330 = vmatpush1.xpose.msra.mxu0 0.0
    %1331 = vmatprep.subr.mxu0 0.0
    %1332 = vmatpush1.xpose.msra.mxu0 0.0
    %1333 = vmatprep.subr.mxu0 0.0
    %1334 = vmatpush1.xpose.msra.mxu0 0.0
    %1335 = vmatprep.subr.mxu0 0.0
    %1336 = vmatpush1.xpose.msra.mxu0 0.0
    %1337 = vmatprep.subr.mxu0 0.0
    %1338 = vmatpush1.xpose.msra.mxu0 0.0
    %1339 = vmatprep.subr.mxu0 0.0
    %1340 = vmatpush1.xpose.msra.mxu0 0.0
    %1341 = vmatprep.subr.mxu0 0.0
    %1342 = vmatpush1.xpose.msra.mxu0 0.0
    %1343 = vmatprep.subr.mxu0 0.0
    %1344 = vmatpush1.xpose.msra.mxu0 0.0
    %1345 = vmatprep.subr.mxu0 0.0
    %1346 = vmatpush1.xpose.msra.mxu0 0.0
    %1347 = vmatprep.subr.mxu0 0.0
    %1348 = vmatpush1.xpose.msra.mxu0 0.0
    %1349 = vmatprep.subr.mxu0 0.0
    %1350 = vmatpush1.xpose.msra.mxu0 0.0
    %1351 = vmatprep.subr.mxu0 0.0
    %1352 = vmatpush1.xpose.msra.mxu0 0.0
    %1353 = vmatprep.subr.mxu0 0.0
    %1354 = vmatpush1.xpose.msra.mxu0 0.0
    %1355 = vmatprep.subr.mxu0 0.0
    %1356 = vmatpush1.xpose.msra.mxu0 0.0
    %1357 = vmatprep.subr.mxu0 0.0
    %1358 = vmatpush1.xpose.msra.mxu0 0.0
    %1359 = vmatprep.subr.mxu0 0.0
    %1360 = vmatpush1.xpose.msra.mxu0 0.0
    %1361 = vmatprep.subr.mxu0 0.0
    %1362 = vmatpush1.xpose.msra.mxu0 0.0
    %1363 = vmatprep.subr.mxu0 0.0
    %1364 = vmatpush1.xpose.msra.mxu0 0.0
    %1365 = vmatprep.subr.mxu0 0.0
    %1366 = vmatpush1.xpose.msra.mxu0 0.0
    %1367 = vmatprep.subr.mxu0 0.0
    %1368 = vmatpush1.xpose.msra.mxu0 0.0
    %1369 = vmatprep.subr.mxu0 0.0
    %1370 = vmatpush1.xpose.msra.mxu0 0.0
    %1371 = vmatprep.subr.mxu0 0.0
    %1372 = vmatpush1.xpose.msra.mxu0 0.0
    %1373 = vmatprep.subr.mxu0 0.0
    %1374 = vmatpush1.xpose.msra.mxu0 0.0
    %1375 = vmatprep.mubr.f32.mxu0 0.0
    %1376 = vmatmul.mubr.f32.gmra.mrb[0].mxu0 %v1303
    %v1377 = vpop.f32.mrb[0].mxu0
    %v1378 = vadd.f32 0.0, %v1377
    %v1379 = vpop.f32.mrb[0].mxu0
    %1380 = vmatprep.mubr.f32.mxu0 0.0
    %1381 = vmatmul.mubr.f32.gmra.mrb[0].mxu0 %v1305
    %v1382 = vpop.f32.mrb[0].mxu0
    %v1383 = vadd.f32 0.0, %v1382
    %v1384 = vpop.f32.mrb[0].mxu0
    %1385 = vdwg.mxu0
    %v1386 = vmul.f32 %v1378, 0.35355338
    %v1387 = vmul.f32 %v1383, 0.35355338
    %v1388 = vsel %vm819, %v1386, -inf
    %1389 = vmax.xlane.f32.xlu0 %v1388
    %v1390 = vpop.xlane.xlu0 %1389
    %v1391 = vsel %vm819, %v1387, -inf
    %1392 = vmax.xlane.f32.xlu0 %v1391
    %v1393 = vpop.xlane.xlu0 %1392
    %v1394 = vsub.f32 %v1386, %v1390
    %v1395 = vsub.f32 %v1387, %v1393
    %v1396 = vmul.f32 %v1394, 1.442695
    %v1397 = vpow.pop %v1396
    %v1398 = vmul.f32 %v1395, 1.442695
    %v1399 = vpow.pop %v1398
    %v1400 = vsel %vm819, %v1397, 0.0
    %1401 = vadd.xlane.f32.xlu0 %v1400
    %v1402 = vpop.xlane.xlu0 %1401
    %v1403 = vsel %vm819, %v1399, 0.0
    %1404 = vadd.xlane.f32.xlu0 %v1403
    %v1405 = vpop.xlane.xlu0 %1404
    %v1406 = vrcp.pop %v1402
    %v1407 = vrcp.pop %v1405
    %v1408 = vmul.f32 %v1397, %v1406
    %v1409 = vmul.f32 %v1399, %v1407
    %1410 = vrot.lane.b32.xlu0 %v709, 48
    %v1411 = vpop.permute.xlu0 %1410
    %1412 = vrot.lane.b32.xlu0 %v714, 48
    %v1413 = vpop.permute.xlu0 %1412
    %v1417 = vsel %vm819, %v1408, 0
    %v1420 = vsel %vm819, %v1409, 0
    %1422 = vmatprep.subr.mxu0 0.0
    %1423 = vmatpush1.msra.mxu0 %v1411
    %1424 = vmatprep.subr.mxu0 0.0
    %1425 = vmatpush1.msra.mxu0 %v1413
    %1426 = vmatprep.subr.mxu0 0.0
    %1427 = vmatpush1.msra.mxu0 0.0
    %1428 = vmatprep.subr.mxu0 0.0
    %1429 = vmatpush1.msra.mxu0 0.0
    %1430 = vmatprep.subr.mxu0 0.0
    %1431 = vmatpush1.msra.mxu0 0.0
    %1432 = vmatprep.subr.mxu0 0.0
    %1433 = vmatpush1.msra.mxu0 0.0
    %1434 = vmatprep.subr.mxu0 0.0
    %1435 = vmatpush1.msra.mxu0 0.0
    %1436 = vmatprep.subr.mxu0 0.0
    %1437 = vmatpush1.msra.mxu0 0.0
    %1438 = vmatprep.subr.mxu0 0.0
    %1439 = vmatpush1.msra.mxu0 0.0
    %1440 = vmatprep.subr.mxu0 0.0
    %1441 = vmatpush1.msra.mxu0 0.0
    %1442 = vmatprep.subr.mxu0 0.0
    %1443 = vmatpush1.msra.mxu0 0.0
    %1444 = vmatprep.subr.mxu0 0.0
    %1445 = vmatpush1.msra.mxu0 0.0
    %1446 = vmatprep.subr.mxu0 0.0
    %1447 = vmatpush1.msra.mxu0 0.0
    %1448 = vmatprep.subr.mxu0 0.0
    %1449 = vmatpush1.msra.mxu0 0.0
    %1450 = vmatprep.subr.mxu0 0.0
    %1451 = vmatpush1.msra.mxu0 0.0
    %1452 = vmatprep.subr.mxu0 0.0
    %1453 = vmatpush1.msra.mxu0 0.0
    %1454 = vmatprep.subr.mxu0 0.0
    %1455 = vmatpush1.msra.mxu0 0.0
    %1456 = vmatprep.subr.mxu0 0.0
    %1457 = vmatpush1.msra.mxu0 0.0
    %1458 = vmatprep.subr.mxu0 0.0
    %1459 = vmatpush1.msra.mxu0 0.0
    %1460 = vmatprep.subr.mxu0 0.0
    %1461 = vmatpush1.msra.mxu0 0.0
    %1462 = vmatprep.subr.mxu0 0.0
    %1463 = vmatpush1.msra.mxu0 0.0
    %1464 = vmatprep.subr.mxu0 0.0
    %1465 = vmatpush1.msra.mxu0 0.0
    %1466 = vmatprep.subr.mxu0 0.0
    %1467 = vmatpush1.msra.mxu0 0.0
    %1468 = vmatprep.subr.mxu0 0.0
    %1469 = vmatpush1.msra.mxu0 0.0
    %1470 = vmatprep.subr.mxu0 0.0
    %1471 = vmatpush1.msra.mxu0 0.0
    %1472 = vmatprep.subr.mxu0 0.0
    %1473 = vmatpush1.msra.mxu0 0.0
    %1474 = vmatprep.subr.mxu0 0.0
    %1475 = vmatpush1.msra.mxu0 0.0
    %1476 = vmatprep.subr.mxu0 0.0
    %1477 = vmatpush1.msra.mxu0 0.0
    %1478 = vmatprep.subr.mxu0 0.0
    %1479 = vmatpush1.msra.mxu0 0.0
    %1480 = vmatprep.subr.mxu0 0.0
    %1481 = vmatpush1.msra.mxu0 0.0
    %1482 = vmatprep.subr.mxu0 0.0
    %1483 = vmatpush1.msra.mxu0 0.0
    %1484 = vmatprep.subr.mxu0 0.0
    %1485 = vmatpush1.msra.mxu0 0.0
    %1486 = vmatprep.mubr.f32.mxu0 0.0
    %1487 = vmatmul.mubr.f32.gmra.mrb[0].mxu0 %v1417
    %v1488 = vpop.f32.mrb[0].mxu0
    %v1489 = vadd.f32 0.0, %v1488
    %v1490 = vpop.f32.mrb[0].mxu0
    %1491 = vmatprep.mubr.f32.mxu0 0.0
    %1492 = vmatmul.mubr.f32.gmra.mrb[0].mxu0 %v1420
    %v1493 = vpop.f32.mrb[0].mxu0
    %v1494 = vadd.f32 0.0, %v1493
    %v1495 = vpop.f32.mrb[0].mxu0
    %1496 = vdwg.mxu0
    %v1497 = vld [vmem:[%s7 + $0x10] sm:$0xff]
    %v1499 = vsel %vm733, %v1489, 0
    %v1502 = vsel %vm733, %v1494, 0
    %1504 = vmatprep.subr.mxu0 0.0
    %1505 = vmatpush1.msra.mxu0 %v1497
    %1506 = vmatprep.subr.mxu0 0.0
    %1507 = vmatpush1.msra.mxu0 0.0
    %1508 = vmatprep.subr.mxu0 0.0
    %1509 = vmatpush1.msra.mxu0 0.0
    %1510 = vmatprep.subr.mxu0 0.0
    %1511 = vmatpush1.msra.mxu0 0.0
    %1512 = vmatprep.subr.mxu0 0.0
    %1513 = vmatpush1.msra.mxu0 0.0
    %1514 = vmatprep.subr.mxu0 0.0
    %1515 = vmatpush1.msra.mxu0 0.0
    %1516 = vmatprep.subr.mxu0 0.0
    %1517 = vmatpush1.msra.mxu0 0.0
    %1518 = vmatprep.subr.mxu0 0.0
    %1519 = vmatpush1.msra.mxu0 0.0
    %1520 = vmatprep.subr.mxu0 0.0
    %1521 = vmatpush1.msra.mxu0 0.0
    %1522 = vmatprep.subr.mxu0 0.0
    %1523 = vmatpush1.msra.mxu0 0.0
    %1524 = vmatprep.subr.mxu0 0.0
    %1525 = vmatpush1.msra.mxu0 0.0
    %1526 = vmatprep.subr.mxu0 0.0
    %1527 = vmatpush1.msra.mxu0 0.0
    %1528 = vmatprep.subr.mxu0 0.0
    %1529 = vmatpush1.msra.mxu0 0.0
    %1530 = vmatprep.subr.mxu0 0.0
    %1531 = vmatpush1.msra.mxu0 0.0
    %1532 = vmatprep.subr.mxu0 0.0
    %1533 = vmatpush1.msra.mxu0 0.0
    %1534 = vmatprep.subr.mxu0 0.0
    %1535 = vmatpush1.msra.mxu0 0.0
    %1536 = vmatprep.subr.mxu0 0.0
    %1537 = vmatpush1.msra.mxu0 0.0
    %1538 = vmatprep.subr.mxu0 0.0
    %1539 = vmatpush1.msra.mxu0 0.0
    %1540 = vmatprep.subr.mxu0 0.0
    %1541 = vmatpush1.msra.mxu0 0.0
    %1542 = vmatprep.subr.mxu0 0.0
    %1543 = vmatpush1.msra.mxu0 0.0
    %1544 = vmatprep.subr.mxu0 0.0
    %1545 = vmatpush1.msra.mxu0 0.0
    %1546 = vmatprep.subr.mxu0 0.0
    %1547 = vmatpush1.msra.mxu0 0.0
    %1548 = vmatprep.subr.mxu0 0.0
    %1549 = vmatpush1.msra.mxu0 0.0
    %1550 = vmatprep.subr.mxu0 0.0
    %1551 = vmatpush1.msra.mxu0 0.0
    %1552 = vmatprep.subr.mxu0 0.0
    %1553 = vmatpush1.msra.mxu0 0.0
    %1554 = vmatprep.subr.mxu0 0.0
    %1555 = vmatpush1.msra.mxu0 0.0
    %1556 = vmatprep.subr.mxu0 0.0
    %1557 = vmatpush1.msra.mxu0 0.0
    %1558 = vmatprep.subr.mxu0 0.0
    %1559 = vmatpush1.msra.mxu0 0.0
    %1560 = vmatprep.subr.mxu0 0.0
    %1561 = vmatpush1.msra.mxu0 0.0
    %1562 = vmatprep.subr.mxu0 0.0
    %1563 = vmatpush1.msra.mxu0 0.0
    %1564 = vmatprep.subr.mxu0 0.0
    %1565 = vmatpush1.msra.mxu0 0.0
    %1566 = vmatprep.subr.mxu0 0.0
    %1567 = vmatpush1.msra.mxu0 0.0
    %1568 = vmatprep.mubr.f32.mxu0 0.0
    %1569 = vmatmul.mubr.f32.gmra.mrb[0].mxu0 %v1499
    %v1570 = vpop.f32.mrb[0].mxu0
    %v1571 = vadd.f32 0.0, %v1570
    %v1572 = vpop.f32.mrb[0].mxu0
    %1573 = vmatprep.mubr.f32.mxu0 0.0
    %1574 = vmatmul.mubr.f32.gmra.mrb[0].mxu0 %v1502
    %v1575 = vpop.f32.mrb[0].mxu0
    %v1576 = vadd.f32 0.0, %v1575
    %v1577 = vpop.f32.mrb[0].mxu0
    %1578 = vdwg.mxu0
    %v1579 = vadd.f32 %v1287, %v1571
    %v1580 = vadd.f32 %v1292, %v1576
    %1581 = vrot.lane.b32.xlu0 %v709, 104
    %v1582 = vpop.permute.xlu0 %1581
    %1583 = vrot.lane.b32.xlu0 %v714, 104
    %v1584 = vpop.permute.xlu0 %1583
    %1585 = vrot.lane.b32.xlu0 %v709, 72
    %v1586 = vpop.permute.xlu0 %1585
    %1587 = vrot.lane.b32.xlu0 %v714, 72
    %v1588 = vpop.permute.xlu0 %1587
    %v1589 = vsel %vm733, %v1582, 0
    %v1591 = vsel %vm733, %v1584, 0
    %v1593 = vsel %vm733, %v1586, 0
    %v1595 = vsel %vm733, %v1588, 0
    %1597 = vmatprep.subr.mxu0 0.0
    %1598 = vmatpush1.xpose.msra.mxu0 %v1593
    %1599 = vmatprep.subr.mxu0 0.0
    %1600 = vmatpush1.xpose.msra.mxu0 %v1595
    %1601 = vmatprep.subr.mxu0 0.0
    %1602 = vmatpush1.xpose.msra.mxu0 0.0
    %1603 = vmatprep.subr.mxu0 0.0
    %1604 = vmatpush1.xpose.msra.mxu0 0.0
    %1605 = vmatprep.subr.mxu0 0.0
    %1606 = vmatpush1.xpose.msra.mxu0 0.0
    %1607 = vmatprep.subr.mxu0 0.0
    %1608 = vmatpush1.xpose.msra.mxu0 0.0
    %1609 = vmatprep.subr.mxu0 0.0
    %1610 = vmatpush1.xpose.msra.mxu0 0.0
    %1611 = vmatprep.subr.mxu0 0.0
    %1612 = vmatpush1.xpose.msra.mxu0 0.0
    %1613 = vmatprep.subr.mxu0 0.0
    %1614 = vmatpush1.xpose.msra.mxu0 0.0
    %1615 = vmatprep.subr.mxu0 0.0
    %1616 = vmatpush1.xpose.msra.mxu0 0.0
    %1617 = vmatprep.subr.mxu0 0.0
    %1618 = vmatpush1.xpose.msra.mxu0 0.0
    %1619 = vmatprep.subr.mxu0 0.0
    %1620 = vmatpush1.xpose.msra.mxu0 0.0
    %1621 = vmatprep.subr.mxu0 0.0
    %1622 = vmatpush1.xpose.msra.mxu0 0.0
    %1623 = vmatprep.subr.mxu0 0.0
    %1624 = vmatpush1.xpose.msra.mxu0 0.0
    %1625 = vmatprep.subr.mxu0 0.0
    %1626 = vmatpush1.xpose.msra.mxu0 0.0
    %1627 = vmatprep.subr.mxu0 0.0
    %1628 = vmatpush1.xpose.msra.mxu0 0.0
    %1629 = vmatprep.subr.mxu0 0.0
    %1630 = vmatpush1.xpose.msra.mxu0 0.0
    %1631 = vmatprep.subr.mxu0 0.0
    %1632 = vmatpush1.xpose.msra.mxu0 0.0
    %1633 = vmatprep.subr.mxu0 0.0
    %1634 = vmatpush1.xpose.msra.mxu0 0.0
    %1635 = vmatprep.subr.mxu0 0.0
    %1636 = vmatpush1.xpose.msra.mxu0 0.0
    %1637 = vmatprep.subr.mxu0 0.0
    %1638 = vmatpush1.xpose.msra.mxu0 0.0
    %1639 = vmatprep.subr.mxu0 0.0
    %1640 = vmatpush1.xpose.msra.mxu0 0.0
    %1641 = vmatprep.subr.mxu0 0.0
    %1642 = vmatpush1.xpose.msra.mxu0 0.0
    %1643 = vmatprep.subr.mxu0 0.0
    %1644 = vmatpush1.xpose.msra.mxu0 0.0
    %1645 = vmatprep.subr.mxu0 0.0
    %1646 = vmatpush1.xpose.msra.mxu0 0.0
    %1647 = vmatprep.subr.mxu0 0.0
    %1648 = vmatpush1.xpose.msra.mxu0 0.0
    %1649 = vmatprep.subr.mxu0 0.0
    %1650 = vmatpush1.xpose.msra.mxu0 0.0
    %1651 = vmatprep.subr.mxu0 0.0
    %1652 = vmatpush1.xpose.msra.mxu0 0.0
    %1653 = vmatprep.subr.mxu0 0.0
    %1654 = vmatpush1.xpose.msra.mxu0 0.0
    %1655 = vmatprep.subr.mxu0 0.0
    %1656 = vmatpush1.xpose.msra.mxu0 0.0
    %1657 = vmatprep.subr.mxu0 0.0
    %1658 = vmatpush1.xpose.msra.mxu0 0.0
    %1659 = vmatprep.subr.mxu0 0.0
    %1660 = vmatpush1.xpose.msra.mxu0 0.0
    %1661 = vmatprep.mubr.f32.mxu0 0.0
    %1662 = vmatmul.mubr.f32.gmra.mrb[0].mxu0 %v1589
    %v1663 = vpop.f32.mrb[0].mxu0
    %v1664 = vadd.f32 0.0, %v1663
    %v1665 = vpop.f32.mrb[0].mxu0
    %1666 = vmatprep.mubr.f32.mxu0 0.0
    %1667 = vmatmul.mubr.f32.gmra.mrb[0].mxu0 %v1591
    %v1668 = vpop.f32.mrb[0].mxu0
    %v1669 = vadd.f32 0.0, %v1668
    %v1670 = vpop.f32.mrb[0].mxu0
    %1671 = vdwg.mxu0
    %v1672 = vmul.f32 %v1664, 0.35355338
    %v1673 = vmul.f32 %v1669, 0.35355338
    %v1674 = vsel %vm819, %v1672, -inf
    %1675 = vmax.xlane.f32.xlu0 %v1674
    %v1676 = vpop.xlane.xlu0 %1675
    %v1677 = vsel %vm819, %v1673, -inf
    %1678 = vmax.xlane.f32.xlu0 %v1677
    %v1679 = vpop.xlane.xlu0 %1678
    %v1680 = vsub.f32 %v1672, %v1676
    %v1681 = vsub.f32 %v1673, %v1679
    %v1682 = vmul.f32 %v1680, 1.442695
    %v1683 = vpow.pop %v1682
    %v1684 = vmul.f32 %v1681, 1.442695
    %v1685 = vpow.pop %v1684
    %v1686 = vsel %vm819, %v1683, 0.0
    %1687 = vadd.xlane.f32.xlu0 %v1686
    %v1688 = vpop.xlane.xlu0 %1687
    %v1689 = vsel %vm819, %v1685, 0.0
    %1690 = vadd.xlane.f32.xlu0 %v1689
    %v1691 = vpop.xlane.xlu0 %1690
    %v1692 = vrcp.pop %v1688
    %v1693 = vrcp.pop %v1691
    %v1694 = vmul.f32 %v1683, %v1692
    %v1695 = vmul.f32 %v1685, %v1693
    %1696 = vrot.lane.b32.xlu0 %v709, 40
    %v1697 = vpop.permute.xlu0 %1696
    %1698 = vrot.lane.b32.xlu0 %v714, 40
    %v1699 = vpop.permute.xlu0 %1698
    %v1703 = vsel %vm819, %v1694, 0
    %v1706 = vsel %vm819, %v1695, 0
    %1708 = vmatprep.subr.mxu0 0.0
    %1709 = vmatpush1.msra.mxu0 %v1697
    %1710 = vmatprep.subr.mxu0 0.0
    %1711 = vmatpush1.msra.mxu0 %v1699
    %1712 = vmatprep.subr.mxu0 0.0
    %1713 = vmatpush1.msra.mxu0 0.0
    %1714 = vmatprep.subr.mxu0 0.0
    %1715 = vmatpush1.msra.mxu0 0.0
    %1716 = vmatprep.subr.mxu0 0.0
    %1717 = vmatpush1.msra.mxu0 0.0
    %1718 = vmatprep.subr.mxu0 0.0
    %1719 = vmatpush1.msra.mxu0 0.0
    %1720 = vmatprep.subr.mxu0 0.0
    %1721 = vmatpush1.msra.mxu0 0.0
    %1722 = vmatprep.subr.mxu0 0.0
    %1723 = vmatpush1.msra.mxu0 0.0
    %1724 = vmatprep.subr.mxu0 0.0
    %1725 = vmatpush1.msra.mxu0 0.0
    %1726 = vmatprep.subr.mxu0 0.0
    %1727 = vmatpush1.msra.mxu0 0.0
    %1728 = vmatprep.subr.mxu0 0.0
    %1729 = vmatpush1.msra.mxu0 0.0
    %1730 = vmatprep.subr.mxu0 0.0
    %1731 = vmatpush1.msra.mxu0 0.0
    %1732 = vmatprep.subr.mxu0 0.0
    %1733 = vmatpush1.msra.mxu0 0.0
    %1734 = vmatprep.subr.mxu0 0.0
    %1735 = vmatpush1.msra.mxu0 0.0
    %1736 = vmatprep.subr.mxu0 0.0
    %1737 = vmatpush1.msra.mxu0 0.0
    %1738 = vmatprep.subr.mxu0 0.0
    %1739 = vmatpush1.msra.mxu0 0.0
    %1740 = vmatprep.subr.mxu0 0.0
    %1741 = vmatpush1.msra.mxu0 0.0
    %1742 = vmatprep.subr.mxu0 0.0
    %1743 = vmatpush1.msra.mxu0 0.0
    %1744 = vmatprep.subr.mxu0 0.0
    %1745 = vmatpush1.msra.mxu0 0.0
    %1746 = vmatprep.subr.mxu0 0.0
    %1747 = vmatpush1.msra.mxu0 0.0
    %1748 = vmatprep.subr.mxu0 0.0
    %1749 = vmatpush1.msra.mxu0 0.0
    %1750 = vmatprep.subr.mxu0 0.0
    %1751 = vmatpush1.msra.mxu0 0.0
    %1752 = vmatprep.subr.mxu0 0.0
    %1753 = vmatpush1.msra.mxu0 0.0
    %1754 = vmatprep.subr.mxu0 0.0
    %1755 = vmatpush1.msra.mxu0 0.0
    %1756 = vmatprep.subr.mxu0 0.0
    %1757 = vmatpush1.msra.mxu0 0.0
    %1758 = vmatprep.subr.mxu0 0.0
    %1759 = vmatpush1.msra.mxu0 0.0
    %1760 = vmatprep.subr.mxu0 0.0
    %1761 = vmatpush1.msra.mxu0 0.0
    %1762 = vmatprep.subr.mxu0 0.0
    %1763 = vmatpush1.msra.mxu0 0.0
    %1764 = vmatprep.subr.mxu0 0.0
    %1765 = vmatpush1.msra.mxu0 0.0
    %1766 = vmatprep.subr.mxu0 0.0
    %1767 = vmatpush1.msra.mxu0 0.0
    %1768 = vmatprep.subr.mxu0 0.0
    %1769 = vmatpush1.msra.mxu0 0.0
    %1770 = vmatprep.subr.mxu0 0.0
    %1771 = vmatpush1.msra.mxu0 0.0
    %1772 = vmatprep.mubr.f32.mxu0 0.0
    %1773 = vmatmul.mubr.f32.gmra.mrb[0].mxu0 %v1703
    %v1774 = vpop.f32.mrb[0].mxu0
    %v1775 = vadd.f32 0.0, %v1774
    %v1776 = vpop.f32.mrb[0].mxu0
    %1777 = vmatprep.mubr.f32.mxu0 0.0
    %1778 = vmatmul.mubr.f32.gmra.mrb[0].mxu0 %v1706
    %v1779 = vpop.f32.mrb[0].mxu0
    %v1780 = vadd.f32 0.0, %v1779
    %v1781 = vpop.f32.mrb[0].mxu0
    %1782 = vdwg.mxu0
    %v1783 = vld [vmem:[%s7 + $0x18] sm:$0xff]
    %v1785 = vsel %vm733, %v1775, 0
    %v1788 = vsel %vm733, %v1780, 0
    %1790 = vmatprep.subr.mxu0 0.0
    %1791 = vmatpush1.msra.mxu0 %v1783
    %1792 = vmatprep.subr.mxu0 0.0
    %1793 = vmatpush1.msra.mxu0 0.0
    %1794 = vmatprep.subr.mxu0 0.0
    %1795 = vmatpush1.msra.mxu0 0.0
    %1796 = vmatprep.subr.mxu0 0.0
    %1797 = vmatpush1.msra.mxu0 0.0
    %1798 = vmatprep.subr.mxu0 0.0
    %1799 = vmatpush1.msra.mxu0 0.0
    %1800 = vmatprep.subr.mxu0 0.0
    %1801 = vmatpush1.msra.mxu0 0.0
    %1802 = vmatprep.subr.mxu0 0.0
    %1803 = vmatpush1.msra.mxu0 0.0
    %1804 = vmatprep.subr.mxu0 0.0
    %1805 = vmatpush1.msra.mxu0 0.0
    %1806 = vmatprep.subr.mxu0 0.0
    %1807 = vmatpush1.msra.mxu0 0.0
    %1808 = vmatprep.subr.mxu0 0.0
    %1809 = vmatpush1.msra.mxu0 0.0
    %1810 = vmatprep.subr.mxu0 0.0
    %1811 = vmatpush1.msra.mxu0 0.0
    %1812 = vmatprep.subr.mxu0 0.0
    %1813 = vmatpush1.msra.mxu0 0.0
    %1814 = vmatprep.subr.mxu0 0.0
    %1815 = vmatpush1.msra.mxu0 0.0
    %1816 = vmatprep.subr.mxu0 0.0
    %1817 = vmatpush1.msra.mxu0 0.0
    %1818 = vmatprep.subr.mxu0 0.0
    %1819 = vmatpush1.msra.mxu0 0.0
    %1820 = vmatprep.subr.mxu0 0.0
    %1821 = vmatpush1.msra.mxu0 0.0
    %1822 = vmatprep.subr.mxu0 0.0
    %1823 = vmatpush1.msra.mxu0 0.0
    %1824 = vmatprep.subr.mxu0 0.0
    %1825 = vmatpush1.msra.mxu0 0.0
    %1826 = vmatprep.subr.mxu0 0.0
    %1827 = vmatpush1.msra.mxu0 0.0
    %1828 = vmatprep.subr.mxu0 0.0
    %1829 = vmatpush1.msra.mxu0 0.0
    %1830 = vmatprep.subr.mxu0 0.0
    %1831 = vmatpush1.msra.mxu0 0.0
    %1832 = vmatprep.subr.mxu0 0.0
    %1833 = vmatpush1.msra.mxu0 0.0
    %1834 = vmatprep.subr.mxu0 0.0
    %1835 = vmatpush1.msra.mxu0 0.0
    %1836 = vmatprep.subr.mxu0 0.0
    %1837 = vmatpush1.msra.mxu0 0.0
    %1838 = vmatprep.subr.mxu0 0.0
    %1839 = vmatpush1.msra.mxu0 0.0
    %1840 = vmatprep.subr.mxu0 0.0
    %1841 = vmatpush1.msra.mxu0 0.0
    %1842 = vmatprep.subr.mxu0 0.0
    %1843 = vmatpush1.msra.mxu0 0.0
    %1844 = vmatprep.subr.mxu0 0.0
    %1845 = vmatpush1.msra.mxu0 0.0
    %1846 = vmatprep.subr.mxu0 0.0
    %1847 = vmatpush1.msra.mxu0 0.0
    %1848 = vmatprep.subr.mxu0 0.0
    %1849 = vmatpush1.msra.mxu0 0.0
    %1850 = vmatprep.subr.mxu0 0.0
    %1851 = vmatpush1.msra.mxu0 0.0
    %1852 = vmatprep.subr.mxu0 0.0
    %1853 = vmatpush1.msra.mxu0 0.0
    %1854 = vmatprep.mubr.f32.mxu0 0.0
    %1855 = vmatmul.mubr.f32.gmra.mrb[0].mxu0 %v1785
    %v1856 = vpop.f32.mrb[0].mxu0
    %v1857 = vadd.f32 0.0, %v1856
    %v1858 = vpop.f32.mrb[0].mxu0
    %1859 = vmatprep.mubr.f32.mxu0 0.0
    %1860 = vmatmul.mubr.f32.gmra.mrb[0].mxu0 %v1788
    %v1861 = vpop.f32.mrb[0].mxu0
    %v1862 = vadd.f32 0.0, %v1861
    %v1863 = vpop.f32.mrb[0].mxu0
    %1864 = vdwg.mxu0
    %v1865 = vadd.f32 %v1579, %v1857
    %v1866 = vadd.f32 %v1580, %v1862
    %v1867 = vld [vmem:[%s8] sm:$0x1]
    %v1869 = vlaneseq
    %v1870 = vshrl.u32 %v1869, 7
    %v1871 = vsub.s32 0, %v1870
    %v1872 = vrot.slane %v1867, %v1871
    %v1874 = vadd.f32 %v1865, %v1872
    %v1875 = vadd.f32 %v1866, %v1872
    %1876 = vrot.lane.b32.xlu0 %v33, 96
    %v1877 = vpop.permute.xlu0 %1876
    %1878 = vrot.lane.b32.xlu0 %v34, 96
    %v1879 = vpop.permute.xlu0 %1878
    %v1882 = vadd.f32 %v1874, %v1877
    %v1883 = vadd.f32 %v1875, %v1879
    %v1884 = vmax.f32 %v1882, 0.0
    %v1885 = vmax.f32 %v1883, 0.0
    %1886 = vst.msk [vmem:[#allocation2] sm:$0xff] %vm629, %v1884
    %1887 = vst.msk [vmem:[#allocation2 + $0x8] sm:$0xff] %vm629, %v1885
    %1890 = vrot.lane.b32.xlu0 %v719, 96
    %v1891 = vpop.permute.xlu0 %1890
    %1892 = vrot.lane.b32.xlu0 %v724, 96
    %v1893 = vpop.permute.xlu0 %1892
    %v1894 = vsel %vm733, %v719, 0
    %v1896 = vsel %vm733, %v724, 0
    %v1898 = vsel %vm733, %v1891, 0
    %v1900 = vsel %vm733, %v1893, 0
    %1902 = vmatprep.subr.mxu0 0.0
    %1903 = vmatpush1.xpose.msra.mxu0 %v1898
    %1904 = vmatprep.subr.mxu0 0.0
    %1905 = vmatpush1.xpose.msra.mxu0 %v1900
    %1906 = vmatprep.subr.mxu0 0.0
    %1907 = vmatpush1.xpose.msra.mxu0 0.0
    %1908 = vmatprep.subr.mxu0 0.0
    %1909 = vmatpush1.xpose.msra.mxu0 0.0
    %1910 = vmatprep.subr.mxu0 0.0
    %1911 = vmatpush1.xpose.msra.mxu0 0.0
    %1912 = vmatprep.subr.mxu0 0.0
    %1913 = vmatpush1.xpose.msra.mxu0 0.0
    %1914 = vmatprep.subr.mxu0 0.0
    %1915 = vmatpush1.xpose.msra.mxu0 0.0
    %1916 = vmatprep.subr.mxu0 0.0
    %1917 = vmatpush1.xpose.msra.mxu0 0.0
    %1918 = vmatprep.subr.mxu0 0.0
    %1919 = vmatpush1.xpose.msra.mxu0 0.0
    %1920 = vmatprep.subr.mxu0 0.0
    %1921 = vmatpush1.xpose.msra.mxu0 0.0
    %1922 = vmatprep.subr.mxu0 0.0
    %1923 = vmatpush1.xpose.msra.mxu0 0.0
    %1924 = vmatprep.subr.mxu0 0.0
    %1925 = vmatpush1.xpose.msra.mxu0 0.0
    %1926 = vmatprep.subr.mxu0 0.0
    %1927 = vmatpush1.xpose.msra.mxu0 0.0
    %1928 = vmatprep.subr.mxu0 0.0
    %1929 = vmatpush1.xpose.msra.mxu0 0.0
    %1930 = vmatprep.subr.mxu0 0.0
    %1931 = vmatpush1.xpose.msra.mxu0 0.0
    %1932 = vmatprep.subr.mxu0 0.0
    %1933 = vmatpush1.xpose.msra.mxu0 0.0
    %1934 = vmatprep.subr.mxu0 0.0
    %1935 = vmatpush1.xpose.msra.mxu0 0.0
    %1936 = vmatprep.subr.mxu0 0.0
    %1937 = vmatpush1.xpose.msra.mxu0 0.0
    %1938 = vmatprep.subr.mxu0 0.0
    %1939 = vmatpush1.xpose.msra.mxu0 0.0
    %1940 = vmatprep.subr.mxu0 0.0
    %1941 = vmatpush1.xpose.msra.mxu0 0.0
    %1942 = vmatprep.subr.mxu0 0.0
    %1943 = vmatpush1.xpose.msra.mxu0 0.0
    %1944 = vmatprep.subr.mxu0 0.0
    %1945 = vmatpush1.xpose.msra.mxu0 0.0
    %1946 = vmatprep.subr.mxu0 0.0
    %1947 = vmatpush1.xpose.msra.mxu0 0.0
    %1948 = vmatprep.subr.mxu0 0.0
    %1949 = vmatpush1.xpose.msra.mxu0 0.0
    %1950 = vmatprep.subr.mxu0 0.0
    %1951 = vmatpush1.xpose.msra.mxu0 0.0
    %1952 = vmatprep.subr.mxu0 0.0
    %1953 = vmatpush1.xpose.msra.mxu0 0.0
    %1954 = vmatprep.subr.mxu0 0.0
    %1955 = vmatpush1.xpose.msra.mxu0 0.0
    %1956 = vmatprep.subr.mxu0 0.0
    %1957 = vmatpush1.xpose.msra.mxu0 0.0
    %1958 = vmatprep.subr.mxu0 0.0
    %1959 = vmatpush1.xpose.msra.mxu0 0.0
    %1960 = vmatprep.subr.mxu0 0.0
    %1961 = vmatpush1.xpose.msra.mxu0 0.0
    %1962 = vmatprep.subr.mxu0 0.0
    %1963 = vmatpush1.xpose.msra.mxu0 0.0
    %1964 = vmatprep.subr.mxu0 0.0
    %1965 = vmatpush1.xpose.msra.mxu0 0.0
    %1966 = vmatprep.mubr.f32.mxu0 0.0
    %1967 = vmatmul.mubr.f32.gmra.mrb[0].mxu0 %v1894
    %v1968 = vpop.f32.mrb[0].mxu0
    %v1969 = vadd.f32 0.0, %v1968
    %v1970 = vpop.f32.mrb[0].mxu0
    %1971 = vmatprep.mubr.f32.mxu0 0.0
    %1972 = vmatmul.mubr.f32.gmra.mrb[0].mxu0 %v1896
    %v1973 = vpop.f32.mrb[0].mxu0
    %v1974 = vadd.f32 0.0, %v1973
    %v1975 = vpop.f32.mrb[0].mxu0
    %1976 = vdwg.mxu0
    %v1977 = vmul.f32 %v1969, 0.35355338
    %v1978 = vmul.f32 %v1974, 0.35355338
    %v1979 = vsel %vm819, %v1977, -inf
    %1980 = vmax.xlane.f32.xlu0 %v1979
    %v1981 = vpop.xlane.xlu0 %1980
    %v1982 = vsel %vm819, %v1978, -inf
    %1983 = vmax.xlane.f32.xlu0 %v1982
    %v1984 = vpop.xlane.xlu0 %1983
    %v1985 = vsub.f32 %v1977, %v1981
    %v1986 = vsub.f32 %v1978, %v1984
    %v1987 = vmul.f32 %v1985, 1.442695
    %v1988 = vpow.pop %v1987
    %v1989 = vmul.f32 %v1986, 1.442695
    %v1990 = vpow.pop %v1989
    %v1991 = vsel %vm819, %v1988, 0.0
    %1992 = vadd.xlane.f32.xlu0 %v1991
    %v1993 = vpop.xlane.xlu0 %1992
    %v1994 = vsel %vm819, %v1990, 0.0
    %1995 = vadd.xlane.f32.xlu0 %v1994
    %v1996 = vpop.xlane.xlu0 %1995
    %v1997 = vrcp.pop %v1993
    %v1998 = vrcp.pop %v1996
    %v1999 = vmul.f32 %v1988, %v1997
    %v2000 = vmul.f32 %v1990, %v1998
    %2001 = vrot.lane.b32.xlu0 %v719, 64
    %v2002 = vpop.permute.xlu0 %2001
    %2003 = vrot.lane.b32.xlu0 %v724, 64
    %v2004 = vpop.permute.xlu0 %2003
    %v2008 = vsel %vm819, %v1999, 0
    %v2011 = vsel %vm819, %v2000, 0
    %2013 = vmatprep.subr.mxu0 0.0
    %2014 = vmatpush1.msra.mxu0 %v2002
    %2015 = vmatprep.subr.mxu0 0.0
    %2016 = vmatpush1.msra.mxu0 %v2004
    %2017 = vmatprep.subr.mxu0 0.0
    %2018 = vmatpush1.msra.mxu0 0.0
    %2019 = vmatprep.subr.mxu0 0.0
    %2020 = vmatpush1.msra.mxu0 0.0
    %2021 = vmatprep.subr.mxu0 0.0
    %2022 = vmatpush1.msra.mxu0 0.0
    %2023 = vmatprep.subr.mxu0 0.0
    %2024 = vmatpush1.msra.mxu0 0.0
    %2025 = vmatprep.subr.mxu0 0.0
    %2026 = vmatpush1.msra.mxu0 0.0
    %2027 = vmatprep.subr.mxu0 0.0
    %2028 = vmatpush1.msra.mxu0 0.0
    %2029 = vmatprep.subr.mxu0 0.0
    %2030 = vmatpush1.msra.mxu0 0.0
    %2031 = vmatprep.subr.mxu0 0.0
    %2032 = vmatpush1.msra.mxu0 0.0
    %2033 = vmatprep.subr.mxu0 0.0
    %2034 = vmatpush1.msra.mxu0 0.0
    %2035 = vmatprep.subr.mxu0 0.0
    %2036 = vmatpush1.msra.mxu0 0.0
    %2037 = vmatprep.subr.mxu0 0.0
    %2038 = vmatpush1.msra.mxu0 0.0
    %2039 = vmatprep.subr.mxu0 0.0
    %2040 = vmatpush1.msra.mxu0 0.0
    %2041 = vmatprep.subr.mxu0 0.0
    %2042 = vmatpush1.msra.mxu0 0.0
    %2043 = vmatprep.subr.mxu0 0.0
    %2044 = vmatpush1.msra.mxu0 0.0
    %2045 = vmatprep.subr.mxu0 0.0
    %2046 = vmatpush1.msra.mxu0 0.0
    %2047 = vmatprep.subr.mxu0 0.0
    %2048 = vmatpush1.msra.mxu0 0.0
    %2049 = vmatprep.subr.mxu0 0.0
    %2050 = vmatpush1.msra.mxu0 0.0
    %2051 = vmatprep.subr.mxu0 0.0
    %2052 = vmatpush1.msra.mxu0 0.0
    %2053 = vmatprep.subr.mxu0 0.0
    %2054 = vmatpush1.msra.mxu0 0.0
    %2055 = vmatprep.subr.mxu0 0.0
    %2056 = vmatpush1.msra.mxu0 0.0
    %2057 = vmatprep.subr.mxu0 0.0
    %2058 = vmatpush1.msra.mxu0 0.0
    %2059 = vmatprep.subr.mxu0 0.0
    %2060 = vmatpush1.msra.mxu0 0.0
    %2061 = vmatprep.subr.mxu0 0.0
    %2062 = vmatpush1.msra.mxu0 0.0
    %2063 = vmatprep.subr.mxu0 0.0
    %2064 = vmatpush1.msra.mxu0 0.0
    %2065 = vmatprep.subr.mxu0 0.0
    %2066 = vmatpush1.msra.mxu0 0.0
    %2067 = vmatprep.subr.mxu0 0.0
    %2068 = vmatpush1.msra.mxu0 0.0
    %2069 = vmatprep.subr.mxu0 0.0
    %2070 = vmatpush1.msra.mxu0 0.0
    %2071 = vmatprep.subr.mxu0 0.0
    %2072 = vmatpush1.msra.mxu0 0.0
    %2073 = vmatprep.subr.mxu0 0.0
    %2074 = vmatpush1.msra.mxu0 0.0
    %2075 = vmatprep.subr.mxu0 0.0
    %2076 = vmatpush1.msra.mxu0 0.0
    %2077 = vmatprep.mubr.f32.mxu0 0.0
    %2078 = vmatmul.mubr.f32.gmra.mrb[0].mxu0 %v2008
    %v2079 = vpop.f32.mrb[0].mxu0
    %v2080 = vadd.f32 0.0, %v2079
    %v2081 = vpop.f32.mrb[0].mxu0
    %2082 = vmatprep.mubr.f32.mxu0 0.0
    %2083 = vmatmul.mubr.f32.gmra.mrb[0].mxu0 %v2011
    %v2084 = vpop.f32.mrb[0].mxu0
    %v2085 = vadd.f32 0.0, %v2084
    %v2086 = vpop.f32.mrb[0].mxu0
    %2087 = vdwg.mxu0
    %v2088 = vld [vmem:[%s7] sm:$0xff]
    %2089 = vrot.lane.b32.xlu0 %v719, 120
    %v2090 = vpop.permute.xlu0 %2089
    %2091 = vrot.lane.b32.xlu0 %v724, 120
    %v2092 = vpop.permute.xlu0 %2091
    %2093 = vrot.lane.b32.xlu0 %v719, 88
    %v2094 = vpop.permute.xlu0 %2093
    %2095 = vrot.lane.b32.xlu0 %v724, 88
    %v2096 = vpop.permute.xlu0 %2095
    %v2097 = vsel %vm733, %v2090, 0
    %v2099 = vsel %vm733, %v2092, 0
    %v2101 = vsel %vm733, %v2094, 0
    %v2103 = vsel %vm733, %v2096, 0
    %2105 = vmatprep.subr.mxu0 0.0
    %2106 = vmatpush1.xpose.msra.mxu0 %v2101
    %2107 = vmatprep.subr.mxu0 0.0
    %2108 = vmatpush1.xpose.msra.mxu0 %v2103
    %2109 = vmatprep.subr.mxu0 0.0
    %2110 = vmatpush1.xpose.msra.mxu0 0.0
    %2111 = vmatprep.subr.mxu0 0.0
    %2112 = vmatpush1.xpose.msra.mxu0 0.0
    %2113 = vmatprep.subr.mxu0 0.0
    %2114 = vmatpush1.xpose.msra.mxu0 0.0
    %2115 = vmatprep.subr.mxu0 0.0
    %2116 = vmatpush1.xpose.msra.mxu0 0.0
    %2117 = vmatprep.subr.mxu0 0.0
    %2118 = vmatpush1.xpose.msra.mxu0 0.0
    %2119 = vmatprep.subr.mxu0 0.0
    %2120 = vmatpush1.xpose.msra.mxu0 0.0
    %2121 = vmatprep.subr.mxu0 0.0
    %2122 = vmatpush1.xpose.msra.mxu0 0.0
    %2123 = vmatprep.subr.mxu0 0.0
    %2124 = vmatpush1.xpose.msra.mxu0 0.0
    %2125 = vmatprep.subr.mxu0 0.0
    %2126 = vmatpush1.xpose.msra.mxu0 0.0
    %2127 = vmatprep.subr.mxu0 0.0
    %2128 = vmatpush1.xpose.msra.mxu0 0.0
    %2129 = vmatprep.subr.mxu0 0.0
    %2130 = vmatpush1.xpose.msra.mxu0 0.0
    %2131 = vmatprep.subr.mxu0 0.0
    %2132 = vmatpush1.xpose.msra.mxu0 0.0
    %2133 = vmatprep.subr.mxu0 0.0
    %2134 = vmatpush1.xpose.msra.mxu0 0.0
    %2135 = vmatprep.subr.mxu0 0.0
    %2136 = vmatpush1.xpose.msra.mxu0 0.0
    %2137 = vmatprep.subr.mxu0 0.0
    %2138 = vmatpush1.xpose.msra.mxu0 0.0
    %2139 = vmatprep.subr.mxu0 0.0
    %2140 = vmatpush1.xpose.msra.mxu0 0.0
    %2141 = vmatprep.subr.mxu0 0.0
    %2142 = vmatpush1.xpose.msra.mxu0 0.0
    %2143 = vmatprep.subr.mxu0 0.0
    %2144 = vmatpush1.xpose.msra.mxu0 0.0
    %2145 = vmatprep.subr.mxu0 0.0
    %2146 = vmatpush1.xpose.msra.mxu0 0.0
    %2147 = vmatprep.subr.mxu0 0.0
    %2148 = vmatpush1.xpose.msra.mxu0 0.0
    %2149 = vmatprep.subr.mxu0 0.0
    %2150 = vmatpush1.xpose.msra.mxu0 0.0
    %2151 = vmatprep.subr.mxu0 0.0
    %2152 = vmatpush1.xpose.msra.mxu0 0.0
    %2153 = vmatprep.subr.mxu0 0.0
    %2154 = vmatpush1.xpose.msra.mxu0 0.0
    %2155 = vmatprep.subr.mxu0 0.0
    %2156 = vmatpush1.xpose.msra.mxu0 0.0
    %2157 = vmatprep.subr.mxu0 0.0
    %2158 = vmatpush1.xpose.msra.mxu0 0.0
    %2159 = vmatprep.subr.mxu0 0.0
    %2160 = vmatpush1.xpose.msra.mxu0 0.0
    %2161 = vmatprep.subr.mxu0 0.0
    %2162 = vmatpush1.xpose.msra.mxu0 0.0
    %2163 = vmatprep.subr.mxu0 0.0
    %2164 = vmatpush1.xpose.msra.mxu0 0.0
    %2165 = vmatprep.subr.mxu0 0.0
    %2166 = vmatpush1.xpose.msra.mxu0 0.0
    %2167 = vmatprep.subr.mxu0 0.0
    %2168 = vmatpush1.xpose.msra.mxu0 0.0
    %2169 = vmatprep.mubr.f32.mxu0 0.0
    %2170 = vmatmul.mubr.f32.gmra.mrb[0].mxu0 %v2097
    %v2171 = vpop.f32.mrb[0].mxu0
    %v2172 = vadd.f32 0.0, %v2171
    %v2173 = vpop.f32.mrb[0].mxu0
    %2174 = vmatprep.mubr.f32.mxu0 0.0
    %2175 = vmatmul.mubr.f32.gmra.mrb[0].mxu0 %v2099
    %v2176 = vpop.f32.mrb[0].mxu0
    %v2177 = vadd.f32 0.0, %v2176
    %v2178 = vpop.f32.mrb[0].mxu0
    %2179 = vdwg.mxu0
    %v2180 = vmul.f32 %v2172, 0.35355338
    %v2181 = vmul.f32 %v2177, 0.35355338
    %v2182 = vsel %vm819, %v2180, -inf
    %2183 = vmax.xlane.f32.xlu0 %v2182
    %v2184 = vpop.xlane.xlu0 %2183
    %v2185 = vsel %vm819, %v2181, -inf
    %2186 = vmax.xlane.f32.xlu0 %v2185
    %v2187 = vpop.xlane.xlu0 %2186
    %v2188 = vsub.f32 %v2180, %v2184
    %v2189 = vsub.f32 %v2181, %v2187
    %v2190 = vmul.f32 %v2188, 1.442695
    %v2191 = vpow.pop %v2190
    %v2192 = vmul.f32 %v2189, 1.442695
    %v2193 = vpow.pop %v2192
    %v2194 = vsel %vm819, %v2191, 0.0
    %2195 = vadd.xlane.f32.xlu0 %v2194
    %v2196 = vpop.xlane.xlu0 %2195
    %v2197 = vsel %vm819, %v2193, 0.0
    %2198 = vadd.xlane.f32.xlu0 %v2197
    %v2199 = vpop.xlane.xlu0 %2198
    %v2200 = vrcp.pop %v2196
    %v2201 = vrcp.pop %v2199
    %v2202 = vmul.f32 %v2191, %v2200
    %v2203 = vmul.f32 %v2193, %v2201
    %2204 = vrot.lane.b32.xlu0 %v719, 56
    %v2205 = vpop.permute.xlu0 %2204
    %2206 = vrot.lane.b32.xlu0 %v724, 56
    %v2207 = vpop.permute.xlu0 %2206
    %v2211 = vsel %vm819, %v2202, 0
    %v2214 = vsel %vm819, %v2203, 0
    %2216 = vmatprep.subr.mxu0 0.0
    %2217 = vmatpush1.msra.mxu0 %v2205
    %2218 = vmatprep.subr.mxu0 0.0
    %2219 = vmatpush1.msra.mxu0 %v2207
    %2220 = vmatprep.subr.mxu0 0.0
    %2221 = vmatpush1.msra.mxu0 0.0
    %2222 = vmatprep.subr.mxu0 0.0
    %2223 = vmatpush1.msra.mxu0 0.0
    %2224 = vmatprep.subr.mxu0 0.0
    %2225 = vmatpush1.msra.mxu0 0.0
    %2226 = vmatprep.subr.mxu0 0.0
    %2227 = vmatpush1.msra.mxu0 0.0
    %2228 = vmatprep.subr.mxu0 0.0
    %2229 = vmatpush1.msra.mxu0 0.0
    %2230 = vmatprep.subr.mxu0 0.0
    %2231 = vmatpush1.msra.mxu0 0.0
    %2232 = vmatprep.subr.mxu0 0.0
    %2233 = vmatpush1.msra.mxu0 0.0
    %2234 = vmatprep.subr.mxu0 0.0
    %2235 = vmatpush1.msra.mxu0 0.0
    %2236 = vmatprep.subr.mxu0 0.0
    %2237 = vmatpush1.msra.mxu0 0.0
    %2238 = vmatprep.subr.mxu0 0.0
    %2239 = vmatpush1.msra.mxu0 0.0
    %2240 = vmatprep.subr.mxu0 0.0
    %2241 = vmatpush1.msra.mxu0 0.0
    %2242 = vmatprep.subr.mxu0 0.0
    %2243 = vmatpush1.msra.mxu0 0.0
    %2244 = vmatprep.subr.mxu0 0.0
    %2245 = vmatpush1.msra.mxu0 0.0
    %2246 = vmatprep.subr.mxu0 0.0
    %2247 = vmatpush1.msra.mxu0 0.0
    %2248 = vmatprep.subr.mxu0 0.0
    %2249 = vmatpush1.msra.mxu0 0.0
    %2250 = vmatprep.subr.mxu0 0.0
    %2251 = vmatpush1.msra.mxu0 0.0
    %2252 = vmatprep.subr.mxu0 0.0
    %2253 = vmatpush1.msra.mxu0 0.0
    %2254 = vmatprep.subr.mxu0 0.0
    %2255 = vmatpush1.msra.mxu0 0.0
    %2256 = vmatprep.subr.mxu0 0.0
    %2257 = vmatpush1.msra.mxu0 0.0
    %2258 = vmatprep.subr.mxu0 0.0
    %2259 = vmatpush1.msra.mxu0 0.0
    %2260 = vmatprep.subr.mxu0 0.0
    %2261 = vmatpush1.msra.mxu0 0.0
    %2262 = vmatprep.subr.mxu0 0.0
    %2263 = vmatpush1.msra.mxu0 0.0
    %2264 = vmatprep.subr.mxu0 0.0
    %2265 = vmatpush1.msra.mxu0 0.0
    %2266 = vmatprep.subr.mxu0 0.0
    %2267 = vmatpush1.msra.mxu0 0.0
    %2268 = vmatprep.subr.mxu0 0.0
    %2269 = vmatpush1.msra.mxu0 0.0
    %2270 = vmatprep.subr.mxu0 0.0
    %2271 = vmatpush1.msra.mxu0 0.0
    %2272 = vmatprep.subr.mxu0 0.0
    %2273 = vmatpush1.msra.mxu0 0.0
    %2274 = vmatprep.subr.mxu0 0.0
    %2275 = vmatpush1.msra.mxu0 0.0
    %2276 = vmatprep.subr.mxu0 0.0
    %2277 = vmatpush1.msra.mxu0 0.0
    %2278 = vmatprep.subr.mxu0 0.0
    %2279 = vmatpush1.msra.mxu0 0.0
    %2280 = vmatprep.mubr.f32.mxu0 0.0
    %2281 = vmatmul.mubr.f32.gmra.mrb[0].mxu0 %v2211
    %v2282 = vpop.f32.mrb[0].mxu0
    %v2283 = vadd.f32 0.0, %v2282
    %v2284 = vpop.f32.mrb[0].mxu0
    %2285 = vmatprep.mubr.f32.mxu0 0.0
    %2286 = vmatmul.mubr.f32.gmra.mrb[0].mxu0 %v2214
    %v2287 = vpop.f32.mrb[0].mxu0
    %v2288 = vadd.f32 0.0, %v2287
    %v2289 = vpop.f32.mrb[0].mxu0
    %2290 = vdwg.mxu0
    %v2291 = vld [vmem:[%s7 + $0x8] sm:$0xff]
    %v2293 = vsel %vm733, %v2283, 0
    %v2296 = vsel %vm733, %v2288, 0
    %2298 = vmatprep.subr.mxu0 0.0
    %2299 = vmatpush1.msra.mxu0 %v2291
    %2300 = vmatprep.subr.mxu0 0.0
    %2301 = vmatpush1.msra.mxu0 0.0
    %2302 = vmatprep.subr.mxu0 0.0
    %2303 = vmatpush1.msra.mxu0 0.0
    %2304 = vmatprep.subr.mxu0 0.0
    %2305 = vmatpush1.msra.mxu0 0.0
    %2306 = vmatprep.subr.mxu0 0.0
    %2307 = vmatpush1.msra.mxu0 0.0
    %2308 = vmatprep.subr.mxu0 0.0
    %2309 = vmatpush1.msra.mxu0 0.0
    %2310 = vmatprep.subr.mxu0 0.0
    %2311 = vmatpush1.msra.mxu0 0.0
    %2312 = vmatprep.subr.mxu0 0.0
    %2313 = vmatpush1.msra.mxu0 0.0
    %2314 = vmatprep.subr.mxu0 0.0
    %2315 = vmatpush1.msra.mxu0 0.0
    %2316 = vmatprep.subr.mxu0 0.0
    %2317 = vmatpush1.msra.mxu0 0.0
    %2318 = vmatprep.subr.mxu0 0.0
    %2319 = vmatpush1.msra.mxu0 0.0
    %2320 = vmatprep.subr.mxu0 0.0
    %2321 = vmatpush1.msra.mxu0 0.0
    %2322 = vmatprep.subr.mxu0 0.0
    %2323 = vmatpush1.msra.mxu0 0.0
    %2324 = vmatprep.subr.mxu0 0.0
    %2325 = vmatpush1.msra.mxu0 0.0
    %2326 = vmatprep.subr.mxu0 0.0
    %2327 = vmatpush1.msra.mxu0 0.0
    %2328 = vmatprep.subr.mxu0 0.0
    %2329 = vmatpush1.msra.mxu0 0.0
    %2330 = vmatprep.subr.mxu0 0.0
    %2331 = vmatpush1.msra.mxu0 0.0
    %2332 = vmatprep.subr.mxu0 0.0
    %2333 = vmatpush1.msra.mxu0 0.0
    %2334 = vmatprep.subr.mxu0 0.0
    %2335 = vmatpush1.msra.mxu0 0.0
    %2336 = vmatprep.subr.mxu0 0.0
    %2337 = vmatpush1.msra.mxu0 0.0
    %2338 = vmatprep.subr.mxu0 0.0
    %2339 = vmatpush1.msra.mxu0 0.0
    %2340 = vmatprep.subr.mxu0 0.0
    %2341 = vmatpush1.msra.mxu0 0.0
    %2342 = vmatprep.subr.mxu0 0.0
    %2343 = vmatpush1.msra.mxu0 0.0
    %2344 = vmatprep.subr.mxu0 0.0
    %2345 = vmatpush1.msra.mxu0 0.0
    %2346 = vmatprep.subr.mxu0 0.0
    %2347 = vmatpush1.msra.mxu0 0.0
    %2348 = vmatprep.subr.mxu0 0.0
    %2349 = vmatpush1.msra.mxu0 0.0
    %2350 = vmatprep.subr.mxu0 0.0
    %2351 = vmatpush1.msra.mxu0 0.0
    %2352 = vmatprep.subr.mxu0 0.0
    %2353 = vmatpush1.msra.mxu0 0.0
    %2354 = vmatprep.subr.mxu0 0.0
    %2355 = vmatpush1.msra.mxu0 0.0
    %2356 = vmatprep.subr.mxu0 0.0
    %2357 = vmatpush1.msra.mxu0 0.0
    %2358 = vmatprep.subr.mxu0 0.0
    %2359 = vmatpush1.msra.mxu0 0.0
    %2360 = vmatprep.subr.mxu0 0.0
    %2361 = vmatpush1.msra.mxu0 0.0
    %2362 = vmatprep.mubr.f32.mxu0 0.0
    %2363 = vmatmul.mubr.f32.gmra.mrb[0].mxu0 %v2293
    %v2364 = vpop.f32.mrb[0].mxu0
    %v2365 = vadd.f32 0.0, %v2364
    %v2366 = vpop.f32.mrb[0].mxu0
    %2367 = vmatprep.mubr.f32.mxu0 0.0
    %2368 = vmatmul.mubr.f32.gmra.mrb[0].mxu0 %v2296
    %v2369 = vpop.f32.mrb[0].mxu0
    %v2370 = vadd.f32 0.0, %v2369
    %v2371 = vpop.f32.mrb[0].mxu0
    %2372 = vdwg.mxu0
    %v2374 = vsel %vm733, %v2080, 0
    %v2377 = vsel %vm733, %v2085, 0
    %2379 = vmatprep.subr.mxu0 0.0
    %2380 = vmatpush1.msra.mxu0 %v2088
    %2381 = vmatprep.subr.mxu0 0.0
    %2382 = vmatpush1.msra.mxu0 0.0
    %2383 = vmatprep.subr.mxu0 0.0
    %2384 = vmatpush1.msra.mxu0 0.0
    %2385 = vmatprep.subr.mxu0 0.0
    %2386 = vmatpush1.msra.mxu0 0.0
    %2387 = vmatprep.subr.mxu0 0.0
    %2388 = vmatpush1.msra.mxu0 0.0
    %2389 = vmatprep.subr.mxu0 0.0
    %2390 = vmatpush1.msra.mxu0 0.0
    %2391 = vmatprep.subr.mxu0 0.0
    %2392 = vmatpush1.msra.mxu0 0.0
    %2393 = vmatprep.subr.mxu0 0.0
    %2394 = vmatpush1.msra.mxu0 0.0
    %2395 = vmatprep.subr.mxu0 0.0
    %2396 = vmatpush1.msra.mxu0 0.0
    %2397 = vmatprep.subr.mxu0 0.0
    %2398 = vmatpush1.msra.mxu0 0.0
    %2399 = vmatprep.subr.mxu0 0.0
    %2400 = vmatpush1.msra.mxu0 0.0
    %2401 = vmatprep.subr.mxu0 0.0
    %2402 = vmatpush1.msra.mxu0 0.0
    %2403 = vmatprep.subr.mxu0 0.0
    %2404 = vmatpush1.msra.mxu0 0.0
    %2405 = vmatprep.subr.mxu0 0.0
    %2406 = vmatpush1.msra.mxu0 0.0
    %2407 = vmatprep.subr.mxu0 0.0
    %2408 = vmatpush1.msra.mxu0 0.0
    %2409 = vmatprep.subr.mxu0 0.0
    %2410 = vmatpush1.msra.mxu0 0.0
    %2411 = vmatprep.subr.mxu0 0.0
    %2412 = vmatpush1.msra.mxu0 0.0
    %2413 = vmatprep.subr.mxu0 0.0
    %2414 = vmatpush1.msra.mxu0 0.0
    %2415 = vmatprep.subr.mxu0 0.0
    %2416 = vmatpush1.msra.mxu0 0.0
    %2417 = vmatprep.subr.mxu0 0.0
    %2418 = vmatpush1.msra.mxu0 0.0
    %2419 = vmatprep.subr.mxu0 0.0
    %2420 = vmatpush1.msra.mxu0 0.0
    %2421 = vmatprep.subr.mxu0 0.0
    %2422 = vmatpush1.msra.mxu0 0.0
    %2423 = vmatprep.subr.mxu0 0.0
    %2424 = vmatpush1.msra.mxu0 0.0
    %2425 = vmatprep.subr.mxu0 0.0
    %2426 = vmatpush1.msra.mxu0 0.0
    %2427 = vmatprep.subr.mxu0 0.0
    %2428 = vmatpush1.msra.mxu0 0.0
    %2429 = vmatprep.subr.mxu0 0.0
    %2430 = vmatpush1.msra.mxu0 0.0
    %2431 = vmatprep.subr.mxu0 0.0
    %2432 = vmatpush1.msra.mxu0 0.0
    %2433 = vmatprep.subr.mxu0 0.0
    %2434 = vmatpush1.msra.mxu0 0.0
    %2435 = vmatprep.subr.mxu0 0.0
    %2436 = vmatpush1.msra.mxu0 0.0
    %2437 = vmatprep.subr.mxu0 0.0
    %2438 = vmatpush1.msra.mxu0 0.0
    %2439 = vmatprep.subr.mxu0 0.0
    %2440 = vmatpush1.msra.mxu0 0.0
    %2441 = vmatprep.subr.mxu0 0.0
    %2442 = vmatpush1.msra.mxu0 0.0
    %2443 = vmatprep.mubr.f32.mxu0 0.0
    %2444 = vmatmul.mubr.f32.gmra.mrb[0].mxu0 %v2374
    %v2445 = vpop.f32.mrb[0].mxu0
    %v2446 = vadd.f32 %v2365, %v2445
    %v2447 = vpop.f32.mrb[0].mxu0
    %2448 = vmatprep.mubr.f32.mxu0 0.0
    %2449 = vmatmul.mubr.f32.gmra.mrb[0].mxu0 %v2377
    %v2450 = vpop.f32.mrb[0].mxu0
    %v2451 = vadd.f32 %v2370, %v2450
    %v2452 = vpop.f32.mrb[0].mxu0
    %2453 = vdwg.mxu0
    %2454 = vrot.lane.b32.xlu0 %v719, 112
    %v2455 = vpop.permute.xlu0 %2454
    %2456 = vrot.lane.b32.xlu0 %v724, 112
    %v2457 = vpop.permute.xlu0 %2456
    %2458 = vrot.lane.b32.xlu0 %v719, 80
    %v2459 = vpop.permute.xlu0 %2458
    %2460 = vrot.lane.b32.xlu0 %v724, 80
    %v2461 = vpop.permute.xlu0 %2460
    %v2462 = vsel %vm733, %v2455, 0
    %v2464 = vsel %vm733, %v2457, 0
    %v2466 = vsel %vm733, %v2459, 0
    %v2468 = vsel %vm733, %v2461, 0
    %2470 = vmatprep.subr.mxu0 0.0
    %2471 = vmatpush1.xpose.msra.mxu0 %v2466
    %2472 = vmatprep.subr.mxu0 0.0
    %2473 = vmatpush1.xpose.msra.mxu0 %v2468
    %2474 = vmatprep.subr.mxu0 0.0
    %2475 = vmatpush1.xpose.msra.mxu0 0.0
    %2476 = vmatprep.subr.mxu0 0.0
    %2477 = vmatpush1.xpose.msra.mxu0 0.0
    %2478 = vmatprep.subr.mxu0 0.0
    %2479 = vmatpush1.xpose.msra.mxu0 0.0
    %2480 = vmatprep.subr.mxu0 0.0
    %2481 = vmatpush1.xpose.msra.mxu0 0.0
    %2482 = vmatprep.subr.mxu0 0.0
    %2483 = vmatpush1.xpose.msra.mxu0 0.0
    %2484 = vmatprep.subr.mxu0 0.0
    %2485 = vmatpush1.xpose.msra.mxu0 0.0
    %2486 = vmatprep.subr.mxu0 0.0
    %2487 = vmatpush1.xpose.msra.mxu0 0.0
    %2488 = vmatprep.subr.mxu0 0.0
    %2489 = vmatpush1.xpose.msra.mxu0 0.0
    %2490 = vmatprep.subr.mxu0 0.0
    %2491 = vmatpush1.xpose.msra.mxu0 0.0
    %2492 = vmatprep.subr.mxu0 0.0
    %2493 = vmatpush1.xpose.msra.mxu0 0.0
    %2494 = vmatprep.subr.mxu0 0.0
    %2495 = vmatpush1.xpose.msra.mxu0 0.0
    %2496 = vmatprep.subr.mxu0 0.0
    %2497 = vmatpush1.xpose.msra.mxu0 0.0
    %2498 = vmatprep.subr.mxu0 0.0
    %2499 = vmatpush1.xpose.msra.mxu0 0.0
    %2500 = vmatprep.subr.mxu0 0.0
    %2501 = vmatpush1.xpose.msra.mxu0 0.0
    %2502 = vmatprep.subr.mxu0 0.0
    %2503 = vmatpush1.xpose.msra.mxu0 0.0
    %2504 = vmatprep.subr.mxu0 0.0
    %2505 = vmatpush1.xpose.msra.mxu0 0.0
    %2506 = vmatprep.subr.mxu0 0.0
    %2507 = vmatpush1.xpose.msra.mxu0 0.0
    %2508 = vmatprep.subr.mxu0 0.0
    %2509 = vmatpush1.xpose.msra.mxu0 0.0
    %2510 = vmatprep.subr.mxu0 0.0
    %2511 = vmatpush1.xpose.msra.mxu0 0.0
    %2512 = vmatprep.subr.mxu0 0.0
    %2513 = vmatpush1.xpose.msra.mxu0 0.0
    %2514 = vmatprep.subr.mxu0 0.0
    %2515 = vmatpush1.xpose.msra.mxu0 0.0
    %2516 = vmatprep.subr.mxu0 0.0
    %2517 = vmatpush1.xpose.msra.mxu0 0.0
    %2518 = vmatprep.subr.mxu0 0.0
    %2519 = vmatpush1.xpose.msra.mxu0 0.0
    %2520 = vmatprep.subr.mxu0 0.0
    %2521 = vmatpush1.xpose.msra.mxu0 0.0
    %2522 = vmatprep.subr.mxu0 0.0
    %2523 = vmatpush1.xpose.msra.mxu0 0.0
    %2524 = vmatprep.subr.mxu0 0.0
    %2525 = vmatpush1.xpose.msra.mxu0 0.0
    %2526 = vmatprep.subr.mxu0 0.0
    %2527 = vmatpush1.xpose.msra.mxu0 0.0
    %2528 = vmatprep.subr.mxu0 0.0
    %2529 = vmatpush1.xpose.msra.mxu0 0.0
    %2530 = vmatprep.subr.mxu0 0.0
    %2531 = vmatpush1.xpose.msra.mxu0 0.0
    %2532 = vmatprep.subr.mxu0 0.0
    %2533 = vmatpush1.xpose.msra.mxu0 0.0
    %2534 = vmatprep.mubr.f32.mxu0 0.0
    %2535 = vmatmul.mubr.f32.gmra.mrb[0].mxu0 %v2462
    %v2536 = vpop.f32.mrb[0].mxu0
    %v2537 = vadd.f32 0.0, %v2536
    %v2538 = vpop.f32.mrb[0].mxu0
    %2539 = vmatprep.mubr.f32.mxu0 0.0
    %2540 = vmatmul.mubr.f32.gmra.mrb[0].mxu0 %v2464
    %v2541 = vpop.f32.mrb[0].mxu0
    %v2542 = vadd.f32 0.0, %v2541
    %v2543 = vpop.f32.mrb[0].mxu0
    %2544 = vdwg.mxu0
    %v2545 = vmul.f32 %v2537, 0.35355338
    %v2546 = vmul.f32 %v2542, 0.35355338
    %v2547 = vsel %vm819, %v2545, -inf
    %2548 = vmax.xlane.f32.xlu0 %v2547
    %v2549 = vpop.xlane.xlu0 %2548
    %v2550 = vsel %vm819, %v2546, -inf
    %2551 = vmax.xlane.f32.xlu0 %v2550
    %v2552 = vpop.xlane.xlu0 %2551
    %v2553 = vsub.f32 %v2545, %v2549
    %v2554 = vsub.f32 %v2546, %v2552
    %v2555 = vmul.f32 %v2553, 1.442695
    %v2556 = vpow.pop %v2555
    %v2557 = vmul.f32 %v2554, 1.442695
    %v2558 = vpow.pop %v2557
    %v2559 = vsel %vm819, %v2556, 0.0
    %2560 = vadd.xlane.f32.xlu0 %v2559
    %v2561 = vpop.xlane.xlu0 %2560
    %v2562 = vsel %vm819, %v2558, 0.0
    %2563 = vadd.xlane.f32.xlu0 %v2562
    %v2564 = vpop.xlane.xlu0 %2563
    %v2565 = vrcp.pop %v2561
    %v2566 = vrcp.pop %v2564
    %v2567 = vmul.f32 %v2556, %v2565
    %v2568 = vmul.f32 %v2558, %v2566
    %2569 = vrot.lane.b32.xlu0 %v719, 48
    %v2570 = vpop.permute.xlu0 %2569
    %2571 = vrot.lane.b32.xlu0 %v724, 48
    %v2572 = vpop.permute.xlu0 %2571
    %v2576 = vsel %vm819, %v2567, 0
    %v2579 = vsel %vm819, %v2568, 0
    %2581 = vmatprep.subr.mxu0 0.0
    %2582 = vmatpush1.msra.mxu0 %v2570
    %2583 = vmatprep.subr.mxu0 0.0
    %2584 = vmatpush1.msra.mxu0 %v2572
    %2585 = vmatprep.subr.mxu0 0.0
    %2586 = vmatpush1.msra.mxu0 0.0
    %2587 = vmatprep.subr.mxu0 0.0
    %2588 = vmatpush1.msra.mxu0 0.0
    %2589 = vmatprep.subr.mxu0 0.0
    %2590 = vmatpush1.msra.mxu0 0.0
    %2591 = vmatprep.subr.mxu0 0.0
    %2592 = vmatpush1.msra.mxu0 0.0
    %2593 = vmatprep.subr.mxu0 0.0
    %2594 = vmatpush1.msra.mxu0 0.0
    %2595 = vmatprep.subr.mxu0 0.0
    %2596 = vmatpush1.msra.mxu0 0.0
    %2597 = vmatprep.subr.mxu0 0.0
    %2598 = vmatpush1.msra.mxu0 0.0
    %2599 = vmatprep.subr.mxu0 0.0
    %2600 = vmatpush1.msra.mxu0 0.0
    %2601 = vmatprep.subr.mxu0 0.0
    %2602 = vmatpush1.msra.mxu0 0.0
    %2603 = vmatprep.subr.mxu0 0.0
    %2604 = vmatpush1.msra.mxu0 0.0
    %2605 = vmatprep.subr.mxu0 0.0
    %2606 = vmatpush1.msra.mxu0 0.0
    %2607 = vmatprep.subr.mxu0 0.0
    %2608 = vmatpush1.msra.mxu0 0.0
    %2609 = vmatprep.subr.mxu0 0.0
    %2610 = vmatpush1.msra.mxu0 0.0
    %2611 = vmatprep.subr.mxu0 0.0
    %2612 = vmatpush1.msra.mxu0 0.0
    %2613 = vmatprep.subr.mxu0 0.0
    %2614 = vmatpush1.msra.mxu0 0.0
    %2615 = vmatprep.subr.mxu0 0.0
    %2616 = vmatpush1.msra.mxu0 0.0
    %2617 = vmatprep.subr.mxu0 0.0
    %2618 = vmatpush1.msra.mxu0 0.0
    %2619 = vmatprep.subr.mxu0 0.0
    %2620 = vmatpush1.msra.mxu0 0.0
    %2621 = vmatprep.subr.mxu0 0.0
    %2622 = vmatpush1.msra.mxu0 0.0
    %2623 = vmatprep.subr.mxu0 0.0
    %2624 = vmatpush1.msra.mxu0 0.0
    %2625 = vmatprep.subr.mxu0 0.0
    %2626 = vmatpush1.msra.mxu0 0.0
    %2627 = vmatprep.subr.mxu0 0.0
    %2628 = vmatpush1.msra.mxu0 0.0
    %2629 = vmatprep.subr.mxu0 0.0
    %2630 = vmatpush1.msra.mxu0 0.0
    %2631 = vmatprep.subr.mxu0 0.0
    %2632 = vmatpush1.msra.mxu0 0.0
    %2633 = vmatprep.subr.mxu0 0.0
    %2634 = vmatpush1.msra.mxu0 0.0
    %2635 = vmatprep.subr.mxu0 0.0
    %2636 = vmatpush1.msra.mxu0 0.0
    %2637 = vmatprep.subr.mxu0 0.0
    %2638 = vmatpush1.msra.mxu0 0.0
    %2639 = vmatprep.subr.mxu0 0.0
    %2640 = vmatpush1.msra.mxu0 0.0
    %2641 = vmatprep.subr.mxu0 0.0
    %2642 = vmatpush1.msra.mxu0 0.0
    %2643 = vmatprep.subr.mxu0 0.0
    %2644 = vmatpush1.msra.mxu0 0.0
    %2645 = vmatprep.mubr.f32.mxu0 0.0
    %2646 = vmatmul.mubr.f32.gmra.mrb[0].mxu0 %v2576
    %v2647 = vpop.f32.mrb[0].mxu0
    %v2648 = vadd.f32 0.0, %v2647
    %v2649 = vpop.f32.mrb[0].mxu0
    %2650 = vmatprep.mubr.f32.mxu0 0.0
    %2651 = vmatmul.mubr.f32.gmra.mrb[0].mxu0 %v2579
    %v2652 = vpop.f32.mrb[0].mxu0
    %v2653 = vadd.f32 0.0, %v2652
    %v2654 = vpop.f32.mrb[0].mxu0
    %2655 = vdwg.mxu0
    %v2656 = vld [vmem:[%s7 + $0x10] sm:$0xff]
    %v2658 = vsel %vm733, %v2648, 0
    %v2661 = vsel %vm733, %v2653, 0
    %2663 = vmatprep.subr.mxu0 0.0
    %2664 = vmatpush1.msra.mxu0 %v2656
    %2665 = vmatprep.subr.mxu0 0.0
    %2666 = vmatpush1.msra.mxu0 0.0
    %2667 = vmatprep.subr.mxu0 0.0
    %2668 = vmatpush1.msra.mxu0 0.0
    %2669 = vmatprep.subr.mxu0 0.0
    %2670 = vmatpush1.msra.mxu0 0.0
    %2671 = vmatprep.subr.mxu0 0.0
    %2672 = vmatpush1.msra.mxu0 0.0
    %2673 = vmatprep.subr.mxu0 0.0
    %2674 = vmatpush1.msra.mxu0 0.0
    %2675 = vmatprep.subr.mxu0 0.0
    %2676 = vmatpush1.msra.mxu0 0.0
    %2677 = vmatprep.subr.mxu0 0.0
    %2678 = vmatpush1.msra.mxu0 0.0
    %2679 = vmatprep.subr.mxu0 0.0
    %2680 = vmatpush1.msra.mxu0 0.0
    %2681 = vmatprep.subr.mxu0 0.0
    %2682 = vmatpush1.msra.mxu0 0.0
    %2683 = vmatprep.subr.mxu0 0.0
    %2684 = vmatpush1.msra.mxu0 0.0
    %2685 = vmatprep.subr.mxu0 0.0
    %2686 = vmatpush1.msra.mxu0 0.0
    %2687 = vmatprep.subr.mxu0 0.0
    %2688 = vmatpush1.msra.mxu0 0.0
    %2689 = vmatprep.subr.mxu0 0.0
    %2690 = vmatpush1.msra.mxu0 0.0
    %2691 = vmatprep.subr.mxu0 0.0
    %2692 = vmatpush1.msra.mxu0 0.0
    %2693 = vmatprep.subr.mxu0 0.0
    %2694 = vmatpush1.msra.mxu0 0.0
    %2695 = vmatprep.subr.mxu0 0.0
    %2696 = vmatpush1.msra.mxu0 0.0
    %2697 = vmatprep.subr.mxu0 0.0
    %2698 = vmatpush1.msra.mxu0 0.0
    %2699 = vmatprep.subr.mxu0 0.0
    %2700 = vmatpush1.msra.mxu0 0.0
    %2701 = vmatprep.subr.mxu0 0.0
    %2702 = vmatpush1.msra.mxu0 0.0
    %2703 = vmatprep.subr.mxu0 0.0
    %2704 = vmatpush1.msra.mxu0 0.0
    %2705 = vmatprep.subr.mxu0 0.0
    %2706 = vmatpush1.msra.mxu0 0.0
    %2707 = vmatprep.subr.mxu0 0.0
    %2708 = vmatpush1.msra.mxu0 0.0
    %2709 = vmatprep.subr.mxu0 0.0
    %2710 = vmatpush1.msra.mxu0 0.0
    %2711 = vmatprep.subr.mxu0 0.0
    %2712 = vmatpush1.msra.mxu0 0.0
    %2713 = vmatprep.subr.mxu0 0.0
    %2714 = vmatpush1.msra.mxu0 0.0
    %2715 = vmatprep.subr.mxu0 0.0
    %2716 = vmatpush1.msra.mxu0 0.0
    %2717 = vmatprep.subr.mxu0 0.0
    %2718 = vmatpush1.msra.mxu0 0.0
    %2719 = vmatprep.subr.mxu0 0.0
    %2720 = vmatpush1.msra.mxu0 0.0
    %2721 = vmatprep.subr.mxu0 0.0
    %2722 = vmatpush1.msra.mxu0 0.0
    %2723 = vmatprep.subr.mxu0 0.0
    %2724 = vmatpush1.msra.mxu0 0.0
    %2725 = vmatprep.subr.mxu0 0.0
    %2726 = vmatpush1.msra.mxu0 0.0
    %2727 = vmatprep.mubr.f32.mxu0 0.0
    %2728 = vmatmul.mubr.f32.gmra.mrb[0].mxu0 %v2658
    %v2729 = vpop.f32.mrb[0].mxu0
    %v2730 = vadd.f32 0.0, %v2729
    %v2731 = vpop.f32.mrb[0].mxu0
    %2732 = vmatprep.mubr.f32.mxu0 0.0
    %2733 = vmatmul.mubr.f32.gmra.mrb[0].mxu0 %v2661
    %v2734 = vpop.f32.mrb[0].mxu0
    %v2735 = vadd.f32 0.0, %v2734
    %v2736 = vpop.f32.mrb[0].mxu0
    %2737 = vdwg.mxu0
    %v2738 = vadd.f32 %v2446, %v2730
    %v2739 = vadd.f32 %v2451, %v2735
    %2740 = vrot.lane.b32.xlu0 %v719, 104
    %v2741 = vpop.permute.xlu0 %2740
    %2742 = vrot.lane.b32.xlu0 %v724, 104
    %v2743 = vpop.permute.xlu0 %2742
    %2744 = vrot.lane.b32.xlu0 %v719, 72
    %v2745 = vpop.permute.xlu0 %2744
    %2746 = vrot.lane.b32.xlu0 %v724, 72
    %v2747 = vpop.permute.xlu0 %2746
    %v2748 = vsel %vm733, %v2741, 0
    %v2750 = vsel %vm733, %v2743, 0
    %v2752 = vsel %vm733, %v2745, 0
    %v2754 = vsel %vm733, %v2747, 0
    %2756 = vmatprep.subr.mxu0 0.0
    %2757 = vmatpush1.xpose.msra.mxu0 %v2752
    %2758 = vmatprep.subr.mxu0 0.0
    %2759 = vmatpush1.xpose.msra.mxu0 %v2754
    %2760 = vmatprep.subr.mxu0 0.0
    %2761 = vmatpush1.xpose.msra.mxu0 0.0
    %2762 = vmatprep.subr.mxu0 0.0
    %2763 = vmatpush1.xpose.msra.mxu0 0.0
    %2764 = vmatprep.subr.mxu0 0.0
    %2765 = vmatpush1.xpose.msra.mxu0 0.0
    %2766 = vmatprep.subr.mxu0 0.0
    %2767 = vmatpush1.xpose.msra.mxu0 0.0
    %2768 = vmatprep.subr.mxu0 0.0
    %2769 = vmatpush1.xpose.msra.mxu0 0.0
    %2770 = vmatprep.subr.mxu0 0.0
    %2771 = vmatpush1.xpose.msra.mxu0 0.0
    %2772 = vmatprep.subr.mxu0 0.0
    %2773 = vmatpush1.xpose.msra.mxu0 0.0
    %2774 = vmatprep.subr.mxu0 0.0
    %2775 = vmatpush1.xpose.msra.mxu0 0.0
    %2776 = vmatprep.subr.mxu0 0.0
    %2777 = vmatpush1.xpose.msra.mxu0 0.0
    %2778 = vmatprep.subr.mxu0 0.0
    %2779 = vmatpush1.xpose.msra.mxu0 0.0
    %2780 = vmatprep.subr.mxu0 0.0
    %2781 = vmatpush1.xpose.msra.mxu0 0.0
    %2782 = vmatprep.subr.mxu0 0.0
    %2783 = vmatpush1.xpose.msra.mxu0 0.0
    %2784 = vmatprep.subr.mxu0 0.0
    %2785 = vmatpush1.xpose.msra.mxu0 0.0
    %2786 = vmatprep.subr.mxu0 0.0
    %2787 = vmatpush1.xpose.msra.mxu0 0.0
    %2788 = vmatprep.subr.mxu0 0.0
    %2789 = vmatpush1.xpose.msra.mxu0 0.0
    %2790 = vmatprep.subr.mxu0 0.0
    %2791 = vmatpush1.xpose.msra.mxu0 0.0
    %2792 = vmatprep.subr.mxu0 0.0
    %2793 = vmatpush1.xpose.msra.mxu0 0.0
    %2794 = vmatprep.subr.mxu0 0.0
    %2795 = vmatpush1.xpose.msra.mxu0 0.0
    %2796 = vmatprep.subr.mxu0 0.0
    %2797 = vmatpush1.xpose.msra.mxu0 0.0
    %2798 = vmatprep.subr.mxu0 0.0
    %2799 = vmatpush1.xpose.msra.mxu0 0.0
    %2800 = vmatprep.subr.mxu0 0.0
    %2801 = vmatpush1.xpose.msra.mxu0 0.0
    %2802 = vmatprep.subr.mxu0 0.0
    %2803 = vmatpush1.xpose.msra.mxu0 0.0
    %2804 = vmatprep.subr.mxu0 0.0
    %2805 = vmatpush1.xpose.msra.mxu0 0.0
    %2806 = vmatprep.subr.mxu0 0.0
    %2807 = vmatpush1.xpose.msra.mxu0 0.0
    %2808 = vmatprep.subr.mxu0 0.0
    %2809 = vmatpush1.xpose.msra.mxu0 0.0
    %2810 = vmatprep.subr.mxu0 0.0
    %2811 = vmatpush1.xpose.msra.mxu0 0.0
    %2812 = vmatprep.subr.mxu0 0.0
    %2813 = vmatpush1.xpose.msra.mxu0 0.0
    %2814 = vmatprep.subr.mxu0 0.0
    %2815 = vmatpush1.xpose.msra.mxu0 0.0
    %2816 = vmatprep.subr.mxu0 0.0
    %2817 = vmatpush1.xpose.msra.mxu0 0.0
    %2818 = vmatprep.subr.mxu0 0.0
    %2819 = vmatpush1.xpose.msra.mxu0 0.0
    %2820 = vmatprep.mubr.f32.mxu0 0.0
    %2821 = vmatmul.mubr.f32.gmra.mrb[0].mxu0 %v2748
    %v2822 = vpop.f32.mrb[0].mxu0
    %v2823 = vadd.f32 0.0, %v2822
    %v2824 = vpop.f32.mrb[0].mxu0
    %2825 = vmatprep.mubr.f32.mxu0 0.0
    %2826 = vmatmul.mubr.f32.gmra.mrb[0].mxu0 %v2750
    %v2827 = vpop.f32.mrb[0].mxu0
    %v2828 = vadd.f32 0.0, %v2827
    %v2829 = vpop.f32.mrb[0].mxu0
    %2830 = vdwg.mxu0
    %v2831 = vmul.f32 %v2823, 0.35355338
    %v2832 = vmul.f32 %v2828, 0.35355338
    %v2833 = vsel %vm819, %v2831, -inf
    %2834 = vmax.xlane.f32.xlu0 %v2833
    %v2835 = vpop.xlane.xlu0 %2834
    %v2836 = vsel %vm819, %v2832, -inf
    %2837 = vmax.xlane.f32.xlu0 %v2836
    %v2838 = vpop.xlane.xlu0 %2837
    %v2839 = vsub.f32 %v2831, %v2835
    %v2840 = vsub.f32 %v2832, %v2838
    %v2841 = vmul.f32 %v2839, 1.442695
    %v2842 = vpow.pop %v2841
    %v2843 = vmul.f32 %v2840, 1.442695
    %v2844 = vpow.pop %v2843
    %v2845 = vsel %vm819, %v2842, 0.0
    %2846 = vadd.xlane.f32.xlu0 %v2845
    %v2847 = vpop.xlane.xlu0 %2846
    %v2848 = vsel %vm819, %v2844, 0.0
    %2849 = vadd.xlane.f32.xlu0 %v2848
    %v2850 = vpop.xlane.xlu0 %2849
    %v2851 = vrcp.pop %v2847
    %v2852 = vrcp.pop %v2850
    %v2853 = vmul.f32 %v2842, %v2851
    %v2854 = vmul.f32 %v2844, %v2852
    %2855 = vrot.lane.b32.xlu0 %v719, 40
    %v2856 = vpop.permute.xlu0 %2855
    %2857 = vrot.lane.b32.xlu0 %v724, 40
    %v2858 = vpop.permute.xlu0 %2857
    %v2862 = vsel %vm819, %v2853, 0
    %v2865 = vsel %vm819, %v2854, 0
    %2867 = vmatprep.subr.mxu0 0.0
    %2868 = vmatpush1.msra.mxu0 %v2856
    %2869 = vmatprep.subr.mxu0 0.0
    %2870 = vmatpush1.msra.mxu0 %v2858
    %2871 = vmatprep.subr.mxu0 0.0
    %2872 = vmatpush1.msra.mxu0 0.0
    %2873 = vmatprep.subr.mxu0 0.0
    %2874 = vmatpush1.msra.mxu0 0.0
    %2875 = vmatprep.subr.mxu0 0.0
    %2876 = vmatpush1.msra.mxu0 0.0
    %2877 = vmatprep.subr.mxu0 0.0
    %2878 = vmatpush1.msra.mxu0 0.0
    %2879 = vmatprep.subr.mxu0 0.0
    %2880 = vmatpush1.msra.mxu0 0.0
    %2881 = vmatprep.subr.mxu0 0.0
    %2882 = vmatpush1.msra.mxu0 0.0
    %2883 = vmatprep.subr.mxu0 0.0
    %2884 = vmatpush1.msra.mxu0 0.0
    %2885 = vmatprep.subr.mxu0 0.0
    %2886 = vmatpush1.msra.mxu0 0.0
    %2887 = vmatprep.subr.mxu0 0.0
    %2888 = vmatpush1.msra.mxu0 0.0
    %2889 = vmatprep.subr.mxu0 0.0
    %2890 = vmatpush1.msra.mxu0 0.0
    %2891 = vmatprep.subr.mxu0 0.0
    %2892 = vmatpush1.msra.mxu0 0.0
    %2893 = vmatprep.subr.mxu0 0.0
    %2894 = vmatpush1.msra.mxu0 0.0
    %2895 = vmatprep.subr.mxu0 0.0
    %2896 = vmatpush1.msra.mxu0 0.0
    %2897 = vmatprep.subr.mxu0 0.0
    %2898 = vmatpush1.msra.mxu0 0.0
    %2899 = vmatprep.subr.mxu0 0.0
    %2900 = vmatpush1.msra.mxu0 0.0
    %2901 = vmatprep.subr.mxu0 0.0
    %2902 = vmatpush1.msra.mxu0 0.0
    %2903 = vmatprep.subr.mxu0 0.0
    %2904 = vmatpush1.msra.mxu0 0.0
    %2905 = vmatprep.subr.mxu0 0.0
    %2906 = vmatpush1.msra.mxu0 0.0
    %2907 = vmatprep.subr.mxu0 0.0
    %2908 = vmatpush1.msra.mxu0 0.0
    %2909 = vmatprep.subr.mxu0 0.0
    %2910 = vmatpush1.msra.mxu0 0.0
    %2911 = vmatprep.subr.mxu0 0.0
    %2912 = vmatpush1.msra.mxu0 0.0
    %2913 = vmatprep.subr.mxu0 0.0
    %2914 = vmatpush1.msra.mxu0 0.0
    %2915 = vmatprep.subr.mxu0 0.0
    %2916 = vmatpush1.msra.mxu0 0.0
    %2917 = vmatprep.subr.mxu0 0.0
    %2918 = vmatpush1.msra.mxu0 0.0
    %2919 = vmatprep.subr.mxu0 0.0
    %2920 = vmatpush1.msra.mxu0 0.0
    %2921 = vmatprep.subr.mxu0 0.0
    %2922 = vmatpush1.msra.mxu0 0.0
    %2923 = vmatprep.subr.mxu0 0.0
    %2924 = vmatpush1.msra.mxu0 0.0
    %2925 = vmatprep.subr.mxu0 0.0
    %2926 = vmatpush1.msra.mxu0 0.0
    %2927 = vmatprep.subr.mxu0 0.0
    %2928 = vmatpush1.msra.mxu0 0.0
    %2929 = vmatprep.subr.mxu0 0.0
    %2930 = vmatpush1.msra.mxu0 0.0
    %2931 = vmatprep.mubr.f32.mxu0 0.0
    %2932 = vmatmul.mubr.f32.gmra.mrb[0].mxu0 %v2862
    %v2933 = vpop.f32.mrb[0].mxu0
    %v2934 = vadd.f32 0.0, %v2933
    %v2935 = vpop.f32.mrb[0].mxu0
    %2936 = vmatprep.mubr.f32.mxu0 0.0
    %2937 = vmatmul.mubr.f32.gmra.mrb[0].mxu0 %v2865
    %v2938 = vpop.f32.mrb[0].mxu0
    %v2939 = vadd.f32 0.0, %v2938
    %v2940 = vpop.f32.mrb[0].mxu0
    %2941 = vdwg.mxu0
    %v2942 = vld [vmem:[%s7 + $0x18] sm:$0xff]
    %v2944 = vsel %vm733, %v2934, 0
    %v2947 = vsel %vm733, %v2939, 0
    %2949 = vmatprep.subr.mxu0 0.0
    %2950 = vmatpush1.msra.mxu0 %v2942
    %2951 = vmatprep.subr.mxu0 0.0
    %2952 = vmatpush1.msra.mxu0 0.0
    %2953 = vmatprep.subr.mxu0 0.0
    %2954 = vmatpush1.msra.mxu0 0.0
    %2955 = vmatprep.subr.mxu0 0.0
    %2956 = vmatpush1.msra.mxu0 0.0
    %2957 = vmatprep.subr.mxu0 0.0
    %2958 = vmatpush1.msra.mxu0 0.0
    %2959 = vmatprep.subr.mxu0 0.0
    %2960 = vmatpush1.msra.mxu0 0.0
    %2961 = vmatprep.subr.mxu0 0.0
    %2962 = vmatpush1.msra.mxu0 0.0
    %2963 = vmatprep.subr.mxu0 0.0
    %2964 = vmatpush1.msra.mxu0 0.0
    %2965 = vmatprep.subr.mxu0 0.0
    %2966 = vmatpush1.msra.mxu0 0.0
    %2967 = vmatprep.subr.mxu0 0.0
    %2968 = vmatpush1.msra.mxu0 0.0
    %2969 = vmatprep.subr.mxu0 0.0
    %2970 = vmatpush1.msra.mxu0 0.0
    %2971 = vmatprep.subr.mxu0 0.0
    %2972 = vmatpush1.msra.mxu0 0.0
    %2973 = vmatprep.subr.mxu0 0.0
    %2974 = vmatpush1.msra.mxu0 0.0
    %2975 = vmatprep.subr.mxu0 0.0
    %2976 = vmatpush1.msra.mxu0 0.0
    %2977 = vmatprep.subr.mxu0 0.0
    %2978 = vmatpush1.msra.mxu0 0.0
    %2979 = vmatprep.subr.mxu0 0.0
    %2980 = vmatpush1.msra.mxu0 0.0
    %2981 = vmatprep.subr.mxu0 0.0
    %2982 = vmatpush1.msra.mxu0 0.0
    %2983 = vmatprep.subr.mxu0 0.0
    %2984 = vmatpush1.msra.mxu0 0.0
    %2985 = vmatprep.subr.mxu0 0.0
    %2986 = vmatpush1.msra.mxu0 0.0
    %2987 = vmatprep.subr.mxu0 0.0
    %2988 = vmatpush1.msra.mxu0 0.0
    %2989 = vmatprep.subr.mxu0 0.0
    %2990 = vmatpush1.msra.mxu0 0.0
    %2991 = vmatprep.subr.mxu0 0.0
    %2992 = vmatpush1.msra.mxu0 0.0
    %2993 = vmatprep.subr.mxu0 0.0
    %2994 = vmatpush1.msra.mxu0 0.0
    %2995 = vmatprep.subr.mxu0 0.0
    %2996 = vmatpush1.msra.mxu0 0.0
    %2997 = vmatprep.subr.mxu0 0.0
    %2998 = vmatpush1.msra.mxu0 0.0
    %2999 = vmatprep.subr.mxu0 0.0
    %3000 = vmatpush1.msra.mxu0 0.0
    %3001 = vmatprep.subr.mxu0 0.0
    %3002 = vmatpush1.msra.mxu0 0.0
    %3003 = vmatprep.subr.mxu0 0.0
    %3004 = vmatpush1.msra.mxu0 0.0
    %3005 = vmatprep.subr.mxu0 0.0
    %3006 = vmatpush1.msra.mxu0 0.0
    %3007 = vmatprep.subr.mxu0 0.0
    %3008 = vmatpush1.msra.mxu0 0.0
    %3009 = vmatprep.subr.mxu0 0.0
    %3010 = vmatpush1.msra.mxu0 0.0
    %3011 = vmatprep.subr.mxu0 0.0
    %3012 = vmatpush1.msra.mxu0 0.0
    %3013 = vmatprep.mubr.f32.mxu0 0.0
    %3014 = vmatmul.mubr.f32.gmra.mrb[0].mxu0 %v2944
    %v3015 = vpop.f32.mrb[0].mxu0
    %v3016 = vadd.f32 0.0, %v3015
    %v3017 = vpop.f32.mrb[0].mxu0
    %3018 = vmatprep.mubr.f32.mxu0 0.0
    %3019 = vmatmul.mubr.f32.gmra.mrb[0].mxu0 %v2947
    %v3020 = vpop.f32.mrb[0].mxu0
    %v3021 = vadd.f32 0.0, %v3020
    %v3022 = vpop.f32.mrb[0].mxu0
    %3023 = vdwg.mxu0
    %v3024 = vadd.f32 %v2738, %v3016
    %v3025 = vadd.f32 %v2739, %v3021
    %v3026 = vld [vmem:[%s8] sm:$0x1]
    %v3028 = vlaneseq
    %v3029 = vshrl.u32 %v3028, 7
    %v3030 = vsub.s32 0, %v3029
    %v3031 = vrot.slane %v3026, %v3030
    %v3033 = vadd.f32 %v3024, %v3031
    %v3034 = vadd.f32 %v3025, %v3031
    %3035 = vrot.lane.b32.xlu0 %v35, 96
    %v3036 = vpop.permute.xlu0 %3035
    %3037 = vrot.lane.b32.xlu0 %v36, 96
    %v3038 = vpop.permute.xlu0 %3037
    %v3041 = vadd.f32 %v3033, %v3036
    %v3042 = vadd.f32 %v3034, %v3038
    %v3043 = vmax.f32 %v3041, 0.0
    %v3044 = vmax.f32 %v3042, 0.0
    %3045 = vst.msk [vmem:[#allocation2 + $0x10] sm:$0xff] %vm629, %v3043
    %3046 = vst.msk [vmem:[#allocation2 + $0x18] sm:$0xff] %vm629, %v3044
    // Predicated region
    $region38: #{tpu_custom_call.1} parent=1 // pred_check
      _
    $region39: #{tpu_custom_call.1} parent=1 // pred_check_branch
      %3048 = sbr.rel (0) target = $region41
    $region40: #{tpu_custom_call.1} parent=1 // pred_region
      %s3050 = ssub.s32 512, 512
      %3051 = vsyncadd [#allocation3], %s3050
      %s3052 = sshll.u32 [#allocation2], 4
      %s3053 = int_to_ptr.vmem [resolvable:$true] %s3052
      %3058 = dma.vmem_to_hbm [thread:$0]  %s3053, 512, %s9, [#allocation3], 128, 128, 8
    $region41: #{tpu_custom_call.1} parent=1 // pred_fallthru
      _
    // Predicated region
    $region42: #{tpu_custom_call.1} parent=1 // pred_check
      _
    $region43: #{tpu_custom_call.1} parent=1 // pred_check_branch
      %3060 = sbr.rel (0) target = $region45
    $region44: #{tpu_custom_call.1} parent=1 // pred_region
      %3061 = dma.done [#allocation3], 512
    $region45: #{tpu_custom_call.1} parent=1 // pred_fallthru
      _
    %3062 = vsyncpa [#allocation3], 1

</llo_original>
